<compile_context>
chip_gen: v7x
topology: tpu7x:2x2x1
jax: 0.10.0
libtpu: 0.0.40
codegen_flags: <defaults>
</compile_context>

<pallas_src>
import functools
import math

import jax
import jax.numpy as jnp
from jax.experimental import pallas as pl
from jax.experimental.pallas import tpu as pltpu


# ----------------------------- model hyper-params -----------------------------
INPUT_SIZE = 1          # one token value fed at a time (x.view(-1, 1))
LATENT_SIZE = 8
HIDDEN_SIZE = 32
NUM_LAYERS = 2
VOCAB_SIZE = 32
SEQ_LEN = 8             # len(y); decode steps = SEQ_LEN - 1
VOCAB_PAD = 128         # lane-dense output / gate width (== 4*HIDDEN_SIZE)


# ------------------------------ slab layouts -----------------------------------
def _mats_offsets(H, L):
    """Sublane offsets of each weight matrix inside the packed (R, 128) slab."""
    offs = {}
    r = 0
    offs["whh0"] = r; r += H
    for l in range(1, L):
        offs[f"whh{l}"] = r; r += H
        offs[f"wih{l}"] = r; r += H
    offs["fcw"] = r; r += H
    offs["upw"] = r; r += H
    return offs, r


def _rows_height(L):
    # rows slab: wih0 | b0 | b_l (upper layers) | fcb | upb | vocab mask | lane idx
    n = 5 + L
    return ((n + 7) // 8) * 8


# --------------------------------- kernel -------------------------------------
def _decoder_kernel(y_ref,     # scalar-prefetch: (seq,) int32 tokens (SMEM); only y[0] used (tfr=0)
                    ctx_ref,   # (2, H)   context vector, latent zero-padded to H lanes
                    mats_ref,  # (R, 128) packed weight slab (whh0 | whh_l/wih_l | fcw | upw)
                    rows_ref,  # (8, 128) packed bias / constant rows
                    out_ref,   # (steps_pad, VP) eval-mode log_softmax outputs (padded)
                    *, num_layers, hidden_size, vocab_size,
                    num_steps, steps_total, steps_pad, vocab_pad):
    H, L, VP = hidden_size, num_layers, vocab_pad
    offs, _ = _mats_offsets(H, L)

    # ---- weights / constants: loaded from VMEM into vregs exactly once ----
    whh0 = mats_ref[offs["whh0"]:offs["whh0"] + H, :]                    # (H, 4H)
    whh_u = [mats_ref[offs[f"whh{l}"]:offs[f"whh{l}"] + H, :] for l in range(1, L)]
    wih_u = [mats_ref[offs[f"wih{l}"]:offs[f"wih{l}"] + H, :] for l in range(1, L)]
    fcw = mats_ref[offs["fcw"]:offs["fcw"] + H, :]                       # (H, VP)
    upw = mats_ref[offs["upw"]:offs["upw"] + H, :]                       # (H, 128); rows >= LAT are 0

    wih0 = rows_ref[0:1, :]                                              # (1, 4H) layer-0 input column
    b0 = rows_ref[1:2, :]                                                # (1, 4H)
    b_u = [rows_ref[1 + l:2 + l, :] for l in range(1, L)]                # (1, 4H) per upper layer
    fcb = rows_ref[1 + L:2 + L, :]                                       # (1, VP)
    upb = rows_ref[2 + L:3 + L, :][:, 0:H]                               # (1, H)
    mask_f = rows_ref[3 + L:4 + L, :]                                    # (1, VP) 1.0 on real vocab lanes
    lane_f = rows_ref[4 + L:5 + L, :]                                    # (1, VP) lane index as float

    # ---- initial hidden/cell state: fc_upscale(ctx[0] * ctx[1]) ----
    cvec = ctx_ref[0:1, :] * ctx_ref[1:2, :]                             # (1, H); lanes >= LAT are 0
    h_init = jnp.dot(cvec, upw, preferred_element_type=jnp.float32)[:, 0:H] + upb
    h = [h_init] * L
    c = [h_init] * L

    # rows after the early break keep log_softmax(zeros) == -log(V)
    if num_steps < steps_total:
        out_ref[...] = jnp.full((steps_pad, VP), -math.log(vocab_size), jnp.float32)

    # first input token (greedy feedback afterwards, tfr == 0)
    tok = jnp.full((1, 1), y_ref[0].astype(jnp.float32), jnp.float32)

    def lstm_cell(gates, c_prev):
        # single full-width sigmoid; the g-gate preactivation was pre-scaled x2 at
        # prepare time, so tanh(x) == 2*sigmoid(2x) - 1 falls out of the same EUP call.
        sig = jax.nn.sigmoid(gates)
        i_g = sig[:, 0 * H:1 * H]
        f_g = sig[:, 1 * H:2 * H]
        g_g = 2.0 * sig[:, 2 * H:3 * H] - 1.0
        o_g = sig[:, 3 * H:4 * H]
        c_new = f_g * c_prev + i_g * g_g
        h_new = o_g * jnp.tanh(c_new)
        return h_new, c_new

    for i in range(num_steps):                                           # static unroll: serial decode
        # layer 0: input_size == 1 -> input contribution is a scalar scale of one row
        gates0 = (tok * wih0 + b0
                  + jnp.dot(h[0], whh0, preferred_element_type=jnp.float32))
        h[0], c[0] = lstm_cell(gates0, c[0])
        x_in = h[0]
        for l in range(1, L):
            # split matmuls (no lane-concat): the recurrent term depends only on the
            # previous step's h[l], so it can overlap layer-0 / fc_out / argmax work.
            gates = (jnp.dot(h[l], whh_u[l - 1], preferred_element_type=jnp.float32)
                     + jnp.dot(x_in, wih_u[l - 1], preferred_element_type=jnp.float32)
                     + b_u[l - 1])
            h[l], c[l] = lstm_cell(gates, c[l])
            x_in = h[l]

        logits = jnp.dot(x_in, fcw, preferred_element_type=jnp.float32) + fcb  # (1, VP)
        preds = jnp.maximum(logits, 0.0)                                 # ReLU; pad lanes stay 0

        # row max is shared by the greedy argmax and the fused log_softmax
        m = jnp.max(preds, axis=1, keepdims=True)                        # (1, 1)
        cand = jnp.where(preds >= m, lane_f, jnp.float32(VP))
        tok = jnp.min(cand, axis=1, keepdims=True)                       # first-max index (greedy token)

        ssum = jnp.sum(jnp.exp(preds - m) * mask_f, axis=1, keepdims=True)
        out_ref[pl.ds(i, 1), :] = preds - (m + jnp.log(ssum))            # fused log_softmax row store


# --------------------------- one-time param packing ----------------------------
def prepare_decoder_params(params):
    """Packs all Decoder weights into two Pallas input slabs (call once, reuse)."""
    H, L, V, LAT, VP = HIDDEN_SIZE, NUM_LAYERS, VOCAB_SIZE, LATENT_SIZE, VOCAB_PAD
    G = 4 * H
    assert G == 128 and VP == 128, "slab packing assumes 4*H == VOCAB_PAD == 128"

    def gscale(w):   # pre-scale g-gate columns/entries by 2 (tanh-via-sigmoid trick)
        return w.at[..., 2 * H:3 * H].multiply(2.0)

    offs, n_mat_rows = _mats_offsets(H, L)
    mats = jnp.zeros((n_mat_rows, 128), jnp.float32)
    mats = mats.at[offs["whh0"]:offs["whh0"] + H, :G].set(gscale(params["w_hh_l0"].T))
    for l in range(1, L):
        mats = mats.at[offs[f"whh{l}"]:offs[f"whh{l}"] + H, :G].set(
            gscale(params[f"w_hh_l{l}"].T))
        mats = mats.at[offs[f"wih{l}"]:offs[f"wih{l}"] + H, :G].set(
            gscale(params[f"w_ih_l{l}"].T))
    mats = mats.at[offs["fcw"]:offs["fcw"] + H, :V].set(params["fc_out_w"].T)
    mats = mats.at[offs["upw"]:offs["upw"] + LAT, :H].set(params["fc_upscale_w"].T)

    rows = jnp.zeros((_rows_height(L), 128), jnp.float32)
    rows = rows.at[0, :G].set(gscale(params["w_ih_l0"][:, 0]))           # layer-0 W_ih column
    rows = rows.at[1, :G].set(gscale(params["b_ih_l0"] + params["b_hh_l0"]))
    for l in range(1, L):
        rows = rows.at[1 + l, :G].set(gscale(params[f"b_ih_l{l}"] + params[f"b_hh_l{l}"]))
    rows = rows.at[1 + L, :V].set(params["fc_out_b"])
    rows = rows.at[2 + L, :H].set(params["fc_upscale_b"])
    rows = rows.at[3 + L, :V].set(jnp.ones((V,), jnp.float32))           # vocab lane mask
    rows = rows.at[4 + L, :].set(jnp.arange(128, dtype=jnp.float32))     # lane index row
    return {"mats": mats, "rows": rows}


# --------------------------------- wrapper ------------------------------------
@functools.partial(jax.jit, static_argnums=(2,))
def decoder_forward_pallas(y, context_vector, stride, prepared):
    """y: (seq,) int tokens; context_vector: (2, latent); stride: python int;
    prepared: output of prepare_decoder_params.  Returns eval-mode log_softmax
    outputs of shape (seq - 1, vocab)."""
    H, L, V, LAT, VP = HIDDEN_SIZE, NUM_LAYERS, VOCAB_SIZE, LATENT_SIZE, VOCAB_PAD
    mats, rows = prepared["mats"], prepared["rows"]

    y = y.astype(jnp.int32)
    y_len = y.shape[0]
    steps_total = y_len - 1
    # torch loop breaks after iteration i == stride - 1 (no break if stride < 1
    # or stride >= steps_total); remaining rows stay zero before log_softmax.
    num_steps = steps_total if stride < 1 else min(int(stride), steps_total)
    steps_pad = max(8, ((steps_total + 7) // 8) * 8)

    # only remaining per-call prep (runtime data): zero-pad context to H lanes
    ctx_pad = jnp.zeros((2, H), jnp.float32).at[:, :LAT].set(
        context_vector.astype(jnp.float32))

    kernel = functools.partial(
        _decoder_kernel, num_layers=L, hidden_size=H, vocab_size=V,
        num_steps=num_steps, steps_total=steps_total, steps_pad=steps_pad,
        vocab_pad=VP)

    grid_spec = pltpu.PrefetchScalarGridSpec(
        num_scalar_prefetch=1,
        grid=(1,),                                                       # single invocation
        in_specs=[
            pl.BlockSpec((2, H), lambda i, yp: (0, 0)),                  # ctx (padded)
            pl.BlockSpec(mats.shape, lambda i, yp: (0, 0)),              # weight slab
            pl.BlockSpec(rows.shape, lambda i, yp: (0, 0)),              # bias/const rows
        ],
        out_specs=pl.BlockSpec((steps_pad, VP), lambda i, yp: (0, 0)),
    )

    out_padded = pl.pallas_call(
        kernel,
        out_shape=jax.ShapeDtypeStruct((steps_pad, VP), jnp.float32),
        grid_spec=grid_spec,
        compiler_params=pltpu.CompilerParams(dimension_semantics=("arbitrary",)),
    )(y, ctx_pad, mats, rows)

    return out_padded[:steps_total, :V]


# ----------------------------- pure-JAX reference ------------------------------
def decoder_forward_ref(y, context_vector, stride, params):
    H, L, V = HIDDEN_SIZE, NUM_LAYERS, VOCAB_SIZE
    y_len = y.shape[0]
    steps_total = y_len - 1
    num_steps = steps_total if stride < 1 else min(int(stride), steps_total)

    cvec = context_vector[0] * context_vector[1]                         # (latent,)
    h0 = (jnp.dot(params["fc_upscale_w"], cvec, precision="highest")
          + params["fc_upscale_b"])                                      # (H,)
    h = [h0 for _ in range(L)]
    c = [h0 for _ in range(L)]

    outputs = jnp.zeros((steps_total, V), jnp.float32)
    tok = y[0].astype(jnp.float32)
    for i in range(num_steps):
        inp = None
        for l in range(L):
            if l == 0:
                in_part = tok * params["w_ih_l0"][:, 0]
            else:
                in_part = jnp.dot(params[f"w_ih_l{l}"], inp, precision="highest")
            gates = (in_part + params[f"b_ih_l{l}"]
                     + jnp.dot(params[f"w_hh_l{l}"], h[l], precision="highest")
                     + params[f"b_hh_l{l}"])
            i_g = jax.nn.sigmoid(gates[0 * H:1 * H])
            f_g = jax.nn.sigmoid(gates[1 * H:2 * H])
            g_g = jnp.tanh(gates[2 * H:3 * H])
            o_g = jax.nn.sigmoid(gates[3 * H:4 * H])
            c[l] = f_g * c[l] + i_g * g_g
            h[l] = o_g * jnp.tanh(c[l])
            inp = h[l]
        logits = (jnp.dot(params["fc_out_w"], h[L - 1], precision="highest")
                  + params["fc_out_b"])
        preds = jnp.maximum(logits, 0.0)
        outputs = outputs.at[i].set(preds)
        tok = jnp.argmax(preds).astype(jnp.float32)
    return jax.nn.log_softmax(outputs, axis=1)


# ------------------------------- param init ------------------------------------
def init_params(key):
    H, L, V, LAT, IN = HIDDEN_SIZE, NUM_LAYERS, VOCAB_SIZE, LATENT_SIZE, INPUT_SIZE
    keys = jax.random.split(key, 4 + 4 * L)
    k = iter(keys)
    p = {}
    s_up = 1.0 / float(jnp.sqrt(LAT))
    p["fc_upscale_w"] = jax.random.uniform(next(k), (H, LAT), jnp.float32, -s_up, s_up)
    p["fc_upscale_b"] = jax.random.uniform(next(k), (H,), jnp.float32, -s_up, s_up)
    s = 1.0 / float(jnp.sqrt(H))
    for l in range(L):
        in_size = IN if l == 0 else H
        p[f"w_ih_l{l}"] = jax.random.uniform(next(k), (4 * H, in_size), jnp.float32, -s, s)
        p[f"w_hh_l{l}"] = jax.random.uniform(next(k), (4 * H, H), jnp.float32, -s, s)
        p[f"b_ih_l{l}"] = jax.random.uniform(next(k), (4 * H,), jnp.float32, -s, s)
        p[f"b_hh_l{l}"] = jax.random.uniform(next(k), (4 * H,), jnp.float32, -s, s)
    p["fc_out_w"] = jax.random.uniform(next(k), (V, H), jnp.float32, -s, s)
    p["fc_out_b"] = jax.random.uniform(next(k), (V,), jnp.float32, -s, s)
    return p


# ---------------------------------- main ----------------------------------------
if __name__ == "__main__":
    key = jax.random.PRNGKey(0)
    pkey, ykey, ckey = jax.random.split(key, 3)
    params = init_params(pkey)
    prepared = prepare_decoder_params(params)        # one-time packing (hoisted out of forward)
    y = jax.random.randint(ykey, (SEQ_LEN,), 0, VOCAB_SIZE, dtype=jnp.int32)
    ctx = jax.random.normal(ckey, (2, LATENT_SIZE), jnp.float32)

    for stride in (SEQ_LEN - 1, 3):                  # full decode + early-break path
        out = jax.block_until_ready(decoder_forward_pallas(y, ctx, stride, prepared))
        ref = jax.block_until_ready(decoder_forward_ref(y, ctx, stride, params))
        assert out.shape == (SEQ_LEN - 1, VOCAB_SIZE), out.shape
        assert jnp.allclose(out, ref, atol=1e-4, rtol=1e-4), (stride, out, ref)

    print("KERNEL_OK")
</pallas_src>

<mosaic_0001>
module attributes {stable_mosaic.version = 11 : i64} {
  func.func @_decoder_kernel(%arg0: i32, %arg1: memref<8xi32, #tpu.memory_space<smem>>, %arg2: memref<2x32xf32, #tpu.memory_space<vmem>>, %arg3: memref<160x128xf32, #tpu.memory_space<vmem>>, %arg4: memref<8x128xf32, #tpu.memory_space<vmem>>, %arg5: memref<8x128xf32, #tpu.memory_space<vmem>>) attributes {dimension_semantics = [#tpu.dimension_semantics<arbitrary>], iteration_bounds = array<i64: 1>, scalar_prefetch = 1 : i64, scratch_operands = 0 : i64, tpu.core_type = #tpu.core_type<tc>, window_params = [{pipeline_mode = #tpu.pipeline_mode<synchronous>, transform_indices = @transform_0, window_bounds = array<i64: 2, 32>}, {pipeline_mode = #tpu.pipeline_mode<synchronous>, transform_indices = @transform_1, window_bounds = array<i64: 160, 128>}, {pipeline_mode = #tpu.pipeline_mode<synchronous>, transform_indices = @transform_2, window_bounds = array<i64: 8, 128>}, {pipeline_mode = #tpu.pipeline_mode<synchronous>, transform_indices = @transform_3, window_bounds = array<i64: 8, 128>}]} {
    %c0 = arith.constant 0 : index
    %c0_0 = arith.constant 0 : index
    %0 = vector.load %arg3[%c0, %c0_0] : memref<160x128xf32, #tpu.memory_space<vmem>>, vector<32x128xf32>
    %c32 = arith.constant 32 : index
    %c0_1 = arith.constant 0 : index
    %1 = vector.load %arg3[%c32, %c0_1] : memref<160x128xf32, #tpu.memory_space<vmem>>, vector<32x128xf32>
    %c64 = arith.constant 64 : index
    %c0_2 = arith.constant 0 : index
    %2 = vector.load %arg3[%c64, %c0_2] : memref<160x128xf32, #tpu.memory_space<vmem>>, vector<32x128xf32>
    %c96 = arith.constant 96 : index
    %c0_3 = arith.constant 0 : index
    %3 = vector.load %arg3[%c96, %c0_3] : memref<160x128xf32, #tpu.memory_space<vmem>>, vector<32x128xf32>
    %c128 = arith.constant 128 : index
    %c0_4 = arith.constant 0 : index
    %4 = vector.load %arg3[%c128, %c0_4] : memref<160x128xf32, #tpu.memory_space<vmem>>, vector<32x128xf32>
    %c0_5 = arith.constant 0 : index
    %c0_6 = arith.constant 0 : index
    %5 = vector.load %arg4[%c0_5, %c0_6] : memref<8x128xf32, #tpu.memory_space<vmem>>, vector<1x128xf32>
    %c1 = arith.constant 1 : index
    %c0_7 = arith.constant 0 : index
    %6 = vector.load %arg4[%c1, %c0_7] : memref<8x128xf32, #tpu.memory_space<vmem>>, vector<1x128xf32>
    %c2 = arith.constant 2 : index
    %c0_8 = arith.constant 0 : index
    %7 = vector.load %arg4[%c2, %c0_8] : memref<8x128xf32, #tpu.memory_space<vmem>>, vector<1x128xf32>
    %c3 = arith.constant 3 : index
    %c0_9 = arith.constant 0 : index
    %8 = vector.load %arg4[%c3, %c0_9] : memref<8x128xf32, #tpu.memory_space<vmem>>, vector<1x128xf32>
    %c4 = arith.constant 4 : index
    %c0_10 = arith.constant 0 : index
    %9 = vector.load %arg4[%c4, %c0_10] : memref<8x128xf32, #tpu.memory_space<vmem>>, vector<1x128xf32>
    %10 = vector.extract_strided_slice %9 {offsets = [0, 0], sizes = [1, 32], strides = [1, 1]} : vector<1x128xf32> to vector<1x32xf32>
    %c5 = arith.constant 5 : index
    %c0_11 = arith.constant 0 : index
    %11 = vector.load %arg4[%c5, %c0_11] : memref<8x128xf32, #tpu.memory_space<vmem>>, vector<1x128xf32>
    %c6 = arith.constant 6 : index
    %c0_12 = arith.constant 0 : index
    %12 = vector.load %arg4[%c6, %c0_12] : memref<8x128xf32, #tpu.memory_space<vmem>>, vector<1x128xf32>
    %c0_13 = arith.constant 0 : index
    %c0_14 = arith.constant 0 : index
    %13 = vector.load %arg2[%c0_13, %c0_14] : memref<2x32xf32, #tpu.memory_space<vmem>>, vector<1x32xf32>
    %c1_15 = arith.constant 1 : index
    %c0_16 = arith.constant 0 : index
    %14 = vector.load %arg2[%c1_15, %c0_16] : memref<2x32xf32, #tpu.memory_space<vmem>>, vector<1x32xf32>
    %15 = arith.mulf %13, %14 : vector<1x32xf32>
    %cst = arith.constant dense<0.000000e+00> : vector<1x128xf32>
    %16 = tpu.matmul %15, %4, %cst {dimension_numbers = #tpu.dot_dimension_numbers<[1], [0], [0], [1], [0, 0, 1, 1], [], []>} : vector<1x32xf32>, vector<32x128xf32>, vector<1x128xf32> -> vector<1x128xf32>
    %17 = vector.extract_strided_slice %16 {offsets = [0, 0], sizes = [1, 32], strides = [1, 1]} : vector<1x128xf32> to vector<1x32xf32>
    %18 = arith.addf %17, %10 : vector<1x32xf32>
    %c0_17 = arith.constant 0 : index
    %19 = memref.load %arg1[%c0_17] : memref<8xi32, #tpu.memory_space<smem>>
    %20 = arith.sitofp %19 : i32 to f32
    %21 = vector.broadcast %20 : f32 to vector<1x1xf32>
    %22 = vector.broadcast %21 : vector<1x1xf32> to vector<1x128xf32>
    %23 = arith.mulf %22, %5 : vector<1x128xf32>
    %24 = arith.addf %23, %6 : vector<1x128xf32>
    %cst_18 = arith.constant dense<0.000000e+00> : vector<1x128xf32>
    %25 = tpu.matmul %18, %0, %cst_18 {dimension_numbers = #tpu.dot_dimension_numbers<[1], [0], [0], [1], [0, 0, 1, 1], [], []>} : vector<1x32xf32>, vector<32x128xf32>, vector<1x128xf32> -> vector<1x128xf32>
    %26 = arith.addf %24, %25 : vector<1x128xf32>
    %27 = arith.negf %26 : vector<1x128xf32>
    %28 = math.exp %27 : vector<1x128xf32>
    %cst_19 = arith.constant 1.000000e+00 : f32
    %29 = vector.broadcast %cst_19 : f32 to vector<1x128xf32>
    %30 = arith.addf %29, %28 : vector<1x128xf32>
    %31 = arith.divf %29, %30 : vector<1x128xf32>
    %32 = vector.extract_strided_slice %31 {offsets = [0, 0], sizes = [1, 32], strides = [1, 1]} : vector<1x128xf32> to vector<1x32xf32>
    %33 = vector.extract_strided_slice %31 {offsets = [0, 32], sizes = [1, 32], strides = [1, 1]} : vector<1x128xf32> to vector<1x32xf32>
    %34 = vector.extract_strided_slice %31 {offsets = [0, 64], sizes = [1, 32], strides = [1, 1]} : vector<1x128xf32> to vector<1x32xf32>
    %cst_20 = arith.constant 2.000000e+00 : f32
    %35 = vector.broadcast %cst_20 : f32 to vector<1x32xf32>
    %36 = arith.mulf %35, %34 : vector<1x32xf32>
    %cst_21 = arith.constant 1.000000e+00 : f32
    %37 = vector.broadcast %cst_21 : f32 to vector<1x32xf32>
    %38 = arith.subf %36, %37 : vector<1x32xf32>
    %39 = vector.extract_strided_slice %31 {offsets = [0, 96], sizes = [1, 32], strides = [1, 1]} : vector<1x128xf32> to vector<1x32xf32>
    %40 = arith.mulf %33, %18 : vector<1x32xf32>
    %41 = arith.mulf %32, %38 : vector<1x32xf32>
    %42 = arith.addf %40, %41 : vector<1x32xf32>
    %43 = math.tanh %42 : vector<1x32xf32>
    %44 = arith.mulf %39, %43 : vector<1x32xf32>
    %cst_22 = arith.constant dense<0.000000e+00> : vector<1x128xf32>
    %45 = tpu.matmul %18, %1, %cst_22 {dimension_numbers = #tpu.dot_dimension_numbers<[1], [0], [0], [1], [0, 0, 1, 1], [], []>} : vector<1x32xf32>, vector<32x128xf32>, vector<1x128xf32> -> vector<1x128xf32>
    %cst_23 = arith.constant dense<0.000000e+00> : vector<1x128xf32>
    %46 = tpu.matmul %44, %2, %cst_23 {dimension_numbers = #tpu.dot_dimension_numbers<[1], [0], [0], [1], [0, 0, 1, 1], [], []>} : vector<1x32xf32>, vector<32x128xf32>, vector<1x128xf32> -> vector<1x128xf32>
    %47 = arith.addf %45, %46 : vector<1x128xf32>
    %48 = arith.addf %47, %7 : vector<1x128xf32>
    %49 = arith.negf %48 : vector<1x128xf32>
    %50 = math.exp %49 : vector<1x128xf32>
    %cst_24 = arith.constant 1.000000e+00 : f32
    %51 = vector.broadcast %cst_24 : f32 to vector<1x128xf32>
    %52 = arith.addf %51, %50 : vector<1x128xf32>
    %53 = arith.divf %51, %52 : vector<1x128xf32>
    %54 = vector.extract_strided_slice %53 {offsets = [0, 0], sizes = [1, 32], strides = [1, 1]} : vector<1x128xf32> to vector<1x32xf32>
    %55 = vector.extract_strided_slice %53 {offsets = [0, 32], sizes = [1, 32], strides = [1, 1]} : vector<1x128xf32> to vector<1x32xf32>
    %56 = vector.extract_strided_slice %53 {offsets = [0, 64], sizes = [1, 32], strides = [1, 1]} : vector<1x128xf32> to vector<1x32xf32>
    %cst_25 = arith.constant 2.000000e+00 : f32
    %57 = vector.broadcast %cst_25 : f32 to vector<1x32xf32>
    %58 = arith.mulf %57, %56 : vector<1x32xf32>
    %cst_26 = arith.constant 1.000000e+00 : f32
    %59 = vector.broadcast %cst_26 : f32 to vector<1x32xf32>
    %60 = arith.subf %58, %59 : vector<1x32xf32>
    %61 = vector.extract_strided_slice %53 {offsets = [0, 96], sizes = [1, 32], strides = [1, 1]} : vector<1x128xf32> to vector<1x32xf32>
    %62 = arith.mulf %55, %18 : vector<1x32xf32>
    %63 = arith.mulf %54, %60 : vector<1x32xf32>
    %64 = arith.addf %62, %63 : vector<1x32xf32>
    %65 = math.tanh %64 : vector<1x32xf32>
    %66 = arith.mulf %61, %65 : vector<1x32xf32>
    %cst_27 = arith.constant dense<0.000000e+00> : vector<1x128xf32>
    %67 = tpu.matmul %66, %3, %cst_27 {dimension_numbers = #tpu.dot_dimension_numbers<[1], [0], [0], [1], [0, 0, 1, 1], [], []>} : vector<1x32xf32>, vector<32x128xf32>, vector<1x128xf32> -> vector<1x128xf32>
    %68 = arith.addf %67, %8 : vector<1x128xf32>
    %cst_28 = arith.constant 0.000000e+00 : f32
    %69 = vector.broadcast %cst_28 : f32 to vector<1x128xf32>
    %70 = arith.maximumf %68, %69 : vector<1x128xf32>
    %cst_29 = arith.constant dense<0xFF800000> : vector<1xf32>
    %71 = vector.multi_reduction <maximumf>, %70, %cst_29 [1] : vector<1x128xf32> to vector<1xf32>
    %72 = vector.shape_cast %71 : vector<1xf32> to vector<1x1xf32>
    %73 = vector.broadcast %72 : vector<1x1xf32> to vector<1x128xf32>
    %74 = arith.cmpf oge, %70, %73 : vector<1x128xf32>
    %cst_30 = arith.constant 1.280000e+02 : f32
    %75 = vector.broadcast %cst_30 : f32 to vector<1x128xf32>
    %76 = arith.select %74, %12, %75 : vector<1x128xi1>, vector<1x128xf32>
    %cst_31 = arith.constant dense<0x7F800000> : vector<1xf32>
    %77 = vector.multi_reduction <minimumf>, %76, %cst_31 [1] : vector<1x128xf32> to vector<1xf32>
    %78 = vector.shape_cast %77 : vector<1xf32> to vector<1x1xf32>
    %79 = vector.broadcast %72 : vector<1x1xf32> to vector<1x128xf32>
    %80 = arith.subf %70, %79 : vector<1x128xf32>
    %81 = math.exp %80 : vector<1x128xf32>
    %82 = arith.mulf %81, %11 : vector<1x128xf32>
    %cst_32 = arith.constant dense<0.000000e+00> : vector<1xf32>
    %83 = vector.multi_reduction <add>, %82, %cst_32 [1] : vector<1x128xf32> to vector<1xf32>
    %84 = vector.shape_cast %83 : vector<1xf32> to vector<1x1xf32>
    %85 = math.log %84 : vector<1x1xf32>
    %86 = arith.addf %72, %85 : vector<1x1xf32>
    %87 = vector.broadcast %86 : vector<1x1xf32> to vector<1x128xf32>
    %88 = arith.subf %70, %87 : vector<1x128xf32>
    %c0_33 = arith.constant 0 : index
    %c0_34 = arith.constant 0 : index
    %89 = vector.load %arg5[%c0_33, %c0_34] : memref<8x128xf32, #tpu.memory_space<vmem>>, vector<1x128xf32>
    tpu.vector_store %arg5[%c0_33, %c0_34], %88 {strides = array<i32>} : memref<8x128xf32, #tpu.memory_space<vmem>>, vector<1x128xf32>,
    %90 = vector.broadcast %78 : vector<1x1xf32> to vector<1x128xf32>
    %91 = arith.mulf %90, %5 : vector<1x128xf32>
    %92 = arith.addf %91, %6 : vector<1x128xf32>
    %cst_35 = arith.constant dense<0.000000e+00> : vector<1x128xf32>
    %93 = tpu.matmul %44, %0, %cst_35 {dimension_numbers = #tpu.dot_dimension_numbers<[1], [0], [0], [1], [0, 0, 1, 1], [], []>} : vector<1x32xf32>, vector<32x128xf32>, vector<1x128xf32> -> vector<1x128xf32>
    %94 = arith.addf %92, %93 : vector<1x128xf32>
    %95 = arith.negf %94 : vector<1x128xf32>
    %96 = math.exp %95 : vector<1x128xf32>
    %cst_36 = arith.constant 1.000000e+00 : f32
    %97 = vector.broadcast %cst_36 : f32 to vector<1x128xf32>
    %98 = arith.addf %97, %96 : vector<1x128xf32>
    %99 = arith.divf %97, %98 : vector<1x128xf32>
    %100 = vector.extract_strided_slice %99 {offsets = [0, 0], sizes = [1, 32], strides = [1, 1]} : vector<1x128xf32> to vector<1x32xf32>
    %101 = vector.extract_strided_slice %99 {offsets = [0, 32], sizes = [1, 32], strides = [1, 1]} : vector<1x128xf32> to vector<1x32xf32>
    %102 = vector.extract_strided_slice %99 {offsets = [0, 64], sizes = [1, 32], strides = [1, 1]} : vector<1x128xf32> to vector<1x32xf32>
    %cst_37 = arith.constant 2.000000e+00 : f32
    %103 = vector.broadcast %cst_37 : f32 to vector<1x32xf32>
    %104 = arith.mulf %103, %102 : vector<1x32xf32>
    %cst_38 = arith.constant 1.000000e+00 : f32
    %105 = vector.broadcast %cst_38 : f32 to vector<1x32xf32>
    %106 = arith.subf %104, %105 : vector<1x32xf32>
    %107 = vector.extract_strided_slice %99 {offsets = [0, 96], sizes = [1, 32], strides = [1, 1]} : vector<1x128xf32> to vector<1x32xf32>
    %108 = arith.mulf %101, %42 : vector<1x32xf32>
    %109 = arith.mulf %100, %106 : vector<1x32xf32>
    %110 = arith.addf %108, %109 : vector<1x32xf32>
    %111 = math.tanh %110 : vector<1x32xf32>
    %112 = arith.mulf %107, %111 : vector<1x32xf32>
    %cst_39 = arith.constant dense<0.000000e+00> : vector<1x128xf32>
    %113 = tpu.matmul %66, %1, %cst_39 {dimension_numbers = #tpu.dot_dimension_numbers<[1], [0], [0], [1], [0, 0, 1, 1], [], []>} : vector<1x32xf32>, vector<32x128xf32>, vector<1x128xf32> -> vector<1x128xf32>
    %cst_40 = arith.constant dense<0.000000e+00> : vector<1x128xf32>
    %114 = tpu.matmul %112, %2, %cst_40 {dimension_numbers = #tpu.dot_dimension_numbers<[1], [0], [0], [1], [0, 0, 1, 1], [], []>} : vector<1x32xf32>, vector<32x128xf32>, vector<1x128xf32> -> vector<1x128xf32>
    %115 = arith.addf %113, %114 : vector<1x128xf32>
    %116 = arith.addf %115, %7 : vector<1x128xf32>
    %117 = arith.negf %116 : vector<1x128xf32>
    %118 = math.exp %117 : vector<1x128xf32>
    %cst_41 = arith.constant 1.000000e+00 : f32
    %119 = vector.broadcast %cst_41 : f32 to vector<1x128xf32>
    %120 = arith.addf %119, %118 : vector<1x128xf32>
    %121 = arith.divf %119, %120 : vector<1x128xf32>
    %122 = vector.extract_strided_slice %121 {offsets = [0, 0], sizes = [1, 32], strides = [1, 1]} : vector<1x128xf32> to vector<1x32xf32>
    %123 = vector.extract_strided_slice %121 {offsets = [0, 32], sizes = [1, 32], strides = [1, 1]} : vector<1x128xf32> to vector<1x32xf32>
    %124 = vector.extract_strided_slice %121 {offsets = [0, 64], sizes = [1, 32], strides = [1, 1]} : vector<1x128xf32> to vector<1x32xf32>
    %cst_42 = arith.constant 2.000000e+00 : f32
    %125 = vector.broadcast %cst_42 : f32 to vector<1x32xf32>
    %126 = arith.mulf %125, %124 : vector<1x32xf32>
    %cst_43 = arith.constant 1.000000e+00 : f32
    %127 = vector.broadcast %cst_43 : f32 to vector<1x32xf32>
    %128 = arith.subf %126, %127 : vector<1x32xf32>
    %129 = vector.extract_strided_slice %121 {offsets = [0, 96], sizes = [1, 32], strides = [1, 1]} : vector<1x128xf32> to vector<1x32xf32>
    %130 = arith.mulf %123, %64 : vector<1x32xf32>
    %131 = arith.mulf %122, %128 : vector<1x32xf32>
    %132 = arith.addf %130, %131 : vector<1x32xf32>
    %133 = math.tanh %132 : vector<1x32xf32>
    %134 = arith.mulf %129, %133 : vector<1x32xf32>
    %cst_44 = arith.constant dense<0.000000e+00> : vector<1x128xf32>
    %135 = tpu.matmul %134, %3, %cst_44 {dimension_numbers = #tpu.dot_dimension_numbers<[1], [0], [0], [1], [0, 0, 1, 1], [], []>} : vector<1x32xf32>, vector<32x128xf32>, vector<1x128xf32> -> vector<1x128xf32>
    %136 = arith.addf %135, %8 : vector<1x128xf32>
    %cst_45 = arith.constant 0.000000e+00 : f32
    %137 = vector.broadcast %cst_45 : f32 to vector<1x128xf32>
    %138 = arith.maximumf %136, %137 : vector<1x128xf32>
    %cst_46 = arith.constant dense<0xFF800000> : vector<1xf32>
    %139 = vector.multi_reduction <maximumf>, %138, %cst_46 [1] : vector<1x128xf32> to vector<1xf32>
    %140 = vector.shape_cast %139 : vector<1xf32> to vector<1x1xf32>
    %141 = vector.broadcast %140 : vector<1x1xf32> to vector<1x128xf32>
    %142 = arith.cmpf oge, %138, %141 : vector<1x128xf32>
    %cst_47 = arith.constant 1.280000e+02 : f32
    %143 = vector.broadcast %cst_47 : f32 to vector<1x128xf32>
    %144 = arith.select %142, %12, %143 : vector<1x128xi1>, vector<1x128xf32>
    %cst_48 = arith.constant dense<0x7F800000> : vector<1xf32>
    %145 = vector.multi_reduction <minimumf>, %144, %cst_48 [1] : vector<1x128xf32> to vector<1xf32>
    %146 = vector.shape_cast %145 : vector<1xf32> to vector<1x1xf32>
    %147 = vector.broadcast %140 : vector<1x1xf32> to vector<1x128xf32>
    %148 = arith.subf %138, %147 : vector<1x128xf32>
    %149 = math.exp %148 : vector<1x128xf32>
    %150 = arith.mulf %149, %11 : vector<1x128xf32>
    %cst_49 = arith.constant dense<0.000000e+00> : vector<1xf32>
    %151 = vector.multi_reduction <add>, %150, %cst_49 [1] : vector<1x128xf32> to vector<1xf32>
    %152 = vector.shape_cast %151 : vector<1xf32> to vector<1x1xf32>
    %153 = math.log %152 : vector<1x1xf32>
    %154 = arith.addf %140, %153 : vector<1x1xf32>
    %155 = vector.broadcast %154 : vector<1x1xf32> to vector<1x128xf32>
    %156 = arith.subf %138, %155 : vector<1x128xf32>
    %c1_50 = arith.constant 1 : index
    %c0_51 = arith.constant 0 : index
    %157 = vector.load %arg5[%c1_50, %c0_51] : memref<8x128xf32, #tpu.memory_space<vmem>>, vector<1x128xf32>
    tpu.vector_store %arg5[%c1_50, %c0_51], %156 {strides = array<i32>} : memref<8x128xf32, #tpu.memory_space<vmem>>, vector<1x128xf32>,
    %158 = vector.broadcast %146 : vector<1x1xf32> to vector<1x128xf32>
    %159 = arith.mulf %158, %5 : vector<1x128xf32>
    %160 = arith.addf %159, %6 : vector<1x128xf32>
    %cst_52 = arith.constant dense<0.000000e+00> : vector<1x128xf32>
    %161 = tpu.matmul %112, %0, %cst_52 {dimension_numbers = #tpu.dot_dimension_numbers<[1], [0], [0], [1], [0, 0, 1, 1], [], []>} : vector<1x32xf32>, vector<32x128xf32>, vector<1x128xf32> -> vector<1x128xf32>
    %162 = arith.addf %160, %161 : vector<1x128xf32>
    %163 = arith.negf %162 : vector<1x128xf32>
    %164 = math.exp %163 : vector<1x128xf32>
    %cst_53 = arith.constant 1.000000e+00 : f32
    %165 = vector.broadcast %cst_53 : f32 to vector<1x128xf32>
    %166 = arith.addf %165, %164 : vector<1x128xf32>
    %167 = arith.divf %165, %166 : vector<1x128xf32>
    %168 = vector.extract_strided_slice %167 {offsets = [0, 0], sizes = [1, 32], strides = [1, 1]} : vector<1x128xf32> to vector<1x32xf32>
    %169 = vector.extract_strided_slice %167 {offsets = [0, 32], sizes = [1, 32], strides = [1, 1]} : vector<1x128xf32> to vector<1x32xf32>
    %170 = vector.extract_strided_slice %167 {offsets = [0, 64], sizes = [1, 32], strides = [1, 1]} : vector<1x128xf32> to vector<1x32xf32>
    %cst_54 = arith.constant 2.000000e+00 : f32
    %171 = vector.broadcast %cst_54 : f32 to vector<1x32xf32>
    %172 = arith.mulf %171, %170 : vector<1x32xf32>
    %cst_55 = arith.constant 1.000000e+00 : f32
    %173 = vector.broadcast %cst_55 : f32 to vector<1x32xf32>
    %174 = arith.subf %172, %173 : vector<1x32xf32>
    %175 = vector.extract_strided_slice %167 {offsets = [0, 96], sizes = [1, 32], strides = [1, 1]} : vector<1x128xf32> to vector<1x32xf32>
    %176 = arith.mulf %169, %110 : vector<1x32xf32>
    %177 = arith.mulf %168, %174 : vector<1x32xf32>
    %178 = arith.addf %176, %177 : vector<1x32xf32>
    %179 = math.tanh %178 : vector<1x32xf32>
    %180 = arith.mulf %175, %179 : vector<1x32xf32>
    %cst_56 = arith.constant dense<0.000000e+00> : vector<1x128xf32>
    %181 = tpu.matmul %134, %1, %cst_56 {dimension_numbers = #tpu.dot_dimension_numbers<[1], [0], [0], [1], [0, 0, 1, 1], [], []>} : vector<1x32xf32>, vector<32x128xf32>, vector<1x128xf32> -> vector<1x128xf32>
    %cst_57 = arith.constant dense<0.000000e+00> : vector<1x128xf32>
    %182 = tpu.matmul %180, %2, %cst_57 {dimension_numbers = #tpu.dot_dimension_numbers<[1], [0], [0], [1], [0, 0, 1, 1], [], []>} : vector<1x32xf32>, vector<32x128xf32>, vector<1x128xf32> -> vector<1x128xf32>
    %183 = arith.addf %181, %182 : vector<1x128xf32>
    %184 = arith.addf %183, %7 : vector<1x128xf32>
    %185 = arith.negf %184 : vector<1x128xf32>
    %186 = math.exp %185 : vector<1x128xf32>
    %cst_58 = arith.constant 1.000000e+00 : f32
    %187 = vector.broadcast %cst_58 : f32 to vector<1x128xf32>
    %188 = arith.addf %187, %186 : vector<1x128xf32>
    %189 = arith.divf %187, %188 : vector<1x128xf32>
    %190 = vector.extract_strided_slice %189 {offsets = [0, 0], sizes = [1, 32], strides = [1, 1]} : vector<1x128xf32> to vector<1x32xf32>
    %191 = vector.extract_strided_slice %189 {offsets = [0, 32], sizes = [1, 32], strides = [1, 1]} : vector<1x128xf32> to vector<1x32xf32>
    %192 = vector.extract_strided_slice %189 {offsets = [0, 64], sizes = [1, 32], strides = [1, 1]} : vector<1x128xf32> to vector<1x32xf32>
    %cst_59 = arith.constant 2.000000e+00 : f32
    %193 = vector.broadcast %cst_59 : f32 to vector<1x32xf32>
    %194 = arith.mulf %193, %192 : vector<1x32xf32>
    %cst_60 = arith.constant 1.000000e+00 : f32
    %195 = vector.broadcast %cst_60 : f32 to vector<1x32xf32>
    %196 = arith.subf %194, %195 : vector<1x32xf32>
    %197 = vector.extract_strided_slice %189 {offsets = [0, 96], sizes = [1, 32], strides = [1, 1]} : vector<1x128xf32> to vector<1x32xf32>
    %198 = arith.mulf %191, %132 : vector<1x32xf32>
    %199 = arith.mulf %190, %196 : vector<1x32xf32>
    %200 = arith.addf %198, %199 : vector<1x32xf32>
    %201 = math.tanh %200 : vector<1x32xf32>
    %202 = arith.mulf %197, %201 : vector<1x32xf32>
    %cst_61 = arith.constant dense<0.000000e+00> : vector<1x128xf32>
    %203 = tpu.matmul %202, %3, %cst_61 {dimension_numbers = #tpu.dot_dimension_numbers<[1], [0], [0], [1], [0, 0, 1, 1], [], []>} : vector<1x32xf32>, vector<32x128xf32>, vector<1x128xf32> -> vector<1x128xf32>
    %204 = arith.addf %203, %8 : vector<1x128xf32>
    %cst_62 = arith.constant 0.000000e+00 : f32
    %205 = vector.broadcast %cst_62 : f32 to vector<1x128xf32>
    %206 = arith.maximumf %204, %205 : vector<1x128xf32>
    %cst_63 = arith.constant dense<0xFF800000> : vector<1xf32>
    %207 = vector.multi_reduction <maximumf>, %206, %cst_63 [1] : vector<1x128xf32> to vector<1xf32>
    %208 = vector.shape_cast %207 : vector<1xf32> to vector<1x1xf32>
    %209 = vector.broadcast %208 : vector<1x1xf32> to vector<1x128xf32>
    %210 = arith.cmpf oge, %206, %209 : vector<1x128xf32>
    %cst_64 = arith.constant 1.280000e+02 : f32
    %211 = vector.broadcast %cst_64 : f32 to vector<1x128xf32>
    %212 = arith.select %210, %12, %211 : vector<1x128xi1>, vector<1x128xf32>
    %cst_65 = arith.constant dense<0x7F800000> : vector<1xf32>
    %213 = vector.multi_reduction <minimumf>, %212, %cst_65 [1] : vector<1x128xf32> to vector<1xf32>
    %214 = vector.shape_cast %213 : vector<1xf32> to vector<1x1xf32>
    %215 = vector.broadcast %208 : vector<1x1xf32> to vector<1x128xf32>
    %216 = arith.subf %206, %215 : vector<1x128xf32>
    %217 = math.exp %216 : vector<1x128xf32>
    %218 = arith.mulf %217, %11 : vector<1x128xf32>
    %cst_66 = arith.constant dense<0.000000e+00> : vector<1xf32>
    %219 = vector.multi_reduction <add>, %218, %cst_66 [1] : vector<1x128xf32> to vector<1xf32>
    %220 = vector.shape_cast %219 : vector<1xf32> to vector<1x1xf32>
    %221 = math.log %220 : vector<1x1xf32>
    %222 = arith.addf %208, %221 : vector<1x1xf32>
    %223 = vector.broadcast %222 : vector<1x1xf32> to vector<1x128xf32>
    %224 = arith.subf %206, %223 : vector<1x128xf32>
    %c2_67 = arith.constant 2 : index
    %c0_68 = arith.constant 0 : index
    %225 = vector.load %arg5[%c2_67, %c0_68] : memref<8x128xf32, #tpu.memory_space<vmem>>, vector<1x128xf32>
    tpu.vector_store %arg5[%c2_67, %c0_68], %224 {strides = array<i32>} : memref<8x128xf32, #tpu.memory_space<vmem>>, vector<1x128xf32>,
    %226 = vector.broadcast %214 : vector<1x1xf32> to vector<1x128xf32>
    %227 = arith.mulf %226, %5 : vector<1x128xf32>
    %228 = arith.addf %227, %6 : vector<1x128xf32>
    %cst_69 = arith.constant dense<0.000000e+00> : vector<1x128xf32>
    %229 = tpu.matmul %180, %0, %cst_69 {dimension_numbers = #tpu.dot_dimension_numbers<[1], [0], [0], [1], [0, 0, 1, 1], [], []>} : vector<1x32xf32>, vector<32x128xf32>, vector<1x128xf32> -> vector<1x128xf32>
    %230 = arith.addf %228, %229 : vector<1x128xf32>
    %231 = arith.negf %230 : vector<1x128xf32>
    %232 = math.exp %231 : vector<1x128xf32>
    %cst_70 = arith.constant 1.000000e+00 : f32
    %233 = vector.broadcast %cst_70 : f32 to vector<1x128xf32>
    %234 = arith.addf %233, %232 : vector<1x128xf32>
    %235 = arith.divf %233, %234 : vector<1x128xf32>
    %236 = vector.extract_strided_slice %235 {offsets = [0, 0], sizes = [1, 32], strides = [1, 1]} : vector<1x128xf32> to vector<1x32xf32>
    %237 = vector.extract_strided_slice %235 {offsets = [0, 32], sizes = [1, 32], strides = [1, 1]} : vector<1x128xf32> to vector<1x32xf32>
    %238 = vector.extract_strided_slice %235 {offsets = [0, 64], sizes = [1, 32], strides = [1, 1]} : vector<1x128xf32> to vector<1x32xf32>
    %cst_71 = arith.constant 2.000000e+00 : f32
    %239 = vector.broadcast %cst_71 : f32 to vector<1x32xf32>
    %240 = arith.mulf %239, %238 : vector<1x32xf32>
    %cst_72 = arith.constant 1.000000e+00 : f32
    %241 = vector.broadcast %cst_72 : f32 to vector<1x32xf32>
    %242 = arith.subf %240, %241 : vector<1x32xf32>
    %243 = vector.extract_strided_slice %235 {offsets = [0, 96], sizes = [1, 32], strides = [1, 1]} : vector<1x128xf32> to vector<1x32xf32>
    %244 = arith.mulf %237, %178 : vector<1x32xf32>
    %245 = arith.mulf %236, %242 : vector<1x32xf32>
    %246 = arith.addf %244, %245 : vector<1x32xf32>
    %247 = math.tanh %246 : vector<1x32xf32>
    %248 = arith.mulf %243, %247 : vector<1x32xf32>
    %cst_73 = arith.constant dense<0.000000e+00> : vector<1x128xf32>
    %249 = tpu.matmul %202, %1, %cst_73 {dimension_numbers = #tpu.dot_dimension_numbers<[1], [0], [0], [1], [0, 0, 1, 1], [], []>} : vector<1x32xf32>, vector<32x128xf32>, vector<1x128xf32> -> vector<1x128xf32>
    %cst_74 = arith.constant dense<0.000000e+00> : vector<1x128xf32>
    %250 = tpu.matmul %248, %2, %cst_74 {dimension_numbers = #tpu.dot_dimension_numbers<[1], [0], [0], [1], [0, 0, 1, 1], [], []>} : vector<1x32xf32>, vector<32x128xf32>, vector<1x128xf32> -> vector<1x128xf32>
    %251 = arith.addf %249, %250 : vector<1x128xf32>
    %252 = arith.addf %251, %7 : vector<1x128xf32>
    %253 = arith.negf %252 : vector<1x128xf32>
    %254 = math.exp %253 : vector<1x128xf32>
    %cst_75 = arith.constant 1.000000e+00 : f32
    %255 = vector.broadcast %cst_75 : f32 to vector<1x128xf32>
    %256 = arith.addf %255, %254 : vector<1x128xf32>
    %257 = arith.divf %255, %256 : vector<1x128xf32>
    %258 = vector.extract_strided_slice %257 {offsets = [0, 0], sizes = [1, 32], strides = [1, 1]} : vector<1x128xf32> to vector<1x32xf32>
    %259 = vector.extract_strided_slice %257 {offsets = [0, 32], sizes = [1, 32], strides = [1, 1]} : vector<1x128xf32> to vector<1x32xf32>
    %260 = vector.extract_strided_slice %257 {offsets = [0, 64], sizes = [1, 32], strides = [1, 1]} : vector<1x128xf32> to vector<1x32xf32>
    %cst_76 = arith.constant 2.000000e+00 : f32
    %261 = vector.broadcast %cst_76 : f32 to vector<1x32xf32>
    %262 = arith.mulf %261, %260 : vector<1x32xf32>
    %cst_77 = arith.constant 1.000000e+00 : f32
    %263 = vector.broadcast %cst_77 : f32 to vector<1x32xf32>
    %264 = arith.subf %262, %263 : vector<1x32xf32>
    %265 = vector.extract_strided_slice %257 {offsets = [0, 96], sizes = [1, 32], strides = [1, 1]} : vector<1x128xf32> to vector<1x32xf32>
    %266 = arith.mulf %259, %200 : vector<1x32xf32>
    %267 = arith.mulf %258, %264 : vector<1x32xf32>
    %268 = arith.addf %266, %267 : vector<1x32xf32>
    %269 = math.tanh %268 : vector<1x32xf32>
    %270 = arith.mulf %265, %269 : vector<1x32xf32>
    %cst_78 = arith.constant dense<0.000000e+00> : vector<1x128xf32>
    %271 = tpu.matmul %270, %3, %cst_78 {dimension_numbers = #tpu.dot_dimension_numbers<[1], [0], [0], [1], [0, 0, 1, 1], [], []>} : vector<1x32xf32>, vector<32x128xf32>, vector<1x128xf32> -> vector<1x128xf32>
    %272 = arith.addf %271, %8 : vector<1x128xf32>
    %cst_79 = arith.constant 0.000000e+00 : f32
    %273 = vector.broadcast %cst_79 : f32 to vector<1x128xf32>
    %274 = arith.maximumf %272, %273 : vector<1x128xf32>
    %cst_80 = arith.constant dense<0xFF800000> : vector<1xf32>
    %275 = vector.multi_reduction <maximumf>, %274, %cst_80 [1] : vector<1x128xf32> to vector<1xf32>
    %276 = vector.shape_cast %275 : vector<1xf32> to vector<1x1xf32>
    %277 = vector.broadcast %276 : vector<1x1xf32> to vector<1x128xf32>
    %278 = arith.cmpf oge, %274, %277 : vector<1x128xf32>
    %cst_81 = arith.constant 1.280000e+02 : f32
    %279 = vector.broadcast %cst_81 : f32 to vector<1x128xf32>
    %280 = arith.select %278, %12, %279 : vector<1x128xi1>, vector<1x128xf32>
    %cst_82 = arith.constant dense<0x7F800000> : vector<1xf32>
    %281 = vector.multi_reduction <minimumf>, %280, %cst_82 [1] : vector<1x128xf32> to vector<1xf32>
    %282 = vector.shape_cast %281 : vector<1xf32> to vector<1x1xf32>
    %283 = vector.broadcast %276 : vector<1x1xf32> to vector<1x128xf32>
    %284 = arith.subf %274, %283 : vector<1x128xf32>
    %285 = math.exp %284 : vector<1x128xf32>
    %286 = arith.mulf %285, %11 : vector<1x128xf32>
    %cst_83 = arith.constant dense<0.000000e+00> : vector<1xf32>
    %287 = vector.multi_reduction <add>, %286, %cst_83 [1] : vector<1x128xf32> to vector<1xf32>
    %288 = vector.shape_cast %287 : vector<1xf32> to vector<1x1xf32>
    %289 = math.log %288 : vector<1x1xf32>
    %290 = arith.addf %276, %289 : vector<1x1xf32>
    %291 = vector.broadcast %290 : vector<1x1xf32> to vector<1x128xf32>
    %292 = arith.subf %274, %291 : vector<1x128xf32>
    %c3_84 = arith.constant 3 : index
    %c0_85 = arith.constant 0 : index
    %293 = vector.load %arg5[%c3_84, %c0_85] : memref<8x128xf32, #tpu.memory_space<vmem>>, vector<1x128xf32>
    tpu.vector_store %arg5[%c3_84, %c0_85], %292 {strides = array<i32>} : memref<8x128xf32, #tpu.memory_space<vmem>>, vector<1x128xf32>,
    %294 = vector.broadcast %282 : vector<1x1xf32> to vector<1x128xf32>
    %295 = arith.mulf %294, %5 : vector<1x128xf32>
    %296 = arith.addf %295, %6 : vector<1x128xf32>
    %cst_86 = arith.constant dense<0.000000e+00> : vector<1x128xf32>
    %297 = tpu.matmul %248, %0, %cst_86 {dimension_numbers = #tpu.dot_dimension_numbers<[1], [0], [0], [1], [0, 0, 1, 1], [], []>} : vector<1x32xf32>, vector<32x128xf32>, vector<1x128xf32> -> vector<1x128xf32>
    %298 = arith.addf %296, %297 : vector<1x128xf32>
    %299 = arith.negf %298 : vector<1x128xf32>
    %300 = math.exp %299 : vector<1x128xf32>
    %cst_87 = arith.constant 1.000000e+00 : f32
    %301 = vector.broadcast %cst_87 : f32 to vector<1x128xf32>
    %302 = arith.addf %301, %300 : vector<1x128xf32>
    %303 = arith.divf %301, %302 : vector<1x128xf32>
    %304 = vector.extract_strided_slice %303 {offsets = [0, 0], sizes = [1, 32], strides = [1, 1]} : vector<1x128xf32> to vector<1x32xf32>
    %305 = vector.extract_strided_slice %303 {offsets = [0, 32], sizes = [1, 32], strides = [1, 1]} : vector<1x128xf32> to vector<1x32xf32>
    %306 = vector.extract_strided_slice %303 {offsets = [0, 64], sizes = [1, 32], strides = [1, 1]} : vector<1x128xf32> to vector<1x32xf32>
    %cst_88 = arith.constant 2.000000e+00 : f32
    %307 = vector.broadcast %cst_88 : f32 to vector<1x32xf32>
    %308 = arith.mulf %307, %306 : vector<1x32xf32>
    %cst_89 = arith.constant 1.000000e+00 : f32
    %309 = vector.broadcast %cst_89 : f32 to vector<1x32xf32>
    %310 = arith.subf %308, %309 : vector<1x32xf32>
    %311 = vector.extract_strided_slice %303 {offsets = [0, 96], sizes = [1, 32], strides = [1, 1]} : vector<1x128xf32> to vector<1x32xf32>
    %312 = arith.mulf %305, %246 : vector<1x32xf32>
    %313 = arith.mulf %304, %310 : vector<1x32xf32>
    %314 = arith.addf %312, %313 : vector<1x32xf32>
    %315 = math.tanh %314 : vector<1x32xf32>
    %316 = arith.mulf %311, %315 : vector<1x32xf32>
    %cst_90 = arith.constant dense<0.000000e+00> : vector<1x128xf32>
    %317 = tpu.matmul %270, %1, %cst_90 {dimension_numbers = #tpu.dot_dimension_numbers<[1], [0], [0], [1], [0, 0, 1, 1], [], []>} : vector<1x32xf32>, vector<32x128xf32>, vector<1x128xf32> -> vector<1x128xf32>
    %cst_91 = arith.constant dense<0.000000e+00> : vector<1x128xf32>
    %318 = tpu.matmul %316, %2, %cst_91 {dimension_numbers = #tpu.dot_dimension_numbers<[1], [0], [0], [1], [0, 0, 1, 1], [], []>} : vector<1x32xf32>, vector<32x128xf32>, vector<1x128xf32> -> vector<1x128xf32>
    %319 = arith.addf %317, %318 : vector<1x128xf32>
    %320 = arith.addf %319, %7 : vector<1x128xf32>
    %321 = arith.negf %320 : vector<1x128xf32>
    %322 = math.exp %321 : vector<1x128xf32>
    %cst_92 = arith.constant 1.000000e+00 : f32
    %323 = vector.broadcast %cst_92 : f32 to vector<1x128xf32>
    %324 = arith.addf %323, %322 : vector<1x128xf32>
    %325 = arith.divf %323, %324 : vector<1x128xf32>
    %326 = vector.extract_strided_slice %325 {offsets = [0, 0], sizes = [1, 32], strides = [1, 1]} : vector<1x128xf32> to vector<1x32xf32>
    %327 = vector.extract_strided_slice %325 {offsets = [0, 32], sizes = [1, 32], strides = [1, 1]} : vector<1x128xf32> to vector<1x32xf32>
    %328 = vector.extract_strided_slice %325 {offsets = [0, 64], sizes = [1, 32], strides = [1, 1]} : vector<1x128xf32> to vector<1x32xf32>
    %cst_93 = arith.constant 2.000000e+00 : f32
    %329 = vector.broadcast %cst_93 : f32 to vector<1x32xf32>
    %330 = arith.mulf %329, %328 : vector<1x32xf32>
    %cst_94 = arith.constant 1.000000e+00 : f32
    %331 = vector.broadcast %cst_94 : f32 to vector<1x32xf32>
    %332 = arith.subf %330, %331 : vector<1x32xf32>
    %333 = vector.extract_strided_slice %325 {offsets = [0, 96], sizes = [1, 32], strides = [1, 1]} : vector<1x128xf32> to vector<1x32xf32>
    %334 = arith.mulf %327, %268 : vector<1x32xf32>
    %335 = arith.mulf %326, %332 : vector<1x32xf32>
    %336 = arith.addf %334, %335 : vector<1x32xf32>
    %337 = math.tanh %336 : vector<1x32xf32>
    %338 = arith.mulf %333, %337 : vector<1x32xf32>
    %cst_95 = arith.constant dense<0.000000e+00> : vector<1x128xf32>
    %339 = tpu.matmul %338, %3, %cst_95 {dimension_numbers = #tpu.dot_dimension_numbers<[1], [0], [0], [1], [0, 0, 1, 1], [], []>} : vector<1x32xf32>, vector<32x128xf32>, vector<1x128xf32> -> vector<1x128xf32>
    %340 = arith.addf %339, %8 : vector<1x128xf32>
    %cst_96 = arith.constant 0.000000e+00 : f32
    %341 = vector.broadcast %cst_96 : f32 to vector<1x128xf32>
    %342 = arith.maximumf %340, %341 : vector<1x128xf32>
    %cst_97 = arith.constant dense<0xFF800000> : vector<1xf32>
    %343 = vector.multi_reduction <maximumf>, %342, %cst_97 [1] : vector<1x128xf32> to vector<1xf32>
    %344 = vector.shape_cast %343 : vector<1xf32> to vector<1x1xf32>
    %345 = vector.broadcast %344 : vector<1x1xf32> to vector<1x128xf32>
    %346 = arith.cmpf oge, %342, %345 : vector<1x128xf32>
    %cst_98 = arith.constant 1.280000e+02 : f32
    %347 = vector.broadcast %cst_98 : f32 to vector<1x128xf32>
    %348 = arith.select %346, %12, %347 : vector<1x128xi1>, vector<1x128xf32>
    %cst_99 = arith.constant dense<0x7F800000> : vector<1xf32>
    %349 = vector.multi_reduction <minimumf>, %348, %cst_99 [1] : vector<1x128xf32> to vector<1xf32>
    %350 = vector.shape_cast %349 : vector<1xf32> to vector<1x1xf32>
    %351 = vector.broadcast %344 : vector<1x1xf32> to vector<1x128xf32>
    %352 = arith.subf %342, %351 : vector<1x128xf32>
    %353 = math.exp %352 : vector<1x128xf32>
    %354 = arith.mulf %353, %11 : vector<1x128xf32>
    %cst_100 = arith.constant dense<0.000000e+00> : vector<1xf32>
    %355 = vector.multi_reduction <add>, %354, %cst_100 [1] : vector<1x128xf32> to vector<1xf32>
    %356 = vector.shape_cast %355 : vector<1xf32> to vector<1x1xf32>
    %357 = math.log %356 : vector<1x1xf32>
    %358 = arith.addf %344, %357 : vector<1x1xf32>
    %359 = vector.broadcast %358 : vector<1x1xf32> to vector<1x128xf32>
    %360 = arith.subf %342, %359 : vector<1x128xf32>
    %c4_101 = arith.constant 4 : index
    %c0_102 = arith.constant 0 : index
    %361 = vector.load %arg5[%c4_101, %c0_102] : memref<8x128xf32, #tpu.memory_space<vmem>>, vector<1x128xf32>
    tpu.vector_store %arg5[%c4_101, %c0_102], %360 {strides = array<i32>} : memref<8x128xf32, #tpu.memory_space<vmem>>, vector<1x128xf32>,
    %362 = vector.broadcast %350 : vector<1x1xf32> to vector<1x128xf32>
    %363 = arith.mulf %362, %5 : vector<1x128xf32>
    %364 = arith.addf %363, %6 : vector<1x128xf32>
    %cst_103 = arith.constant dense<0.000000e+00> : vector<1x128xf32>
    %365 = tpu.matmul %316, %0, %cst_103 {dimension_numbers = #tpu.dot_dimension_numbers<[1], [0], [0], [1], [0, 0, 1, 1], [], []>} : vector<1x32xf32>, vector<32x128xf32>, vector<1x128xf32> -> vector<1x128xf32>
    %366 = arith.addf %364, %365 : vector<1x128xf32>
    %367 = arith.negf %366 : vector<1x128xf32>
    %368 = math.exp %367 : vector<1x128xf32>
    %cst_104 = arith.constant 1.000000e+00 : f32
    %369 = vector.broadcast %cst_104 : f32 to vector<1x128xf32>
    %370 = arith.addf %369, %368 : vector<1x128xf32>
    %371 = arith.divf %369, %370 : vector<1x128xf32>
    %372 = vector.extract_strided_slice %371 {offsets = [0, 0], sizes = [1, 32], strides = [1, 1]} : vector<1x128xf32> to vector<1x32xf32>
    %373 = vector.extract_strided_slice %371 {offsets = [0, 32], sizes = [1, 32], strides = [1, 1]} : vector<1x128xf32> to vector<1x32xf32>
    %374 = vector.extract_strided_slice %371 {offsets = [0, 64], sizes = [1, 32], strides = [1, 1]} : vector<1x128xf32> to vector<1x32xf32>
    %cst_105 = arith.constant 2.000000e+00 : f32
    %375 = vector.broadcast %cst_105 : f32 to vector<1x32xf32>
    %376 = arith.mulf %375, %374 : vector<1x32xf32>
    %cst_106 = arith.constant 1.000000e+00 : f32
    %377 = vector.broadcast %cst_106 : f32 to vector<1x32xf32>
    %378 = arith.subf %376, %377 : vector<1x32xf32>
    %379 = vector.extract_strided_slice %371 {offsets = [0, 96], sizes = [1, 32], strides = [1, 1]} : vector<1x128xf32> to vector<1x32xf32>
    %380 = arith.mulf %373, %314 : vector<1x32xf32>
    %381 = arith.mulf %372, %378 : vector<1x32xf32>
    %382 = arith.addf %380, %381 : vector<1x32xf32>
    %383 = math.tanh %382 : vector<1x32xf32>
    %384 = arith.mulf %379, %383 : vector<1x32xf32>
    %cst_107 = arith.constant dense<0.000000e+00> : vector<1x128xf32>
    %385 = tpu.matmul %338, %1, %cst_107 {dimension_numbers = #tpu.dot_dimension_numbers<[1], [0], [0], [1], [0, 0, 1, 1], [], []>} : vector<1x32xf32>, vector<32x128xf32>, vector<1x128xf32> -> vector<1x128xf32>
    %cst_108 = arith.constant dense<0.000000e+00> : vector<1x128xf32>
    %386 = tpu.matmul %384, %2, %cst_108 {dimension_numbers = #tpu.dot_dimension_numbers<[1], [0], [0], [1], [0, 0, 1, 1], [], []>} : vector<1x32xf32>, vector<32x128xf32>, vector<1x128xf32> -> vector<1x128xf32>
    %387 = arith.addf %385, %386 : vector<1x128xf32>
    %388 = arith.addf %387, %7 : vector<1x128xf32>
    %389 = arith.negf %388 : vector<1x128xf32>
    %390 = math.exp %389 : vector<1x128xf32>
    %cst_109 = arith.constant 1.000000e+00 : f32
    %391 = vector.broadcast %cst_109 : f32 to vector<1x128xf32>
    %392 = arith.addf %391, %390 : vector<1x128xf32>
    %393 = arith.divf %391, %392 : vector<1x128xf32>
    %394 = vector.extract_strided_slice %393 {offsets = [0, 0], sizes = [1, 32], strides = [1, 1]} : vector<1x128xf32> to vector<1x32xf32>
    %395 = vector.extract_strided_slice %393 {offsets = [0, 32], sizes = [1, 32], strides = [1, 1]} : vector<1x128xf32> to vector<1x32xf32>
    %396 = vector.extract_strided_slice %393 {offsets = [0, 64], sizes = [1, 32], strides = [1, 1]} : vector<1x128xf32> to vector<1x32xf32>
    %cst_110 = arith.constant 2.000000e+00 : f32
    %397 = vector.broadcast %cst_110 : f32 to vector<1x32xf32>
    %398 = arith.mulf %397, %396 : vector<1x32xf32>
    %cst_111 = arith.constant 1.000000e+00 : f32
    %399 = vector.broadcast %cst_111 : f32 to vector<1x32xf32>
    %400 = arith.subf %398, %399 : vector<1x32xf32>
    %401 = vector.extract_strided_slice %393 {offsets = [0, 96], sizes = [1, 32], strides = [1, 1]} : vector<1x128xf32> to vector<1x32xf32>
    %402 = arith.mulf %395, %336 : vector<1x32xf32>
    %403 = arith.mulf %394, %400 : vector<1x32xf32>
    %404 = arith.addf %402, %403 : vector<1x32xf32>
    %405 = math.tanh %404 : vector<1x32xf32>
    %406 = arith.mulf %401, %405 : vector<1x32xf32>
    %cst_112 = arith.constant dense<0.000000e+00> : vector<1x128xf32>
    %407 = tpu.matmul %406, %3, %cst_112 {dimension_numbers = #tpu.dot_dimension_numbers<[1], [0], [0], [1], [0, 0, 1, 1], [], []>} : vector<1x32xf32>, vector<32x128xf32>, vector<1x128xf32> -> vector<1x128xf32>
    %408 = arith.addf %407, %8 : vector<1x128xf32>
    %cst_113 = arith.constant 0.000000e+00 : f32
    %409 = vector.broadcast %cst_113 : f32 to vector<1x128xf32>
    %410 = arith.maximumf %408, %409 : vector<1x128xf32>
    %cst_114 = arith.constant dense<0xFF800000> : vector<1xf32>
    %411 = vector.multi_reduction <maximumf>, %410, %cst_114 [1] : vector<1x128xf32> to vector<1xf32>
    %412 = vector.shape_cast %411 : vector<1xf32> to vector<1x1xf32>
    %413 = vector.broadcast %412 : vector<1x1xf32> to vector<1x128xf32>
    %414 = arith.cmpf oge, %410, %413 : vector<1x128xf32>
    %cst_115 = arith.constant 1.280000e+02 : f32
    %415 = vector.broadcast %cst_115 : f32 to vector<1x128xf32>
    %416 = arith.select %414, %12, %415 : vector<1x128xi1>, vector<1x128xf32>
    %cst_116 = arith.constant dense<0x7F800000> : vector<1xf32>
    %417 = vector.multi_reduction <minimumf>, %416, %cst_116 [1] : vector<1x128xf32> to vector<1xf32>
    %418 = vector.shape_cast %417 : vector<1xf32> to vector<1x1xf32>
    %419 = vector.broadcast %412 : vector<1x1xf32> to vector<1x128xf32>
    %420 = arith.subf %410, %419 : vector<1x128xf32>
    %421 = math.exp %420 : vector<1x128xf32>
    %422 = arith.mulf %421, %11 : vector<1x128xf32>
    %cst_117 = arith.constant dense<0.000000e+00> : vector<1xf32>
    %423 = vector.multi_reduction <add>, %422, %cst_117 [1] : vector<1x128xf32> to vector<1xf32>
    %424 = vector.shape_cast %423 : vector<1xf32> to vector<1x1xf32>
    %425 = math.log %424 : vector<1x1xf32>
    %426 = arith.addf %412, %425 : vector<1x1xf32>
    %427 = vector.broadcast %426 : vector<1x1xf32> to vector<1x128xf32>
    %428 = arith.subf %410, %427 : vector<1x128xf32>
    %c5_118 = arith.constant 5 : index
    %c0_119 = arith.constant 0 : index
    %429 = vector.load %arg5[%c5_118, %c0_119] : memref<8x128xf32, #tpu.memory_space<vmem>>, vector<1x128xf32>
    tpu.vector_store %arg5[%c5_118, %c0_119], %428 {strides = array<i32>} : memref<8x128xf32, #tpu.memory_space<vmem>>, vector<1x128xf32>,
    %430 = vector.broadcast %418 : vector<1x1xf32> to vector<1x128xf32>
    %431 = arith.mulf %430, %5 : vector<1x128xf32>
    %432 = arith.addf %431, %6 : vector<1x128xf32>
    %cst_120 = arith.constant dense<0.000000e+00> : vector<1x128xf32>
    %433 = tpu.matmul %384, %0, %cst_120 {dimension_numbers = #tpu.dot_dimension_numbers<[1], [0], [0], [1], [0, 0, 1, 1], [], []>} : vector<1x32xf32>, vector<32x128xf32>, vector<1x128xf32> -> vector<1x128xf32>
    %434 = arith.addf %432, %433 : vector<1x128xf32>
    %435 = arith.negf %434 : vector<1x128xf32>
    %436 = math.exp %435 : vector<1x128xf32>
    %cst_121 = arith.constant 1.000000e+00 : f32
    %437 = vector.broadcast %cst_121 : f32 to vector<1x128xf32>
    %438 = arith.addf %437, %436 : vector<1x128xf32>
    %439 = arith.divf %437, %438 : vector<1x128xf32>
    %440 = vector.extract_strided_slice %439 {offsets = [0, 0], sizes = [1, 32], strides = [1, 1]} : vector<1x128xf32> to vector<1x32xf32>
    %441 = vector.extract_strided_slice %439 {offsets = [0, 32], sizes = [1, 32], strides = [1, 1]} : vector<1x128xf32> to vector<1x32xf32>
    %442 = vector.extract_strided_slice %439 {offsets = [0, 64], sizes = [1, 32], strides = [1, 1]} : vector<1x128xf32> to vector<1x32xf32>
    %cst_122 = arith.constant 2.000000e+00 : f32
    %443 = vector.broadcast %cst_122 : f32 to vector<1x32xf32>
    %444 = arith.mulf %443, %442 : vector<1x32xf32>
    %cst_123 = arith.constant 1.000000e+00 : f32
    %445 = vector.broadcast %cst_123 : f32 to vector<1x32xf32>
    %446 = arith.subf %444, %445 : vector<1x32xf32>
    %447 = vector.extract_strided_slice %439 {offsets = [0, 96], sizes = [1, 32], strides = [1, 1]} : vector<1x128xf32> to vector<1x32xf32>
    %448 = arith.mulf %441, %382 : vector<1x32xf32>
    %449 = arith.mulf %440, %446 : vector<1x32xf32>
    %450 = arith.addf %448, %449 : vector<1x32xf32>
    %451 = math.tanh %450 : vector<1x32xf32>
    %452 = arith.mulf %447, %451 : vector<1x32xf32>
    %cst_124 = arith.constant dense<0.000000e+00> : vector<1x128xf32>
    %453 = tpu.matmul %406, %1, %cst_124 {dimension_numbers = #tpu.dot_dimension_numbers<[1], [0], [0], [1], [0, 0, 1, 1], [], []>} : vector<1x32xf32>, vector<32x128xf32>, vector<1x128xf32> -> vector<1x128xf32>
    %cst_125 = arith.constant dense<0.000000e+00> : vector<1x128xf32>
    %454 = tpu.matmul %452, %2, %cst_125 {dimension_numbers = #tpu.dot_dimension_numbers<[1], [0], [0], [1], [0, 0, 1, 1], [], []>} : vector<1x32xf32>, vector<32x128xf32>, vector<1x128xf32> -> vector<1x128xf32>
    %455 = arith.addf %453, %454 : vector<1x128xf32>
    %456 = arith.addf %455, %7 : vector<1x128xf32>
    %457 = arith.negf %456 : vector<1x128xf32>
    %458 = math.exp %457 : vector<1x128xf32>
    %cst_126 = arith.constant 1.000000e+00 : f32
    %459 = vector.broadcast %cst_126 : f32 to vector<1x128xf32>
    %460 = arith.addf %459, %458 : vector<1x128xf32>
    %461 = arith.divf %459, %460 : vector<1x128xf32>
    %462 = vector.extract_strided_slice %461 {offsets = [0, 0], sizes = [1, 32], strides = [1, 1]} : vector<1x128xf32> to vector<1x32xf32>
    %463 = vector.extract_strided_slice %461 {offsets = [0, 32], sizes = [1, 32], strides = [1, 1]} : vector<1x128xf32> to vector<1x32xf32>
    %464 = vector.extract_strided_slice %461 {offsets = [0, 64], sizes = [1, 32], strides = [1, 1]} : vector<1x128xf32> to vector<1x32xf32>
    %cst_127 = arith.constant 2.000000e+00 : f32
    %465 = vector.broadcast %cst_127 : f32 to vector<1x32xf32>
    %466 = arith.mulf %465, %464 : vector<1x32xf32>
    %cst_128 = arith.constant 1.000000e+00 : f32
    %467 = vector.broadcast %cst_128 : f32 to vector<1x32xf32>
    %468 = arith.subf %466, %467 : vector<1x32xf32>
    %469 = vector.extract_strided_slice %461 {offsets = [0, 96], sizes = [1, 32], strides = [1, 1]} : vector<1x128xf32> to vector<1x32xf32>
    %470 = arith.mulf %463, %404 : vector<1x32xf32>
    %471 = arith.mulf %462, %468 : vector<1x32xf32>
    %472 = arith.addf %470, %471 : vector<1x32xf32>
    %473 = math.tanh %472 : vector<1x32xf32>
    %474 = arith.mulf %469, %473 : vector<1x32xf32>
    %cst_129 = arith.constant dense<0.000000e+00> : vector<1x128xf32>
    %475 = tpu.matmul %474, %3, %cst_129 {dimension_numbers = #tpu.dot_dimension_numbers<[1], [0], [0], [1], [0, 0, 1, 1], [], []>} : vector<1x32xf32>, vector<32x128xf32>, vector<1x128xf32> -> vector<1x128xf32>
    %476 = arith.addf %475, %8 : vector<1x128xf32>
    %cst_130 = arith.constant 0.000000e+00 : f32
    %477 = vector.broadcast %cst_130 : f32 to vector<1x128xf32>
    %478 = arith.maximumf %476, %477 : vector<1x128xf32>
    %cst_131 = arith.constant dense<0xFF800000> : vector<1xf32>
    %479 = vector.multi_reduction <maximumf>, %478, %cst_131 [1] : vector<1x128xf32> to vector<1xf32>
    %480 = vector.shape_cast %479 : vector<1xf32> to vector<1x1xf32>
    %481 = vector.broadcast %480 : vector<1x1xf32> to vector<1x128xf32>
    %482 = arith.subf %478, %481 : vector<1x128xf32>
    %483 = math.exp %482 : vector<1x128xf32>
    %484 = arith.mulf %483, %11 : vector<1x128xf32>
    %cst_132 = arith.constant dense<0.000000e+00> : vector<1xf32>
    %485 = vector.multi_reduction <add>, %484, %cst_132 [1] : vector<1x128xf32> to vector<1xf32>
    %486 = vector.shape_cast %485 : vector<1xf32> to vector<1x1xf32>
    %487 = math.log %486 : vector<1x1xf32>
    %488 = arith.addf %480, %487 : vector<1x1xf32>
    %489 = vector.broadcast %488 : vector<1x1xf32> to vector<1x128xf32>
    %490 = arith.subf %478, %489 : vector<1x128xf32>
    %c6_133 = arith.constant 6 : index
    %c0_134 = arith.constant 0 : index
    %491 = vector.load %arg5[%c6_133, %c0_134] : memref<8x128xf32, #tpu.memory_space<vmem>>, vector<1x128xf32>
    tpu.vector_store %arg5[%c6_133, %c0_134], %490 {strides = array<i32>} : memref<8x128xf32, #tpu.memory_space<vmem>>, vector<1x128xf32>,
    return
  }
  func.func @transform_0(%arg0: i32, %arg1: memref<8xi32, #tpu.memory_space<smem>>) -> (i32, i32) {
    %c0_i32 = arith.constant 0 : i32
    %c0_i32_0 = arith.constant 0 : i32
    %c0_i32_1 = arith.constant 0 : i32
    return %c0_i32, %c0_i32_0 : i32, i32
  }
  func.func @transform_1(%arg0: i32, %arg1: memref<8xi32, #tpu.memory_space<smem>>) -> (i32, i32) {
    %c0_i32 = arith.constant 0 : i32
    %c0_i32_0 = arith.constant 0 : i32
    %c0_i32_1 = arith.constant 0 : i32
    return %c0_i32, %c0_i32_0 : i32, i32
  }
  func.func @transform_2(%arg0: i32, %arg1: memref<8xi32, #tpu.memory_space<smem>>) -> (i32, i32) {
    %c0_i32 = arith.constant 0 : i32
    %c0_i32_0 = arith.constant 0 : i32
    %c0_i32_1 = arith.constant 0 : i32
    return %c0_i32, %c0_i32_0 : i32, i32
  }
  func.func @transform_3(%arg0: i32, %arg1: memref<8xi32, #tpu.memory_space<smem>>) -> (i32, i32) {
    %c0_i32 = arith.constant 0 : i32
    %c0_i32_0 = arith.constant 0 : i32
    %c0_i32_1 = arith.constant 0 : i32
    return %c0_i32, %c0_i32_0 : i32, i32
  }
}

</mosaic_0001>

<llo_original>
// kernel: decoder_forward_pallas.1
$region0: #{decoder_forward_pallas.1}
  #allocation0 [shape = 'u32[]', space=smem, size = 0x4, offset = 0x4, fixed_abs, tag = 'smem constant byte address 0x4 - core index']
  #allocation1 [shape = 'u32[144,128]{1,0:T(1,128)}', space=vmem, size = 0x12000, scoped, tag = 'internal scratch']
  #allocation2 [shape = 's32[1]{0}', space=sflag, size = 0x4, scoped, tag = 'scoped memory for decoder_forward_pallas.1']
  #allocation3 [shape = 'u8[512]{0}', space=smem, size = 0x200, scoped, tag = 'prefetched SMEM operand 0']
  %s0 = inlined_call_operand.vmem [shape: s32[8], index: 0, kind: input, shape index: {}]
  %s1 = inlined_call_operand.vmem [shape: f32[2,32], index: 1, kind: input, shape index: {}]
  %s2 = inlined_call_operand.hbm [shape: f32[160,128], index: 2, kind: input, shape index: {}]
  %s3 = inlined_call_operand.vmem [shape: f32[8,128], index: 3, kind: input, shape index: {}]
  %s4 = inlined_call_operand.hbm [shape: f32[8,128], index: 4, kind: output, shape index: {}]
  %s5 = sld [smem:[#allocation0]]
  $region26: #{decoder_forward_pallas.1} parent=0
    _
  %s7 = ssub.s32 1, %s5
  %s8 = scalar_select 0, %s7, %s5
  %s9 = sshll.u32 %s0, 4
  %s10 = int_to_ptr.vmem [resolvable:$true] %s9
  %12 = dma.vmem_to_smem %s10, 16, [#allocation3], [#allocation2]
  %13 = dma.done [#allocation2], 16
  %14 = sfence
  $region1: #{decoder_forward_pallas.1} parent=0
    #allocation4 [shape = 'u8[81920]{0}', space=vmem, size = 0x14000, scoped, tag = 'input window, operand 2, single buffered']
    #allocation5 [shape = 's32[1]{0}', space=sflag, size = 0x4, scoped, tag = 'scoped memory for decoder_forward_pallas.1']
    #allocation6 [shape = 's32[1]{0}', space=sflag, size = 0x4, scoped, tag = 'scoped memory for decoder_forward_pallas.1']
    #allocation7 [shape = 'u8[4096]{0}', space=vmem, size = 0x1000, scoped, tag = 'output window, operand 0, single buffered']
    %15 = vsyncpa [#allocation5], 0
    %16 = vsyncpa [#allocation6], 0
    // Predicated region
    $region2: #{decoder_forward_pallas.1} parent=1 // pred_check
      _
    $region3: #{decoder_forward_pallas.1} parent=1 // pred_check_branch
      %18 = sbr.rel (0) target = $region5
    $region4: #{decoder_forward_pallas.1} parent=1 // pred_region
      _
    $region5: #{decoder_forward_pallas.1} parent=1 // pred_fallthru
      _
    // Predicated region
    $region6: #{decoder_forward_pallas.1} parent=1 // pred_check
      _
    $region7: #{decoder_forward_pallas.1} parent=1 // pred_check_branch
      %20 = sbr.rel (0) target = $region9
    $region8: #{decoder_forward_pallas.1} parent=1 // pred_region
      %s22 = ssub.s32 2560, 2560
      %23 = vsyncadd [#allocation5], %s22
      %s24 = sshll.u32 [#allocation4], 4
      %s25 = int_to_ptr.vmem [resolvable:$true] %s24
      %30 = dma.hbm_to_vmem [thread:$0]  %s2, 2560, %s25, [#allocation5], 128, 128, 8
    $region9: #{decoder_forward_pallas.1} parent=1 // pred_fallthru
      _
    // Predicated region
    $region10: #{decoder_forward_pallas.1} parent=1 // pred_check
      _
    $region11: #{decoder_forward_pallas.1} parent=1 // pred_check_branch
      %32 = sbr.rel (0) target = $region13
    $region12: #{decoder_forward_pallas.1} parent=1 // pred_region
      _
    $region13: #{decoder_forward_pallas.1} parent=1 // pred_fallthru
      _
    // Predicated region
    $region14: #{decoder_forward_pallas.1} parent=1 // pred_check
      _
    $region15: #{decoder_forward_pallas.1} parent=1 // pred_check_branch
      %34 = sbr.rel (0) target = $region17
    $region16: #{decoder_forward_pallas.1} parent=1 // pred_region
      %35 = dma.done [#allocation5], 2560
    $region17: #{decoder_forward_pallas.1} parent=1 // pred_fallthru
      _
    %v36 = vld [vmem:[#allocation4] sm:$0xff]
    %v37 = vld [vmem:[#allocation4 + $0x8] sm:$0xff]
    %v38 = vld [vmem:[#allocation4 + $0x10] sm:$0xff]
    %v39 = vld [vmem:[#allocation4 + $0x18] sm:$0xff]
    %v40 = vld [vmem:[#allocation4 + $0x20] sm:$0xff]
    %v41 = vld [vmem:[#allocation4 + $0x28] sm:$0xff]
    %v42 = vld [vmem:[#allocation4 + $0x30] sm:$0xff]
    %v43 = vld [vmem:[#allocation4 + $0x38] sm:$0xff]
    %v44 = vld [vmem:[#allocation4 + $0x40] sm:$0xff]
    %v45 = vld [vmem:[#allocation4 + $0x48] sm:$0xff]
    %v46 = vld [vmem:[#allocation4 + $0x50] sm:$0xff]
    %v47 = vld [vmem:[#allocation4 + $0x58] sm:$0xff]
    %v48 = vld [vmem:[#allocation4 + $0x60] sm:$0xff]
    %v49 = vld [vmem:[#allocation4 + $0x68] sm:$0xff]
    %v50 = vld [vmem:[#allocation4 + $0x70] sm:$0xff]
    %v51 = vld [vmem:[#allocation4 + $0x78] sm:$0xff]
    %v52 = vld [vmem:[#allocation4 + $0x80] sm:$0xff]
    %v53 = vld [vmem:[#allocation4 + $0x88] sm:$0xff]
    %v54 = vld [vmem:[#allocation4 + $0x90] sm:$0xff]
    %v55 = vld [vmem:[#allocation4 + $0x98] sm:$0xff]
    %v56 = vld [vmem:[%s3] sm:$0x1]
    %v57 = vld [vmem:[%s3 + $0x1] sm:$0x1]
    %v58 = vld [vmem:[%s3 + $0x2] sm:$0x1]
    %v59 = vld [vmem:[%s3 + $0x3] sm:$0x1]
    %v60 = vld [vmem:[%s3 + $0x4] sm:$0x1]
    %v61 = vld [vmem:[%s3 + $0x5] sm:$0x1]
    %v62 = vld [vmem:[%s3 + $0x6] sm:$0x1]
    %v63 = vld [vmem:[%s1] sm:$0x1]
    %v64 = vld [vmem:[%s1 + $0x1] sm:$0x1]
    %v65 = vmul.f32 %v63, %v64
    %vm66 = vcmask 261120
    %v68 = vsel %vm66, %v65, 0
    %70 = vmatprep.subr.mxu0 0.0
    %71 = vmatpush1.msra.mxu0 %v52
    %72 = vmatprep.subr.mxu0 0.0
    %73 = vmatpush1.msra.mxu0 %v53
    %74 = vmatprep.subr.mxu0 0.0
    %75 = vmatpush1.msra.mxu0 %v54
    %76 = vmatprep.subr.mxu0 0.0
    %77 = vmatpush1.msra.mxu0 %v55
    %78 = vmatprep.subr.mxu0 0.0
    %79 = vmatpush1.msra.mxu0 0.0
    %80 = vmatprep.subr.mxu0 0.0
    %81 = vmatpush1.msra.mxu0 0.0
    %82 = vmatprep.subr.mxu0 0.0
    %83 = vmatpush1.msra.mxu0 0.0
    %84 = vmatprep.subr.mxu0 0.0
    %85 = vmatpush1.msra.mxu0 0.0
    %86 = vmatprep.subr.mxu0 0.0
    %87 = vmatpush1.msra.mxu0 0.0
    %88 = vmatprep.subr.mxu0 0.0
    %89 = vmatpush1.msra.mxu0 0.0
    %90 = vmatprep.subr.mxu0 0.0
    %91 = vmatpush1.msra.mxu0 0.0
    %92 = vmatprep.subr.mxu0 0.0
    %93 = vmatpush1.msra.mxu0 0.0
    %94 = vmatprep.subr.mxu0 0.0
    %95 = vmatpush1.msra.mxu0 0.0
    %96 = vmatprep.subr.mxu0 0.0
    %97 = vmatpush1.msra.mxu0 0.0
    %98 = vmatprep.subr.mxu0 0.0
    %99 = vmatpush1.msra.mxu0 0.0
    %100 = vmatprep.subr.mxu0 0.0
    %101 = vmatpush1.msra.mxu0 0.0
    %102 = vmatprep.subr.mxu0 0.0
    %103 = vmatpush1.msra.mxu0 0.0
    %104 = vmatprep.subr.mxu0 0.0
    %105 = vmatpush1.msra.mxu0 0.0
    %106 = vmatprep.subr.mxu0 0.0
    %107 = vmatpush1.msra.mxu0 0.0
    %108 = vmatprep.subr.mxu0 0.0
    %109 = vmatpush1.msra.mxu0 0.0
    %110 = vmatprep.subr.mxu0 0.0
    %111 = vmatpush1.msra.mxu0 0.0
    %112 = vmatprep.subr.mxu0 0.0
    %113 = vmatpush1.msra.mxu0 0.0
    %114 = vmatprep.subr.mxu0 0.0
    %115 = vmatpush1.msra.mxu0 0.0
    %116 = vmatprep.subr.mxu0 0.0
    %117 = vmatpush1.msra.mxu0 0.0
    %118 = vmatprep.subr.mxu0 0.0
    %119 = vmatpush1.msra.mxu0 0.0
    %120 = vmatprep.subr.mxu0 0.0
    %121 = vmatpush1.msra.mxu0 0.0
    %122 = vmatprep.subr.mxu0 0.0
    %123 = vmatpush1.msra.mxu0 0.0
    %124 = vmatprep.subr.mxu0 0.0
    %125 = vmatpush1.msra.mxu0 0.0
    %126 = vmatprep.subr.mxu0 0.0
    %127 = vmatpush1.msra.mxu0 0.0
    %128 = vmatprep.subr.mxu0 0.0
    %129 = vmatpush1.msra.mxu0 0.0
    %130 = vmatprep.subr.mxu0 0.0
    %131 = vmatpush1.msra.mxu0 0.0
    %132 = vmatprep.subr.mxu0 0.0
    %133 = vmatpush1.msra.mxu0 0.0
    %134 = vmatprep.mubr.f32.mxu0 0.0
    %135 = vmatmul.mubr.f32.gmra.mrb[0].mxu0 %v68
    %v136 = vpop.f32.mrb[0].mxu0
    %v137 = vadd.f32 0.0, %v136
    %v138 = vpop.f32.mrb[0].mxu0
    %139 = vdwg.mxu0
    %v140 = vadd.f32 %v137, %v60
    %s141 = sld [smem:[#allocation3]]
    %s142 = scvt.s32.f32 %s141
    %v143 = vstv %s142
    %v144 = vmul.f32 %v143, %v56
    %v145 = vadd.f32 %v144, %v57
    %v147 = vsel %vm66, %v140, 0
    %149 = vmatprep.subr.mxu0 0.0
    %150 = vmatpush1.msra.mxu0 %v36
    %151 = vmatprep.subr.mxu0 0.0
    %152 = vmatpush1.msra.mxu0 %v37
    %153 = vmatprep.subr.mxu0 0.0
    %154 = vmatpush1.msra.mxu0 %v38
    %155 = vmatprep.subr.mxu0 0.0
    %156 = vmatpush1.msra.mxu0 %v39
    %157 = vmatprep.subr.mxu0 0.0
    %158 = vmatpush1.msra.mxu0 0.0
    %159 = vmatprep.subr.mxu0 0.0
    %160 = vmatpush1.msra.mxu0 0.0
    %161 = vmatprep.subr.mxu0 0.0
    %162 = vmatpush1.msra.mxu0 0.0
    %163 = vmatprep.subr.mxu0 0.0
    %164 = vmatpush1.msra.mxu0 0.0
    %165 = vmatprep.subr.mxu0 0.0
    %166 = vmatpush1.msra.mxu0 0.0
    %167 = vmatprep.subr.mxu0 0.0
    %168 = vmatpush1.msra.mxu0 0.0
    %169 = vmatprep.subr.mxu0 0.0
    %170 = vmatpush1.msra.mxu0 0.0
    %171 = vmatprep.subr.mxu0 0.0
    %172 = vmatpush1.msra.mxu0 0.0
    %173 = vmatprep.subr.mxu0 0.0
    %174 = vmatpush1.msra.mxu0 0.0
    %175 = vmatprep.subr.mxu0 0.0
    %176 = vmatpush1.msra.mxu0 0.0
    %177 = vmatprep.subr.mxu0 0.0
    %178 = vmatpush1.msra.mxu0 0.0
    %179 = vmatprep.subr.mxu0 0.0
    %180 = vmatpush1.msra.mxu0 0.0
    %181 = vmatprep.subr.mxu0 0.0
    %182 = vmatpush1.msra.mxu0 0.0
    %183 = vmatprep.subr.mxu0 0.0
    %184 = vmatpush1.msra.mxu0 0.0
    %185 = vmatprep.subr.mxu0 0.0
    %186 = vmatpush1.msra.mxu0 0.0
    %187 = vmatprep.subr.mxu0 0.0
    %188 = vmatpush1.msra.mxu0 0.0
    %189 = vmatprep.subr.mxu0 0.0
    %190 = vmatpush1.msra.mxu0 0.0
    %191 = vmatprep.subr.mxu0 0.0
    %192 = vmatpush1.msra.mxu0 0.0
    %193 = vmatprep.subr.mxu0 0.0
    %194 = vmatpush1.msra.mxu0 0.0
    %195 = vmatprep.subr.mxu0 0.0
    %196 = vmatpush1.msra.mxu0 0.0
    %197 = vmatprep.subr.mxu0 0.0
    %198 = vmatpush1.msra.mxu0 0.0
    %199 = vmatprep.subr.mxu0 0.0
    %200 = vmatpush1.msra.mxu0 0.0
    %201 = vmatprep.subr.mxu0 0.0
    %202 = vmatpush1.msra.mxu0 0.0
    %203 = vmatprep.subr.mxu0 0.0
    %204 = vmatpush1.msra.mxu0 0.0
    %205 = vmatprep.subr.mxu0 0.0
    %206 = vmatpush1.msra.mxu0 0.0
    %207 = vmatprep.subr.mxu0 0.0
    %208 = vmatpush1.msra.mxu0 0.0
    %209 = vmatprep.subr.mxu0 0.0
    %210 = vmatpush1.msra.mxu0 0.0
    %211 = vmatprep.subr.mxu0 0.0
    %212 = vmatpush1.msra.mxu0 0.0
    %213 = vmatprep.mubr.f32.mxu0 0.0
    %214 = vmatmul.mubr.f32.gmra.mrb[0].mxu0 %v147
    %v215 = vpop.f32.mrb[0].mxu0
    %v216 = vadd.f32 0.0, %v215
    %v217 = vpop.f32.mrb[0].mxu0
    %218 = vdwg.mxu0
    %v219 = vadd.f32 %v145, %v216
    %v220 = vxor.u32 %v219, 2147483648
    %v221 = vmul.f32 %v220, 1.442695
    %v222 = vpow.pop %v221
    %v223 = vadd.f32 %v222, 1.0
    %v224 = vrcp.pop %v223
    %v225 = vmul.f32 1.0, %v224
    %v226 = vmul.f32 %v225, 2.0
    %v227 = vsub.f32 %v226, 1.0
    %228 = vrot.lane.b32.xlu0 %v140, 32
    %v229 = vpop.permute.xlu0 %228
    %v231 = vmul.f32 %v225, %v229
    %233 = vrot.lane.b32.xlu0 %v227, 64
    %v234 = vpop.permute.xlu0 %233
    %v236 = vmul.f32 %v225, %v234
    %238 = vrot.lane.b32.xlu0 %v236, 32
    %v239 = vpop.permute.xlu0 %238
    %v241 = vadd.f32 %v231, %v239
    %v242 = vtanh.pop %v241
    %244 = vrot.lane.b32.xlu0 %v242, 64
    %v245 = vpop.permute.xlu0 %244
    %v247 = vmul.f32 %v225, %v245
    %249 = vrot.lane.b32.xlu0 %v247, 32
    %v250 = vpop.permute.xlu0 %249
    %v251 = vsel %vm66, %v250, 0
    %253 = vmatprep.subr.mxu0 0.0
    %254 = vmatpush1.msra.mxu0 %v44
    %255 = vmatprep.subr.mxu0 0.0
    %256 = vmatpush1.msra.mxu0 %v45
    %257 = vmatprep.subr.mxu0 0.0
    %258 = vmatpush1.msra.mxu0 %v46
    %259 = vmatprep.subr.mxu0 0.0
    %260 = vmatpush1.msra.mxu0 %v47
    %261 = vmatprep.subr.mxu0 0.0
    %262 = vmatpush1.msra.mxu0 0.0
    %263 = vmatprep.subr.mxu0 0.0
    %264 = vmatpush1.msra.mxu0 0.0
    %265 = vmatprep.subr.mxu0 0.0
    %266 = vmatpush1.msra.mxu0 0.0
    %267 = vmatprep.subr.mxu0 0.0
    %268 = vmatpush1.msra.mxu0 0.0
    %269 = vmatprep.subr.mxu0 0.0
    %270 = vmatpush1.msra.mxu0 0.0
    %271 = vmatprep.subr.mxu0 0.0
    %272 = vmatpush1.msra.mxu0 0.0
    %273 = vmatprep.subr.mxu0 0.0
    %274 = vmatpush1.msra.mxu0 0.0
    %275 = vmatprep.subr.mxu0 0.0
    %276 = vmatpush1.msra.mxu0 0.0
    %277 = vmatprep.subr.mxu0 0.0
    %278 = vmatpush1.msra.mxu0 0.0
    %279 = vmatprep.subr.mxu0 0.0
    %280 = vmatpush1.msra.mxu0 0.0
    %281 = vmatprep.subr.mxu0 0.0
    %282 = vmatpush1.msra.mxu0 0.0
    %283 = vmatprep.subr.mxu0 0.0
    %284 = vmatpush1.msra.mxu0 0.0
    %285 = vmatprep.subr.mxu0 0.0
    %286 = vmatpush1.msra.mxu0 0.0
    %287 = vmatprep.subr.mxu0 0.0
    %288 = vmatpush1.msra.mxu0 0.0
    %289 = vmatprep.subr.mxu0 0.0
    %290 = vmatpush1.msra.mxu0 0.0
    %291 = vmatprep.subr.mxu0 0.0
    %292 = vmatpush1.msra.mxu0 0.0
    %293 = vmatprep.subr.mxu0 0.0
    %294 = vmatpush1.msra.mxu0 0.0
    %295 = vmatprep.subr.mxu0 0.0
    %296 = vmatpush1.msra.mxu0 0.0
    %297 = vmatprep.subr.mxu0 0.0
    %298 = vmatpush1.msra.mxu0 0.0
    %299 = vmatprep.subr.mxu0 0.0
    %300 = vmatpush1.msra.mxu0 0.0
    %301 = vmatprep.subr.mxu0 0.0
    %302 = vmatpush1.msra.mxu0 0.0
    %303 = vmatprep.subr.mxu0 0.0
    %304 = vmatpush1.msra.mxu0 0.0
    %305 = vmatprep.subr.mxu0 0.0
    %306 = vmatpush1.msra.mxu0 0.0
    %307 = vmatprep.subr.mxu0 0.0
    %308 = vmatpush1.msra.mxu0 0.0
    %309 = vmatprep.subr.mxu0 0.0
    %310 = vmatpush1.msra.mxu0 0.0
    %311 = vmatprep.subr.mxu0 0.0
    %312 = vmatpush1.msra.mxu0 0.0
    %313 = vmatprep.subr.mxu0 0.0
    %314 = vmatpush1.msra.mxu0 0.0
    %315 = vmatprep.subr.mxu0 0.0
    %316 = vmatpush1.msra.mxu0 0.0
    %317 = vmatprep.mubr.f32.mxu0 0.0
    %318 = vmatmul.mubr.f32.gmra.mrb[0].mxu0 %v251
    %v319 = vpop.f32.mrb[0].mxu0
    %v320 = vadd.f32 0.0, %v319
    %v321 = vpop.f32.mrb[0].mxu0
    %322 = vdwg.mxu0
    %323 = vmatprep.subr.mxu0 0.0
    %324 = vmatpush1.msra.mxu0 %v40
    %325 = vmatprep.subr.mxu0 0.0
    %326 = vmatpush1.msra.mxu0 %v41
    %327 = vmatprep.subr.mxu0 0.0
    %328 = vmatpush1.msra.mxu0 %v42
    %329 = vmatprep.subr.mxu0 0.0
    %330 = vmatpush1.msra.mxu0 %v43
    %331 = vmatprep.subr.mxu0 0.0
    %332 = vmatpush1.msra.mxu0 0.0
    %333 = vmatprep.subr.mxu0 0.0
    %334 = vmatpush1.msra.mxu0 0.0
    %335 = vmatprep.subr.mxu0 0.0
    %336 = vmatpush1.msra.mxu0 0.0
    %337 = vmatprep.subr.mxu0 0.0
    %338 = vmatpush1.msra.mxu0 0.0
    %339 = vmatprep.subr.mxu0 0.0
    %340 = vmatpush1.msra.mxu0 0.0
    %341 = vmatprep.subr.mxu0 0.0
    %342 = vmatpush1.msra.mxu0 0.0
    %343 = vmatprep.subr.mxu0 0.0
    %344 = vmatpush1.msra.mxu0 0.0
    %345 = vmatprep.subr.mxu0 0.0
    %346 = vmatpush1.msra.mxu0 0.0
    %347 = vmatprep.subr.mxu0 0.0
    %348 = vmatpush1.msra.mxu0 0.0
    %349 = vmatprep.subr.mxu0 0.0
    %350 = vmatpush1.msra.mxu0 0.0
    %351 = vmatprep.subr.mxu0 0.0
    %352 = vmatpush1.msra.mxu0 0.0
    %353 = vmatprep.subr.mxu0 0.0
    %354 = vmatpush1.msra.mxu0 0.0
    %355 = vmatprep.subr.mxu0 0.0
    %356 = vmatpush1.msra.mxu0 0.0
    %357 = vmatprep.subr.mxu0 0.0
    %358 = vmatpush1.msra.mxu0 0.0
    %359 = vmatprep.subr.mxu0 0.0
    %360 = vmatpush1.msra.mxu0 0.0
    %361 = vmatprep.subr.mxu0 0.0
    %362 = vmatpush1.msra.mxu0 0.0
    %363 = vmatprep.subr.mxu0 0.0
    %364 = vmatpush1.msra.mxu0 0.0
    %365 = vmatprep.subr.mxu0 0.0
    %366 = vmatpush1.msra.mxu0 0.0
    %367 = vmatprep.subr.mxu0 0.0
    %368 = vmatpush1.msra.mxu0 0.0
    %369 = vmatprep.subr.mxu0 0.0
    %370 = vmatpush1.msra.mxu0 0.0
    %371 = vmatprep.subr.mxu0 0.0
    %372 = vmatpush1.msra.mxu0 0.0
    %373 = vmatprep.subr.mxu0 0.0
    %374 = vmatpush1.msra.mxu0 0.0
    %375 = vmatprep.subr.mxu0 0.0
    %376 = vmatpush1.msra.mxu0 0.0
    %377 = vmatprep.subr.mxu0 0.0
    %378 = vmatpush1.msra.mxu0 0.0
    %379 = vmatprep.subr.mxu0 0.0
    %380 = vmatpush1.msra.mxu0 0.0
    %381 = vmatprep.subr.mxu0 0.0
    %382 = vmatpush1.msra.mxu0 0.0
    %383 = vmatprep.subr.mxu0 0.0
    %384 = vmatpush1.msra.mxu0 0.0
    %385 = vmatprep.subr.mxu0 0.0
    %386 = vmatpush1.msra.mxu0 0.0
    %387 = vmatprep.mubr.f32.mxu0 0.0
    %388 = vmatmul.mubr.f32.gmra.mrb[0].mxu0 %v147
    %v389 = vpop.f32.mrb[0].mxu0
    %v390 = vadd.f32 %v320, %v389
    %v391 = vpop.f32.mrb[0].mxu0
    %392 = vdwg.mxu0
    %v393 = vadd.f32 %v390, %v58
    %v394 = vxor.u32 %v393, 2147483648
    %v395 = vmul.f32 %v394, 1.442695
    %v396 = vpow.pop %v395
    %v397 = vadd.f32 %v396, 1.0
    %v398 = vrcp.pop %v397
    %v399 = vmul.f32 1.0, %v398
    %v400 = vmul.f32 %v399, 2.0
    %v401 = vsub.f32 %v400, 1.0
    %v402 = vmul.f32 %v399, %v229
    %404 = vrot.lane.b32.xlu0 %v401, 64
    %v405 = vpop.permute.xlu0 %404
    %v407 = vmul.f32 %v399, %v405
    %409 = vrot.lane.b32.xlu0 %v407, 32
    %v410 = vpop.permute.xlu0 %409
    %v412 = vadd.f32 %v402, %v410
    %v413 = vtanh.pop %v412
    %415 = vrot.lane.b32.xlu0 %v413, 64
    %v416 = vpop.permute.xlu0 %415
    %v418 = vmul.f32 %v399, %v416
    %420 = vrot.lane.b32.xlu0 %v418, 32
    %v421 = vpop.permute.xlu0 %420
    %v422 = vsel %vm66, %v421, 0
    %424 = vmatprep.subr.mxu0 0.0
    %425 = vmatpush1.msra.mxu0 %v48
    %426 = vmatprep.subr.mxu0 0.0
    %427 = vmatpush1.msra.mxu0 %v49
    %428 = vmatprep.subr.mxu0 0.0
    %429 = vmatpush1.msra.mxu0 %v50
    %430 = vmatprep.subr.mxu0 0.0
    %431 = vmatpush1.msra.mxu0 %v51
    %432 = vmatprep.subr.mxu0 0.0
    %433 = vmatpush1.msra.mxu0 0.0
    %434 = vmatprep.subr.mxu0 0.0
    %435 = vmatpush1.msra.mxu0 0.0
    %436 = vmatprep.subr.mxu0 0.0
    %437 = vmatpush1.msra.mxu0 0.0
    %438 = vmatprep.subr.mxu0 0.0
    %439 = vmatpush1.msra.mxu0 0.0
    %440 = vmatprep.subr.mxu0 0.0
    %441 = vmatpush1.msra.mxu0 0.0
    %442 = vmatprep.subr.mxu0 0.0
    %443 = vmatpush1.msra.mxu0 0.0
    %444 = vmatprep.subr.mxu0 0.0
    %445 = vmatpush1.msra.mxu0 0.0
    %446 = vmatprep.subr.mxu0 0.0
    %447 = vmatpush1.msra.mxu0 0.0
    %448 = vmatprep.subr.mxu0 0.0
    %449 = vmatpush1.msra.mxu0 0.0
    %450 = vmatprep.subr.mxu0 0.0
    %451 = vmatpush1.msra.mxu0 0.0
    %452 = vmatprep.subr.mxu0 0.0
    %453 = vmatpush1.msra.mxu0 0.0
    %454 = vmatprep.subr.mxu0 0.0
    %455 = vmatpush1.msra.mxu0 0.0
    %456 = vmatprep.subr.mxu0 0.0
    %457 = vmatpush1.msra.mxu0 0.0
    %458 = vmatprep.subr.mxu0 0.0
    %459 = vmatpush1.msra.mxu0 0.0
    %460 = vmatprep.subr.mxu0 0.0
    %461 = vmatpush1.msra.mxu0 0.0
    %462 = vmatprep.subr.mxu0 0.0
    %463 = vmatpush1.msra.mxu0 0.0
    %464 = vmatprep.subr.mxu0 0.0
    %465 = vmatpush1.msra.mxu0 0.0
    %466 = vmatprep.subr.mxu0 0.0
    %467 = vmatpush1.msra.mxu0 0.0
    %468 = vmatprep.subr.mxu0 0.0
    %469 = vmatpush1.msra.mxu0 0.0
    %470 = vmatprep.subr.mxu0 0.0
    %471 = vmatpush1.msra.mxu0 0.0
    %472 = vmatprep.subr.mxu0 0.0
    %473 = vmatpush1.msra.mxu0 0.0
    %474 = vmatprep.subr.mxu0 0.0
    %475 = vmatpush1.msra.mxu0 0.0
    %476 = vmatprep.subr.mxu0 0.0
    %477 = vmatpush1.msra.mxu0 0.0
    %478 = vmatprep.subr.mxu0 0.0
    %479 = vmatpush1.msra.mxu0 0.0
    %480 = vmatprep.subr.mxu0 0.0
    %481 = vmatpush1.msra.mxu0 0.0
    %482 = vmatprep.subr.mxu0 0.0
    %483 = vmatpush1.msra.mxu0 0.0
    %484 = vmatprep.subr.mxu0 0.0
    %485 = vmatpush1.msra.mxu0 0.0
    %486 = vmatprep.subr.mxu0 0.0
    %487 = vmatpush1.msra.mxu0 0.0
    %488 = vmatprep.mubr.f32.mxu0 0.0
    %489 = vmatmul.mubr.f32.gmra.mrb[0].mxu0 %v422
    %v490 = vpop.f32.mrb[0].mxu0
    %v491 = vadd.f32 %v59, %v490
    %v492 = vpop.f32.mrb[0].mxu0
    %493 = vdwg.mxu0
    %v494 = vmax.f32 %v491, 0.0
    %vm495 = vcmask 1040384
    %v496 = vsel %vm495, %v494, -inf
    %497 = vmax.xlane.f32.xlu0 %v496
    %v498 = vpop.xlane.xlu0 %497
    %vm499 = vcmp.ge.f32.partialorder %v494, %v498
    %v500 = vsel %vm499, %v62, 128.0
    %v501 = vsel %vm495, %v500, inf
    %502 = vmin.xlane.f32.xlu0 %v501
    %v503 = vpop.xlane.xlu0 %502
    %v504 = vsub.f32 %v494, %v498
    %v505 = vmul.f32 %v504, 1.442695
    %v506 = vpow.pop %v505
    %v507 = vmul.f32 %v506, %v61
    %v508 = vsel %vm495, %v507, 0.0
    %509 = vadd.xlane.f32.xlu0 %v508
    %v510 = vpop.xlane.xlu0 %509
    %v511 = vlog2.pop %v510
    %v512 = vmul.f32 %v511, 0.6931472
    %v513 = vadd.f32 %v498, %v512
    %v514 = vsub.f32 %v494, %v513
    %515 = vst [vmem:[#allocation7] sm:$0x1] %v514
    %v516 = vmul.f32 %v503, %v56
    %v517 = vadd.f32 %v516, %v57
    %518 = vmatprep.subr.mxu0 0.0
    %519 = vmatpush1.msra.mxu0 %v36
    %520 = vmatprep.subr.mxu0 0.0
    %521 = vmatpush1.msra.mxu0 %v37
    %522 = vmatprep.subr.mxu0 0.0
    %523 = vmatpush1.msra.mxu0 %v38
    %524 = vmatprep.subr.mxu0 0.0
    %525 = vmatpush1.msra.mxu0 %v39
    %526 = vmatprep.subr.mxu0 0.0
    %527 = vmatpush1.msra.mxu0 0.0
    %528 = vmatprep.subr.mxu0 0.0
    %529 = vmatpush1.msra.mxu0 0.0
    %530 = vmatprep.subr.mxu0 0.0
    %531 = vmatpush1.msra.mxu0 0.0
    %532 = vmatprep.subr.mxu0 0.0
    %533 = vmatpush1.msra.mxu0 0.0
    %534 = vmatprep.subr.mxu0 0.0
    %535 = vmatpush1.msra.mxu0 0.0
    %536 = vmatprep.subr.mxu0 0.0
    %537 = vmatpush1.msra.mxu0 0.0
    %538 = vmatprep.subr.mxu0 0.0
    %539 = vmatpush1.msra.mxu0 0.0
    %540 = vmatprep.subr.mxu0 0.0
    %541 = vmatpush1.msra.mxu0 0.0
    %542 = vmatprep.subr.mxu0 0.0
    %543 = vmatpush1.msra.mxu0 0.0
    %544 = vmatprep.subr.mxu0 0.0
    %545 = vmatpush1.msra.mxu0 0.0
    %546 = vmatprep.subr.mxu0 0.0
    %547 = vmatpush1.msra.mxu0 0.0
    %548 = vmatprep.subr.mxu0 0.0
    %549 = vmatpush1.msra.mxu0 0.0
    %550 = vmatprep.subr.mxu0 0.0
    %551 = vmatpush1.msra.mxu0 0.0
    %552 = vmatprep.subr.mxu0 0.0
    %553 = vmatpush1.msra.mxu0 0.0
    %554 = vmatprep.subr.mxu0 0.0
    %555 = vmatpush1.msra.mxu0 0.0
    %556 = vmatprep.subr.mxu0 0.0
    %557 = vmatpush1.msra.mxu0 0.0
    %558 = vmatprep.subr.mxu0 0.0
    %559 = vmatpush1.msra.mxu0 0.0
    %560 = vmatprep.subr.mxu0 0.0
    %561 = vmatpush1.msra.mxu0 0.0
    %562 = vmatprep.subr.mxu0 0.0
    %563 = vmatpush1.msra.mxu0 0.0
    %564 = vmatprep.subr.mxu0 0.0
    %565 = vmatpush1.msra.mxu0 0.0
    %566 = vmatprep.subr.mxu0 0.0
    %567 = vmatpush1.msra.mxu0 0.0
    %568 = vmatprep.subr.mxu0 0.0
    %569 = vmatpush1.msra.mxu0 0.0
    %570 = vmatprep.subr.mxu0 0.0
    %571 = vmatpush1.msra.mxu0 0.0
    %572 = vmatprep.subr.mxu0 0.0
    %573 = vmatpush1.msra.mxu0 0.0
    %574 = vmatprep.subr.mxu0 0.0
    %575 = vmatpush1.msra.mxu0 0.0
    %576 = vmatprep.subr.mxu0 0.0
    %577 = vmatpush1.msra.mxu0 0.0
    %578 = vmatprep.subr.mxu0 0.0
    %579 = vmatpush1.msra.mxu0 0.0
    %580 = vmatprep.subr.mxu0 0.0
    %581 = vmatpush1.msra.mxu0 0.0
    %582 = vmatprep.mubr.f32.mxu0 0.0
    %583 = vmatmul.mubr.f32.gmra.mrb[0].mxu0 %v251
    %v584 = vpop.f32.mrb[0].mxu0
    %v585 = vadd.f32 0.0, %v584
    %v586 = vpop.f32.mrb[0].mxu0
    %587 = vdwg.mxu0
    %v588 = vadd.f32 %v517, %v585
    %v589 = vxor.u32 %v588, 2147483648
    %v590 = vmul.f32 %v589, 1.442695
    %v591 = vpow.pop %v590
    %v592 = vadd.f32 %v591, 1.0
    %v593 = vrcp.pop %v592
    %v594 = vmul.f32 1.0, %v593
    %v595 = vmul.f32 %v594, 2.0
    %v596 = vsub.f32 %v595, 1.0
    %v597 = vmul.f32 %v594, %v241
    %599 = vrot.lane.b32.xlu0 %v596, 64
    %v600 = vpop.permute.xlu0 %599
    %v602 = vmul.f32 %v594, %v600
    %604 = vrot.lane.b32.xlu0 %v602, 32
    %v605 = vpop.permute.xlu0 %604
    %v607 = vadd.f32 %v597, %v605
    %v608 = vtanh.pop %v607
    %610 = vrot.lane.b32.xlu0 %v608, 64
    %v611 = vpop.permute.xlu0 %610
    %v613 = vmul.f32 %v594, %v611
    %615 = vrot.lane.b32.xlu0 %v613, 32
    %v616 = vpop.permute.xlu0 %615
    %v617 = vsel %vm66, %v616, 0
    %619 = vmatprep.subr.mxu0 0.0
    %620 = vmatpush1.msra.mxu0 %v44
    %621 = vmatprep.subr.mxu0 0.0
    %622 = vmatpush1.msra.mxu0 %v45
    %623 = vmatprep.subr.mxu0 0.0
    %624 = vmatpush1.msra.mxu0 %v46
    %625 = vmatprep.subr.mxu0 0.0
    %626 = vmatpush1.msra.mxu0 %v47
    %627 = vmatprep.subr.mxu0 0.0
    %628 = vmatpush1.msra.mxu0 0.0
    %629 = vmatprep.subr.mxu0 0.0
    %630 = vmatpush1.msra.mxu0 0.0
    %631 = vmatprep.subr.mxu0 0.0
    %632 = vmatpush1.msra.mxu0 0.0
    %633 = vmatprep.subr.mxu0 0.0
    %634 = vmatpush1.msra.mxu0 0.0
    %635 = vmatprep.subr.mxu0 0.0
    %636 = vmatpush1.msra.mxu0 0.0
    %637 = vmatprep.subr.mxu0 0.0
    %638 = vmatpush1.msra.mxu0 0.0
    %639 = vmatprep.subr.mxu0 0.0
    %640 = vmatpush1.msra.mxu0 0.0
    %641 = vmatprep.subr.mxu0 0.0
    %642 = vmatpush1.msra.mxu0 0.0
    %643 = vmatprep.subr.mxu0 0.0
    %644 = vmatpush1.msra.mxu0 0.0
    %645 = vmatprep.subr.mxu0 0.0
    %646 = vmatpush1.msra.mxu0 0.0
    %647 = vmatprep.subr.mxu0 0.0
    %648 = vmatpush1.msra.mxu0 0.0
    %649 = vmatprep.subr.mxu0 0.0
    %650 = vmatpush1.msra.mxu0 0.0
    %651 = vmatprep.subr.mxu0 0.0
    %652 = vmatpush1.msra.mxu0 0.0
    %653 = vmatprep.subr.mxu0 0.0
    %654 = vmatpush1.msra.mxu0 0.0
    %655 = vmatprep.subr.mxu0 0.0
    %656 = vmatpush1.msra.mxu0 0.0
    %657 = vmatprep.subr.mxu0 0.0
    %658 = vmatpush1.msra.mxu0 0.0
    %659 = vmatprep.subr.mxu0 0.0
    %660 = vmatpush1.msra.mxu0 0.0
    %661 = vmatprep.subr.mxu0 0.0
    %662 = vmatpush1.msra.mxu0 0.0
    %663 = vmatprep.subr.mxu0 0.0
    %664 = vmatpush1.msra.mxu0 0.0
    %665 = vmatprep.subr.mxu0 0.0
    %666 = vmatpush1.msra.mxu0 0.0
    %667 = vmatprep.subr.mxu0 0.0
    %668 = vmatpush1.msra.mxu0 0.0
    %669 = vmatprep.subr.mxu0 0.0
    %670 = vmatpush1.msra.mxu0 0.0
    %671 = vmatprep.subr.mxu0 0.0
    %672 = vmatpush1.msra.mxu0 0.0
    %673 = vmatprep.subr.mxu0 0.0
    %674 = vmatpush1.msra.mxu0 0.0
    %675 = vmatprep.subr.mxu0 0.0
    %676 = vmatpush1.msra.mxu0 0.0
    %677 = vmatprep.subr.mxu0 0.0
    %678 = vmatpush1.msra.mxu0 0.0
    %679 = vmatprep.subr.mxu0 0.0
    %680 = vmatpush1.msra.mxu0 0.0
    %681 = vmatprep.subr.mxu0 0.0
    %682 = vmatpush1.msra.mxu0 0.0
    %683 = vmatprep.mubr.f32.mxu0 0.0
    %684 = vmatmul.mubr.f32.gmra.mrb[0].mxu0 %v617
    %v685 = vpop.f32.mrb[0].mxu0
    %v686 = vadd.f32 0.0, %v685
    %v687 = vpop.f32.mrb[0].mxu0
    %688 = vdwg.mxu0
    %689 = vmatprep.subr.mxu0 0.0
    %690 = vmatpush1.msra.mxu0 %v40
    %691 = vmatprep.subr.mxu0 0.0
    %692 = vmatpush1.msra.mxu0 %v41
    %693 = vmatprep.subr.mxu0 0.0
    %694 = vmatpush1.msra.mxu0 %v42
    %695 = vmatprep.subr.mxu0 0.0
    %696 = vmatpush1.msra.mxu0 %v43
    %697 = vmatprep.subr.mxu0 0.0
    %698 = vmatpush1.msra.mxu0 0.0
    %699 = vmatprep.subr.mxu0 0.0
    %700 = vmatpush1.msra.mxu0 0.0
    %701 = vmatprep.subr.mxu0 0.0
    %702 = vmatpush1.msra.mxu0 0.0
    %703 = vmatprep.subr.mxu0 0.0
    %704 = vmatpush1.msra.mxu0 0.0
    %705 = vmatprep.subr.mxu0 0.0
    %706 = vmatpush1.msra.mxu0 0.0
    %707 = vmatprep.subr.mxu0 0.0
    %708 = vmatpush1.msra.mxu0 0.0
    %709 = vmatprep.subr.mxu0 0.0
    %710 = vmatpush1.msra.mxu0 0.0
    %711 = vmatprep.subr.mxu0 0.0
    %712 = vmatpush1.msra.mxu0 0.0
    %713 = vmatprep.subr.mxu0 0.0
    %714 = vmatpush1.msra.mxu0 0.0
    %715 = vmatprep.subr.mxu0 0.0
    %716 = vmatpush1.msra.mxu0 0.0
    %717 = vmatprep.subr.mxu0 0.0
    %718 = vmatpush1.msra.mxu0 0.0
    %719 = vmatprep.subr.mxu0 0.0
    %720 = vmatpush1.msra.mxu0 0.0
    %721 = vmatprep.subr.mxu0 0.0
    %722 = vmatpush1.msra.mxu0 0.0
    %723 = vmatprep.subr.mxu0 0.0
    %724 = vmatpush1.msra.mxu0 0.0
    %725 = vmatprep.subr.mxu0 0.0
    %726 = vmatpush1.msra.mxu0 0.0
    %727 = vmatprep.subr.mxu0 0.0
    %728 = vmatpush1.msra.mxu0 0.0
    %729 = vmatprep.subr.mxu0 0.0
    %730 = vmatpush1.msra.mxu0 0.0
    %731 = vmatprep.subr.mxu0 0.0
    %732 = vmatpush1.msra.mxu0 0.0
    %733 = vmatprep.subr.mxu0 0.0
    %734 = vmatpush1.msra.mxu0 0.0
    %735 = vmatprep.subr.mxu0 0.0
    %736 = vmatpush1.msra.mxu0 0.0
    %737 = vmatprep.subr.mxu0 0.0
    %738 = vmatpush1.msra.mxu0 0.0
    %739 = vmatprep.subr.mxu0 0.0
    %740 = vmatpush1.msra.mxu0 0.0
    %741 = vmatprep.subr.mxu0 0.0
    %742 = vmatpush1.msra.mxu0 0.0
    %743 = vmatprep.subr.mxu0 0.0
    %744 = vmatpush1.msra.mxu0 0.0
    %745 = vmatprep.subr.mxu0 0.0
    %746 = vmatpush1.msra.mxu0 0.0
    %747 = vmatprep.subr.mxu0 0.0
    %748 = vmatpush1.msra.mxu0 0.0
    %749 = vmatprep.subr.mxu0 0.0
    %750 = vmatpush1.msra.mxu0 0.0
    %751 = vmatprep.subr.mxu0 0.0
    %752 = vmatpush1.msra.mxu0 0.0
    %753 = vmatprep.mubr.f32.mxu0 0.0
    %754 = vmatmul.mubr.f32.gmra.mrb[0].mxu0 %v422
    %v755 = vpop.f32.mrb[0].mxu0
    %v756 = vadd.f32 %v686, %v755
    %v757 = vpop.f32.mrb[0].mxu0
    %758 = vdwg.mxu0
    %v759 = vadd.f32 %v756, %v58
    %v760 = vxor.u32 %v759, 2147483648
    %v761 = vmul.f32 %v760, 1.442695
    %v762 = vpow.pop %v761
    %v763 = vadd.f32 %v762, 1.0
    %v764 = vrcp.pop %v763
    %v765 = vmul.f32 1.0, %v764
    %v766 = vmul.f32 %v765, 2.0
    %v767 = vsub.f32 %v766, 1.0
    %v768 = vmul.f32 %v765, %v412
    %770 = vrot.lane.b32.xlu0 %v767, 64
    %v771 = vpop.permute.xlu0 %770
    %v773 = vmul.f32 %v765, %v771
    %775 = vrot.lane.b32.xlu0 %v773, 32
    %v776 = vpop.permute.xlu0 %775
    %v778 = vadd.f32 %v768, %v776
    %v779 = vtanh.pop %v778
    %781 = vrot.lane.b32.xlu0 %v779, 64
    %v782 = vpop.permute.xlu0 %781
    %v784 = vmul.f32 %v765, %v782
    %786 = vrot.lane.b32.xlu0 %v784, 32
    %v787 = vpop.permute.xlu0 %786
    %v788 = vsel %vm66, %v787, 0
    %790 = vmatprep.subr.mxu0 0.0
    %791 = vmatpush1.msra.mxu0 %v48
    %792 = vmatprep.subr.mxu0 0.0
    %793 = vmatpush1.msra.mxu0 %v49
    %794 = vmatprep.subr.mxu0 0.0
    %795 = vmatpush1.msra.mxu0 %v50
    %796 = vmatprep.subr.mxu0 0.0
    %797 = vmatpush1.msra.mxu0 %v51
    %798 = vmatprep.subr.mxu0 0.0
    %799 = vmatpush1.msra.mxu0 0.0
    %800 = vmatprep.subr.mxu0 0.0
    %801 = vmatpush1.msra.mxu0 0.0
    %802 = vmatprep.subr.mxu0 0.0
    %803 = vmatpush1.msra.mxu0 0.0
    %804 = vmatprep.subr.mxu0 0.0
    %805 = vmatpush1.msra.mxu0 0.0
    %806 = vmatprep.subr.mxu0 0.0
    %807 = vmatpush1.msra.mxu0 0.0
    %808 = vmatprep.subr.mxu0 0.0
    %809 = vmatpush1.msra.mxu0 0.0
    %810 = vmatprep.subr.mxu0 0.0
    %811 = vmatpush1.msra.mxu0 0.0
    %812 = vmatprep.subr.mxu0 0.0
    %813 = vmatpush1.msra.mxu0 0.0
    %814 = vmatprep.subr.mxu0 0.0
    %815 = vmatpush1.msra.mxu0 0.0
    %816 = vmatprep.subr.mxu0 0.0
    %817 = vmatpush1.msra.mxu0 0.0
    %818 = vmatprep.subr.mxu0 0.0
    %819 = vmatpush1.msra.mxu0 0.0
    %820 = vmatprep.subr.mxu0 0.0
    %821 = vmatpush1.msra.mxu0 0.0
    %822 = vmatprep.subr.mxu0 0.0
    %823 = vmatpush1.msra.mxu0 0.0
    %824 = vmatprep.subr.mxu0 0.0
    %825 = vmatpush1.msra.mxu0 0.0
    %826 = vmatprep.subr.mxu0 0.0
    %827 = vmatpush1.msra.mxu0 0.0
    %828 = vmatprep.subr.mxu0 0.0
    %829 = vmatpush1.msra.mxu0 0.0
    %830 = vmatprep.subr.mxu0 0.0
    %831 = vmatpush1.msra.mxu0 0.0
    %832 = vmatprep.subr.mxu0 0.0
    %833 = vmatpush1.msra.mxu0 0.0
    %834 = vmatprep.subr.mxu0 0.0
    %835 = vmatpush1.msra.mxu0 0.0
    %836 = vmatprep.subr.mxu0 0.0
    %837 = vmatpush1.msra.mxu0 0.0
    %838 = vmatprep.subr.mxu0 0.0
    %839 = vmatpush1.msra.mxu0 0.0
    %840 = vmatprep.subr.mxu0 0.0
    %841 = vmatpush1.msra.mxu0 0.0
    %842 = vmatprep.subr.mxu0 0.0
    %843 = vmatpush1.msra.mxu0 0.0
    %844 = vmatprep.subr.mxu0 0.0
    %845 = vmatpush1.msra.mxu0 0.0
    %846 = vmatprep.subr.mxu0 0.0
    %847 = vmatpush1.msra.mxu0 0.0
    %848 = vmatprep.subr.mxu0 0.0
    %849 = vmatpush1.msra.mxu0 0.0
    %850 = vmatprep.subr.mxu0 0.0
    %851 = vmatpush1.msra.mxu0 0.0
    %852 = vmatprep.subr.mxu0 0.0
    %853 = vmatpush1.msra.mxu0 0.0
    %854 = vmatprep.mubr.f32.mxu0 0.0
    %855 = vmatmul.mubr.f32.gmra.mrb[0].mxu0 %v788
    %v856 = vpop.f32.mrb[0].mxu0
    %v857 = vadd.f32 %v59, %v856
    %v858 = vpop.f32.mrb[0].mxu0
    %859 = vdwg.mxu0
    %v860 = vmax.f32 %v857, 0.0
    %v861 = vsel %vm495, %v860, -inf
    %862 = vmax.xlane.f32.xlu0 %v861
    %v863 = vpop.xlane.xlu0 %862
    %vm864 = vcmp.ge.f32.partialorder %v860, %v863
    %v865 = vsel %vm864, %v62, 128.0
    %v866 = vsel %vm495, %v865, inf
    %867 = vmin.xlane.f32.xlu0 %v866
    %v868 = vpop.xlane.xlu0 %867
    %v869 = vsub.f32 %v860, %v863
    %v870 = vmul.f32 %v869, 1.442695
    %v871 = vpow.pop %v870
    %v872 = vmul.f32 %v871, %v61
    %v873 = vsel %vm495, %v872, 0.0
    %874 = vadd.xlane.f32.xlu0 %v873
    %v875 = vpop.xlane.xlu0 %874
    %v876 = vlog2.pop %v875
    %v877 = vmul.f32 %v876, 0.6931472
    %v878 = vadd.f32 %v863, %v877
    %v879 = vsub.f32 %v860, %v878
    %880 = vst [vmem:[#allocation7 + $0x1] sm:$0x1] %v879
    %v881 = vmul.f32 %v868, %v56
    %v882 = vadd.f32 %v881, %v57
    %883 = vmatprep.subr.mxu0 0.0
    %884 = vmatpush1.msra.mxu0 %v36
    %885 = vmatprep.subr.mxu0 0.0
    %886 = vmatpush1.msra.mxu0 %v37
    %887 = vmatprep.subr.mxu0 0.0
    %888 = vmatpush1.msra.mxu0 %v38
    %889 = vmatprep.subr.mxu0 0.0
    %890 = vmatpush1.msra.mxu0 %v39
    %891 = vmatprep.subr.mxu0 0.0
    %892 = vmatpush1.msra.mxu0 0.0
    %893 = vmatprep.subr.mxu0 0.0
    %894 = vmatpush1.msra.mxu0 0.0
    %895 = vmatprep.subr.mxu0 0.0
    %896 = vmatpush1.msra.mxu0 0.0
    %897 = vmatprep.subr.mxu0 0.0
    %898 = vmatpush1.msra.mxu0 0.0
    %899 = vmatprep.subr.mxu0 0.0
    %900 = vmatpush1.msra.mxu0 0.0
    %901 = vmatprep.subr.mxu0 0.0
    %902 = vmatpush1.msra.mxu0 0.0
    %903 = vmatprep.subr.mxu0 0.0
    %904 = vmatpush1.msra.mxu0 0.0
    %905 = vmatprep.subr.mxu0 0.0
    %906 = vmatpush1.msra.mxu0 0.0
    %907 = vmatprep.subr.mxu0 0.0
    %908 = vmatpush1.msra.mxu0 0.0
    %909 = vmatprep.subr.mxu0 0.0
    %910 = vmatpush1.msra.mxu0 0.0
    %911 = vmatprep.subr.mxu0 0.0
    %912 = vmatpush1.msra.mxu0 0.0
    %913 = vmatprep.subr.mxu0 0.0
    %914 = vmatpush1.msra.mxu0 0.0
    %915 = vmatprep.subr.mxu0 0.0
    %916 = vmatpush1.msra.mxu0 0.0
    %917 = vmatprep.subr.mxu0 0.0
    %918 = vmatpush1.msra.mxu0 0.0
    %919 = vmatprep.subr.mxu0 0.0
    %920 = vmatpush1.msra.mxu0 0.0
    %921 = vmatprep.subr.mxu0 0.0
    %922 = vmatpush1.msra.mxu0 0.0
    %923 = vmatprep.subr.mxu0 0.0
    %924 = vmatpush1.msra.mxu0 0.0
    %925 = vmatprep.subr.mxu0 0.0
    %926 = vmatpush1.msra.mxu0 0.0
    %927 = vmatprep.subr.mxu0 0.0
    %928 = vmatpush1.msra.mxu0 0.0
    %929 = vmatprep.subr.mxu0 0.0
    %930 = vmatpush1.msra.mxu0 0.0
    %931 = vmatprep.subr.mxu0 0.0
    %932 = vmatpush1.msra.mxu0 0.0
    %933 = vmatprep.subr.mxu0 0.0
    %934 = vmatpush1.msra.mxu0 0.0
    %935 = vmatprep.subr.mxu0 0.0
    %936 = vmatpush1.msra.mxu0 0.0
    %937 = vmatprep.subr.mxu0 0.0
    %938 = vmatpush1.msra.mxu0 0.0
    %939 = vmatprep.subr.mxu0 0.0
    %940 = vmatpush1.msra.mxu0 0.0
    %941 = vmatprep.subr.mxu0 0.0
    %942 = vmatpush1.msra.mxu0 0.0
    %943 = vmatprep.subr.mxu0 0.0
    %944 = vmatpush1.msra.mxu0 0.0
    %945 = vmatprep.subr.mxu0 0.0
    %946 = vmatpush1.msra.mxu0 0.0
    %947 = vmatprep.mubr.f32.mxu0 0.0
    %948 = vmatmul.mubr.f32.gmra.mrb[0].mxu0 %v617
    %v949 = vpop.f32.mrb[0].mxu0
    %v950 = vadd.f32 0.0, %v949
    %v951 = vpop.f32.mrb[0].mxu0
    %952 = vdwg.mxu0
    %v953 = vadd.f32 %v882, %v950
    %v954 = vxor.u32 %v953, 2147483648
    %v955 = vmul.f32 %v954, 1.442695
    %v956 = vpow.pop %v955
    %v957 = vadd.f32 %v956, 1.0
    %v958 = vrcp.pop %v957
    %v959 = vmul.f32 1.0, %v958
    %v960 = vmul.f32 %v959, 2.0
    %v961 = vsub.f32 %v960, 1.0
    %v962 = vmul.f32 %v959, %v607
    %964 = vrot.lane.b32.xlu0 %v961, 64
    %v965 = vpop.permute.xlu0 %964
    %v967 = vmul.f32 %v959, %v965
    %969 = vrot.lane.b32.xlu0 %v967, 32
    %v970 = vpop.permute.xlu0 %969
    %v972 = vadd.f32 %v962, %v970
    %v973 = vtanh.pop %v972
    %975 = vrot.lane.b32.xlu0 %v973, 64
    %v976 = vpop.permute.xlu0 %975
    %v978 = vmul.f32 %v959, %v976
    %980 = vrot.lane.b32.xlu0 %v978, 32
    %v981 = vpop.permute.xlu0 %980
    %v982 = vsel %vm66, %v981, 0
    %984 = vmatprep.subr.mxu0 0.0
    %985 = vmatpush1.msra.mxu0 %v44
    %986 = vmatprep.subr.mxu0 0.0
    %987 = vmatpush1.msra.mxu0 %v45
    %988 = vmatprep.subr.mxu0 0.0
    %989 = vmatpush1.msra.mxu0 %v46
    %990 = vmatprep.subr.mxu0 0.0
    %991 = vmatpush1.msra.mxu0 %v47
    %992 = vmatprep.subr.mxu0 0.0
    %993 = vmatpush1.msra.mxu0 0.0
    %994 = vmatprep.subr.mxu0 0.0
    %995 = vmatpush1.msra.mxu0 0.0
    %996 = vmatprep.subr.mxu0 0.0
    %997 = vmatpush1.msra.mxu0 0.0
    %998 = vmatprep.subr.mxu0 0.0
    %999 = vmatpush1.msra.mxu0 0.0
    %1000 = vmatprep.subr.mxu0 0.0
    %1001 = vmatpush1.msra.mxu0 0.0
    %1002 = vmatprep.subr.mxu0 0.0
    %1003 = vmatpush1.msra.mxu0 0.0
    %1004 = vmatprep.subr.mxu0 0.0
    %1005 = vmatpush1.msra.mxu0 0.0
    %1006 = vmatprep.subr.mxu0 0.0
    %1007 = vmatpush1.msra.mxu0 0.0
    %1008 = vmatprep.subr.mxu0 0.0
    %1009 = vmatpush1.msra.mxu0 0.0
    %1010 = vmatprep.subr.mxu0 0.0
    %1011 = vmatpush1.msra.mxu0 0.0
    %1012 = vmatprep.subr.mxu0 0.0
    %1013 = vmatpush1.msra.mxu0 0.0
    %1014 = vmatprep.subr.mxu0 0.0
    %1015 = vmatpush1.msra.mxu0 0.0
    %1016 = vmatprep.subr.mxu0 0.0
    %1017 = vmatpush1.msra.mxu0 0.0
    %1018 = vmatprep.subr.mxu0 0.0
    %1019 = vmatpush1.msra.mxu0 0.0
    %1020 = vmatprep.subr.mxu0 0.0
    %1021 = vmatpush1.msra.mxu0 0.0
    %1022 = vmatprep.subr.mxu0 0.0
    %1023 = vmatpush1.msra.mxu0 0.0
    %1024 = vmatprep.subr.mxu0 0.0
    %1025 = vmatpush1.msra.mxu0 0.0
    %1026 = vmatprep.subr.mxu0 0.0
    %1027 = vmatpush1.msra.mxu0 0.0
    %1028 = vmatprep.subr.mxu0 0.0
    %1029 = vmatpush1.msra.mxu0 0.0
    %1030 = vmatprep.subr.mxu0 0.0
    %1031 = vmatpush1.msra.mxu0 0.0
    %1032 = vmatprep.subr.mxu0 0.0
    %1033 = vmatpush1.msra.mxu0 0.0
    %1034 = vmatprep.subr.mxu0 0.0
    %1035 = vmatpush1.msra.mxu0 0.0
    %1036 = vmatprep.subr.mxu0 0.0
    %1037 = vmatpush1.msra.mxu0 0.0
    %1038 = vmatprep.subr.mxu0 0.0
    %1039 = vmatpush1.msra.mxu0 0.0
    %1040 = vmatprep.subr.mxu0 0.0
    %1041 = vmatpush1.msra.mxu0 0.0
    %1042 = vmatprep.subr.mxu0 0.0
    %1043 = vmatpush1.msra.mxu0 0.0
    %1044 = vmatprep.subr.mxu0 0.0
    %1045 = vmatpush1.msra.mxu0 0.0
    %1046 = vmatprep.subr.mxu0 0.0
    %1047 = vmatpush1.msra.mxu0 0.0
    %1048 = vmatprep.mubr.f32.mxu0 0.0
    %1049 = vmatmul.mubr.f32.gmra.mrb[0].mxu0 %v982
    %v1050 = vpop.f32.mrb[0].mxu0
    %v1051 = vadd.f32 0.0, %v1050
    %v1052 = vpop.f32.mrb[0].mxu0
    %1053 = vdwg.mxu0
    %1054 = vmatprep.subr.mxu0 0.0
    %1055 = vmatpush1.msra.mxu0 %v40
    %1056 = vmatprep.subr.mxu0 0.0
    %1057 = vmatpush1.msra.mxu0 %v41
    %1058 = vmatprep.subr.mxu0 0.0
    %1059 = vmatpush1.msra.mxu0 %v42
    %1060 = vmatprep.subr.mxu0 0.0
    %1061 = vmatpush1.msra.mxu0 %v43
    %1062 = vmatprep.subr.mxu0 0.0
    %1063 = vmatpush1.msra.mxu0 0.0
    %1064 = vmatprep.subr.mxu0 0.0
    %1065 = vmatpush1.msra.mxu0 0.0
    %1066 = vmatprep.subr.mxu0 0.0
    %1067 = vmatpush1.msra.mxu0 0.0
    %1068 = vmatprep.subr.mxu0 0.0
    %1069 = vmatpush1.msra.mxu0 0.0
    %1070 = vmatprep.subr.mxu0 0.0
    %1071 = vmatpush1.msra.mxu0 0.0
    %1072 = vmatprep.subr.mxu0 0.0
    %1073 = vmatpush1.msra.mxu0 0.0
    %1074 = vmatprep.subr.mxu0 0.0
    %1075 = vmatpush1.msra.mxu0 0.0
    %1076 = vmatprep.subr.mxu0 0.0
    %1077 = vmatpush1.msra.mxu0 0.0
    %1078 = vmatprep.subr.mxu0 0.0
    %1079 = vmatpush1.msra.mxu0 0.0
    %1080 = vmatprep.subr.mxu0 0.0
    %1081 = vmatpush1.msra.mxu0 0.0
    %1082 = vmatprep.subr.mxu0 0.0
    %1083 = vmatpush1.msra.mxu0 0.0
    %1084 = vmatprep.subr.mxu0 0.0
    %1085 = vmatpush1.msra.mxu0 0.0
    %1086 = vmatprep.subr.mxu0 0.0
    %1087 = vmatpush1.msra.mxu0 0.0
    %1088 = vmatprep.subr.mxu0 0.0
    %1089 = vmatpush1.msra.mxu0 0.0
    %1090 = vmatprep.subr.mxu0 0.0
    %1091 = vmatpush1.msra.mxu0 0.0
    %1092 = vmatprep.subr.mxu0 0.0
    %1093 = vmatpush1.msra.mxu0 0.0
    %1094 = vmatprep.subr.mxu0 0.0
    %1095 = vmatpush1.msra.mxu0 0.0
    %1096 = vmatprep.subr.mxu0 0.0
    %1097 = vmatpush1.msra.mxu0 0.0
    %1098 = vmatprep.subr.mxu0 0.0
    %1099 = vmatpush1.msra.mxu0 0.0
    %1100 = vmatprep.subr.mxu0 0.0
    %1101 = vmatpush1.msra.mxu0 0.0
    %1102 = vmatprep.subr.mxu0 0.0
    %1103 = vmatpush1.msra.mxu0 0.0
    %1104 = vmatprep.subr.mxu0 0.0
    %1105 = vmatpush1.msra.mxu0 0.0
    %1106 = vmatprep.subr.mxu0 0.0
    %1107 = vmatpush1.msra.mxu0 0.0
    %1108 = vmatprep.subr.mxu0 0.0
    %1109 = vmatpush1.msra.mxu0 0.0
    %1110 = vmatprep.subr.mxu0 0.0
    %1111 = vmatpush1.msra.mxu0 0.0
    %1112 = vmatprep.subr.mxu0 0.0
    %1113 = vmatpush1.msra.mxu0 0.0
    %1114 = vmatprep.subr.mxu0 0.0
    %1115 = vmatpush1.msra.mxu0 0.0
    %1116 = vmatprep.subr.mxu0 0.0
    %1117 = vmatpush1.msra.mxu0 0.0
    %1118 = vmatprep.mubr.f32.mxu0 0.0
    %1119 = vmatmul.mubr.f32.gmra.mrb[0].mxu0 %v788
    %v1120 = vpop.f32.mrb[0].mxu0
    %v1121 = vadd.f32 %v1051, %v1120
    %v1122 = vpop.f32.mrb[0].mxu0
    %1123 = vdwg.mxu0
    %v1124 = vadd.f32 %v1121, %v58
    %v1125 = vxor.u32 %v1124, 2147483648
    %v1126 = vmul.f32 %v1125, 1.442695
    %v1127 = vpow.pop %v1126
    %v1128 = vadd.f32 %v1127, 1.0
    %v1129 = vrcp.pop %v1128
    %v1130 = vmul.f32 1.0, %v1129
    %v1131 = vmul.f32 %v1130, 2.0
    %v1132 = vsub.f32 %v1131, 1.0
    %v1133 = vmul.f32 %v1130, %v778
    %1135 = vrot.lane.b32.xlu0 %v1132, 64
    %v1136 = vpop.permute.xlu0 %1135
    %v1138 = vmul.f32 %v1130, %v1136
    %1140 = vrot.lane.b32.xlu0 %v1138, 32
    %v1141 = vpop.permute.xlu0 %1140
    %v1143 = vadd.f32 %v1133, %v1141
    %v1144 = vtanh.pop %v1143
    %1146 = vrot.lane.b32.xlu0 %v1144, 64
    %v1147 = vpop.permute.xlu0 %1146
    %v1149 = vmul.f32 %v1130, %v1147
    %1151 = vrot.lane.b32.xlu0 %v1149, 32
    %v1152 = vpop.permute.xlu0 %1151
    %v1153 = vsel %vm66, %v1152, 0
    %1155 = vmatprep.subr.mxu0 0.0
    %1156 = vmatpush1.msra.mxu0 %v48
    %1157 = vmatprep.subr.mxu0 0.0
    %1158 = vmatpush1.msra.mxu0 %v49
    %1159 = vmatprep.subr.mxu0 0.0
    %1160 = vmatpush1.msra.mxu0 %v50
    %1161 = vmatprep.subr.mxu0 0.0
    %1162 = vmatpush1.msra.mxu0 %v51
    %1163 = vmatprep.subr.mxu0 0.0
    %1164 = vmatpush1.msra.mxu0 0.0
    %1165 = vmatprep.subr.mxu0 0.0
    %1166 = vmatpush1.msra.mxu0 0.0
    %1167 = vmatprep.subr.mxu0 0.0
    %1168 = vmatpush1.msra.mxu0 0.0
    %1169 = vmatprep.subr.mxu0 0.0
    %1170 = vmatpush1.msra.mxu0 0.0
    %1171 = vmatprep.subr.mxu0 0.0
    %1172 = vmatpush1.msra.mxu0 0.0
    %1173 = vmatprep.subr.mxu0 0.0
    %1174 = vmatpush1.msra.mxu0 0.0
    %1175 = vmatprep.subr.mxu0 0.0
    %1176 = vmatpush1.msra.mxu0 0.0
    %1177 = vmatprep.subr.mxu0 0.0
    %1178 = vmatpush1.msra.mxu0 0.0
    %1179 = vmatprep.subr.mxu0 0.0
    %1180 = vmatpush1.msra.mxu0 0.0
    %1181 = vmatprep.subr.mxu0 0.0
    %1182 = vmatpush1.msra.mxu0 0.0
    %1183 = vmatprep.subr.mxu0 0.0
    %1184 = vmatpush1.msra.mxu0 0.0
    %1185 = vmatprep.subr.mxu0 0.0
    %1186 = vmatpush1.msra.mxu0 0.0
    %1187 = vmatprep.subr.mxu0 0.0
    %1188 = vmatpush1.msra.mxu0 0.0
    %1189 = vmatprep.subr.mxu0 0.0
    %1190 = vmatpush1.msra.mxu0 0.0
    %1191 = vmatprep.subr.mxu0 0.0
    %1192 = vmatpush1.msra.mxu0 0.0
    %1193 = vmatprep.subr.mxu0 0.0
    %1194 = vmatpush1.msra.mxu0 0.0
    %1195 = vmatprep.subr.mxu0 0.0
    %1196 = vmatpush1.msra.mxu0 0.0
    %1197 = vmatprep.subr.mxu0 0.0
    %1198 = vmatpush1.msra.mxu0 0.0
    %1199 = vmatprep.subr.mxu0 0.0
    %1200 = vmatpush1.msra.mxu0 0.0
    %1201 = vmatprep.subr.mxu0 0.0
    %1202 = vmatpush1.msra.mxu0 0.0
    %1203 = vmatprep.subr.mxu0 0.0
    %1204 = vmatpush1.msra.mxu0 0.0
    %1205 = vmatprep.subr.mxu0 0.0
    %1206 = vmatpush1.msra.mxu0 0.0
    %1207 = vmatprep.subr.mxu0 0.0
    %1208 = vmatpush1.msra.mxu0 0.0
    %1209 = vmatprep.subr.mxu0 0.0
    %1210 = vmatpush1.msra.mxu0 0.0
    %1211 = vmatprep.subr.mxu0 0.0
    %1212 = vmatpush1.msra.mxu0 0.0
    %1213 = vmatprep.subr.mxu0 0.0
    %1214 = vmatpush1.msra.mxu0 0.0
    %1215 = vmatprep.subr.mxu0 0.0
    %1216 = vmatpush1.msra.mxu0 0.0
    %1217 = vmatprep.subr.mxu0 0.0
    %1218 = vmatpush1.msra.mxu0 0.0
    %1219 = vmatprep.mubr.f32.mxu0 0.0
    %1220 = vmatmul.mubr.f32.gmra.mrb[0].mxu0 %v1153
    %v1221 = vpop.f32.mrb[0].mxu0
    %v1222 = vadd.f32 %v59, %v1221
    %v1223 = vpop.f32.mrb[0].mxu0
    %1224 = vdwg.mxu0
    %v1225 = vmax.f32 %v1222, 0.0
    %v1226 = vsel %vm495, %v1225, -inf
    %1227 = vmax.xlane.f32.xlu0 %v1226
    %v1228 = vpop.xlane.xlu0 %1227
    %vm1229 = vcmp.ge.f32.partialorder %v1225, %v1228
    %v1230 = vsel %vm1229, %v62, 128.0
    %v1231 = vsel %vm495, %v1230, inf
    %1232 = vmin.xlane.f32.xlu0 %v1231
    %v1233 = vpop.xlane.xlu0 %1232
    %v1234 = vsub.f32 %v1225, %v1228
    %v1235 = vmul.f32 %v1234, 1.442695
    %v1236 = vpow.pop %v1235
    %v1237 = vmul.f32 %v1236, %v61
    %v1238 = vsel %vm495, %v1237, 0.0
    %1239 = vadd.xlane.f32.xlu0 %v1238
    %v1240 = vpop.xlane.xlu0 %1239
    %v1241 = vlog2.pop %v1240
    %v1242 = vmul.f32 %v1241, 0.6931472
    %v1243 = vadd.f32 %v1228, %v1242
    %v1244 = vsub.f32 %v1225, %v1243
    %1245 = vst [vmem:[#allocation7 + $0x2] sm:$0x1] %v1244
    %v1246 = vmul.f32 %v1233, %v56
    %v1247 = vadd.f32 %v1246, %v57
    %1248 = vmatprep.subr.mxu0 0.0
    %1249 = vmatpush1.msra.mxu0 %v36
    %1250 = vmatprep.subr.mxu0 0.0
    %1251 = vmatpush1.msra.mxu0 %v37
    %1252 = vmatprep.subr.mxu0 0.0
    %1253 = vmatpush1.msra.mxu0 %v38
    %1254 = vmatprep.subr.mxu0 0.0
    %1255 = vmatpush1.msra.mxu0 %v39
    %1256 = vmatprep.subr.mxu0 0.0
    %1257 = vmatpush1.msra.mxu0 0.0
    %1258 = vmatprep.subr.mxu0 0.0
    %1259 = vmatpush1.msra.mxu0 0.0
    %1260 = vmatprep.subr.mxu0 0.0
    %1261 = vmatpush1.msra.mxu0 0.0
    %1262 = vmatprep.subr.mxu0 0.0
    %1263 = vmatpush1.msra.mxu0 0.0
    %1264 = vmatprep.subr.mxu0 0.0
    %1265 = vmatpush1.msra.mxu0 0.0
    %1266 = vmatprep.subr.mxu0 0.0
    %1267 = vmatpush1.msra.mxu0 0.0
    %1268 = vmatprep.subr.mxu0 0.0
    %1269 = vmatpush1.msra.mxu0 0.0
    %1270 = vmatprep.subr.mxu0 0.0
    %1271 = vmatpush1.msra.mxu0 0.0
    %1272 = vmatprep.subr.mxu0 0.0
    %1273 = vmatpush1.msra.mxu0 0.0
    %1274 = vmatprep.subr.mxu0 0.0
    %1275 = vmatpush1.msra.mxu0 0.0
    %1276 = vmatprep.subr.mxu0 0.0
    %1277 = vmatpush1.msra.mxu0 0.0
    %1278 = vmatprep.subr.mxu0 0.0
    %1279 = vmatpush1.msra.mxu0 0.0
    %1280 = vmatprep.subr.mxu0 0.0
    %1281 = vmatpush1.msra.mxu0 0.0
    %1282 = vmatprep.subr.mxu0 0.0
    %1283 = vmatpush1.msra.mxu0 0.0
    %1284 = vmatprep.subr.mxu0 0.0
    %1285 = vmatpush1.msra.mxu0 0.0
    %1286 = vmatprep.subr.mxu0 0.0
    %1287 = vmatpush1.msra.mxu0 0.0
    %1288 = vmatprep.subr.mxu0 0.0
    %1289 = vmatpush1.msra.mxu0 0.0
    %1290 = vmatprep.subr.mxu0 0.0
    %1291 = vmatpush1.msra.mxu0 0.0
    %1292 = vmatprep.subr.mxu0 0.0
    %1293 = vmatpush1.msra.mxu0 0.0
    %1294 = vmatprep.subr.mxu0 0.0
    %1295 = vmatpush1.msra.mxu0 0.0
    %1296 = vmatprep.subr.mxu0 0.0
    %1297 = vmatpush1.msra.mxu0 0.0
    %1298 = vmatprep.subr.mxu0 0.0
    %1299 = vmatpush1.msra.mxu0 0.0
    %1300 = vmatprep.subr.mxu0 0.0
    %1301 = vmatpush1.msra.mxu0 0.0
    %1302 = vmatprep.subr.mxu0 0.0
    %1303 = vmatpush1.msra.mxu0 0.0
    %1304 = vmatprep.subr.mxu0 0.0
    %1305 = vmatpush1.msra.mxu0 0.0
    %1306 = vmatprep.subr.mxu0 0.0
    %1307 = vmatpush1.msra.mxu0 0.0
    %1308 = vmatprep.subr.mxu0 0.0
    %1309 = vmatpush1.msra.mxu0 0.0
    %1310 = vmatprep.subr.mxu0 0.0
    %1311 = vmatpush1.msra.mxu0 0.0
    %1312 = vmatprep.mubr.f32.mxu0 0.0
    %1313 = vmatmul.mubr.f32.gmra.mrb[0].mxu0 %v982
    %v1314 = vpop.f32.mrb[0].mxu0
    %v1315 = vadd.f32 0.0, %v1314
    %v1316 = vpop.f32.mrb[0].mxu0
    %1317 = vdwg.mxu0
    %v1318 = vadd.f32 %v1247, %v1315
    %v1319 = vxor.u32 %v1318, 2147483648
    %v1320 = vmul.f32 %v1319, 1.442695
    %v1321 = vpow.pop %v1320
    %v1322 = vadd.f32 %v1321, 1.0
    %v1323 = vrcp.pop %v1322
    %v1324 = vmul.f32 1.0, %v1323
    %v1325 = vmul.f32 %v1324, 2.0
    %v1326 = vsub.f32 %v1325, 1.0
    %v1327 = vmul.f32 %v1324, %v972
    %1329 = vrot.lane.b32.xlu0 %v1326, 64
    %v1330 = vpop.permute.xlu0 %1329
    %v1332 = vmul.f32 %v1324, %v1330
    %1334 = vrot.lane.b32.xlu0 %v1332, 32
    %v1335 = vpop.permute.xlu0 %1334
    %v1337 = vadd.f32 %v1327, %v1335
    %v1338 = vtanh.pop %v1337
    %1340 = vrot.lane.b32.xlu0 %v1338, 64
    %v1341 = vpop.permute.xlu0 %1340
    %v1343 = vmul.f32 %v1324, %v1341
    %1345 = vrot.lane.b32.xlu0 %v1343, 32
    %v1346 = vpop.permute.xlu0 %1345
    %v1347 = vsel %vm66, %v1346, 0
    %1349 = vmatprep.subr.mxu0 0.0
    %1350 = vmatpush1.msra.mxu0 %v44
    %1351 = vmatprep.subr.mxu0 0.0
    %1352 = vmatpush1.msra.mxu0 %v45
    %1353 = vmatprep.subr.mxu0 0.0
    %1354 = vmatpush1.msra.mxu0 %v46
    %1355 = vmatprep.subr.mxu0 0.0
    %1356 = vmatpush1.msra.mxu0 %v47
    %1357 = vmatprep.subr.mxu0 0.0
    %1358 = vmatpush1.msra.mxu0 0.0
    %1359 = vmatprep.subr.mxu0 0.0
    %1360 = vmatpush1.msra.mxu0 0.0
    %1361 = vmatprep.subr.mxu0 0.0
    %1362 = vmatpush1.msra.mxu0 0.0
    %1363 = vmatprep.subr.mxu0 0.0
    %1364 = vmatpush1.msra.mxu0 0.0
    %1365 = vmatprep.subr.mxu0 0.0
    %1366 = vmatpush1.msra.mxu0 0.0
    %1367 = vmatprep.subr.mxu0 0.0
    %1368 = vmatpush1.msra.mxu0 0.0
    %1369 = vmatprep.subr.mxu0 0.0
    %1370 = vmatpush1.msra.mxu0 0.0
    %1371 = vmatprep.subr.mxu0 0.0
    %1372 = vmatpush1.msra.mxu0 0.0
    %1373 = vmatprep.subr.mxu0 0.0
    %1374 = vmatpush1.msra.mxu0 0.0
    %1375 = vmatprep.subr.mxu0 0.0
    %1376 = vmatpush1.msra.mxu0 0.0
    %1377 = vmatprep.subr.mxu0 0.0
    %1378 = vmatpush1.msra.mxu0 0.0
    %1379 = vmatprep.subr.mxu0 0.0
    %1380 = vmatpush1.msra.mxu0 0.0
    %1381 = vmatprep.subr.mxu0 0.0
    %1382 = vmatpush1.msra.mxu0 0.0
    %1383 = vmatprep.subr.mxu0 0.0
    %1384 = vmatpush1.msra.mxu0 0.0
    %1385 = vmatprep.subr.mxu0 0.0
    %1386 = vmatpush1.msra.mxu0 0.0
    %1387 = vmatprep.subr.mxu0 0.0
    %1388 = vmatpush1.msra.mxu0 0.0
    %1389 = vmatprep.subr.mxu0 0.0
    %1390 = vmatpush1.msra.mxu0 0.0
    %1391 = vmatprep.subr.mxu0 0.0
    %1392 = vmatpush1.msra.mxu0 0.0
    %1393 = vmatprep.subr.mxu0 0.0
    %1394 = vmatpush1.msra.mxu0 0.0
    %1395 = vmatprep.subr.mxu0 0.0
    %1396 = vmatpush1.msra.mxu0 0.0
    %1397 = vmatprep.subr.mxu0 0.0
    %1398 = vmatpush1.msra.mxu0 0.0
    %1399 = vmatprep.subr.mxu0 0.0
    %1400 = vmatpush1.msra.mxu0 0.0
    %1401 = vmatprep.subr.mxu0 0.0
    %1402 = vmatpush1.msra.mxu0 0.0
    %1403 = vmatprep.subr.mxu0 0.0
    %1404 = vmatpush1.msra.mxu0 0.0
    %1405 = vmatprep.subr.mxu0 0.0
    %1406 = vmatpush1.msra.mxu0 0.0
    %1407 = vmatprep.subr.mxu0 0.0
    %1408 = vmatpush1.msra.mxu0 0.0
    %1409 = vmatprep.subr.mxu0 0.0
    %1410 = vmatpush1.msra.mxu0 0.0
    %1411 = vmatprep.subr.mxu0 0.0
    %1412 = vmatpush1.msra.mxu0 0.0
    %1413 = vmatprep.mubr.f32.mxu0 0.0
    %1414 = vmatmul.mubr.f32.gmra.mrb[0].mxu0 %v1347
    %v1415 = vpop.f32.mrb[0].mxu0
    %v1416 = vadd.f32 0.0, %v1415
    %v1417 = vpop.f32.mrb[0].mxu0
    %1418 = vdwg.mxu0
    %1419 = vmatprep.subr.mxu0 0.0
    %1420 = vmatpush1.msra.mxu0 %v40
    %1421 = vmatprep.subr.mxu0 0.0
    %1422 = vmatpush1.msra.mxu0 %v41
    %1423 = vmatprep.subr.mxu0 0.0
    %1424 = vmatpush1.msra.mxu0 %v42
    %1425 = vmatprep.subr.mxu0 0.0
    %1426 = vmatpush1.msra.mxu0 %v43
    %1427 = vmatprep.subr.mxu0 0.0
    %1428 = vmatpush1.msra.mxu0 0.0
    %1429 = vmatprep.subr.mxu0 0.0
    %1430 = vmatpush1.msra.mxu0 0.0
    %1431 = vmatprep.subr.mxu0 0.0
    %1432 = vmatpush1.msra.mxu0 0.0
    %1433 = vmatprep.subr.mxu0 0.0
    %1434 = vmatpush1.msra.mxu0 0.0
    %1435 = vmatprep.subr.mxu0 0.0
    %1436 = vmatpush1.msra.mxu0 0.0
    %1437 = vmatprep.subr.mxu0 0.0
    %1438 = vmatpush1.msra.mxu0 0.0
    %1439 = vmatprep.subr.mxu0 0.0
    %1440 = vmatpush1.msra.mxu0 0.0
    %1441 = vmatprep.subr.mxu0 0.0
    %1442 = vmatpush1.msra.mxu0 0.0
    %1443 = vmatprep.subr.mxu0 0.0
    %1444 = vmatpush1.msra.mxu0 0.0
    %1445 = vmatprep.subr.mxu0 0.0
    %1446 = vmatpush1.msra.mxu0 0.0
    %1447 = vmatprep.subr.mxu0 0.0
    %1448 = vmatpush1.msra.mxu0 0.0
    %1449 = vmatprep.subr.mxu0 0.0
    %1450 = vmatpush1.msra.mxu0 0.0
    %1451 = vmatprep.subr.mxu0 0.0
    %1452 = vmatpush1.msra.mxu0 0.0
    %1453 = vmatprep.subr.mxu0 0.0
    %1454 = vmatpush1.msra.mxu0 0.0
    %1455 = vmatprep.subr.mxu0 0.0
    %1456 = vmatpush1.msra.mxu0 0.0
    %1457 = vmatprep.subr.mxu0 0.0
    %1458 = vmatpush1.msra.mxu0 0.0
    %1459 = vmatprep.subr.mxu0 0.0
    %1460 = vmatpush1.msra.mxu0 0.0
    %1461 = vmatprep.subr.mxu0 0.0
    %1462 = vmatpush1.msra.mxu0 0.0
    %1463 = vmatprep.subr.mxu0 0.0
    %1464 = vmatpush1.msra.mxu0 0.0
    %1465 = vmatprep.subr.mxu0 0.0
    %1466 = vmatpush1.msra.mxu0 0.0
    %1467 = vmatprep.subr.mxu0 0.0
    %1468 = vmatpush1.msra.mxu0 0.0
    %1469 = vmatprep.subr.mxu0 0.0
    %1470 = vmatpush1.msra.mxu0 0.0
    %1471 = vmatprep.subr.mxu0 0.0
    %1472 = vmatpush1.msra.mxu0 0.0
    %1473 = vmatprep.subr.mxu0 0.0
    %1474 = vmatpush1.msra.mxu0 0.0
    %1475 = vmatprep.subr.mxu0 0.0
    %1476 = vmatpush1.msra.mxu0 0.0
    %1477 = vmatprep.subr.mxu0 0.0
    %1478 = vmatpush1.msra.mxu0 0.0
    %1479 = vmatprep.subr.mxu0 0.0
    %1480 = vmatpush1.msra.mxu0 0.0
    %1481 = vmatprep.subr.mxu0 0.0
    %1482 = vmatpush1.msra.mxu0 0.0
    %1483 = vmatprep.mubr.f32.mxu0 0.0
    %1484 = vmatmul.mubr.f32.gmra.mrb[0].mxu0 %v1153
    %v1485 = vpop.f32.mrb[0].mxu0
    %v1486 = vadd.f32 %v1416, %v1485
    %v1487 = vpop.f32.mrb[0].mxu0
    %1488 = vdwg.mxu0
    %v1489 = vadd.f32 %v1486, %v58
    %v1490 = vxor.u32 %v1489, 2147483648
    %v1491 = vmul.f32 %v1490, 1.442695
    %v1492 = vpow.pop %v1491
    %v1493 = vadd.f32 %v1492, 1.0
    %v1494 = vrcp.pop %v1493
    %v1495 = vmul.f32 1.0, %v1494
    %v1496 = vmul.f32 %v1495, 2.0
    %v1497 = vsub.f32 %v1496, 1.0
    %v1498 = vmul.f32 %v1495, %v1143
    %1500 = vrot.lane.b32.xlu0 %v1497, 64
    %v1501 = vpop.permute.xlu0 %1500
    %v1503 = vmul.f32 %v1495, %v1501
    %1505 = vrot.lane.b32.xlu0 %v1503, 32
    %v1506 = vpop.permute.xlu0 %1505
    %v1508 = vadd.f32 %v1498, %v1506
    %v1509 = vtanh.pop %v1508
    %1511 = vrot.lane.b32.xlu0 %v1509, 64
    %v1512 = vpop.permute.xlu0 %1511
    %v1514 = vmul.f32 %v1495, %v1512
    %1516 = vrot.lane.b32.xlu0 %v1514, 32
    %v1517 = vpop.permute.xlu0 %1516
    %v1518 = vsel %vm66, %v1517, 0
    %1520 = vmatprep.subr.mxu0 0.0
    %1521 = vmatpush1.msra.mxu0 %v48
    %1522 = vmatprep.subr.mxu0 0.0
    %1523 = vmatpush1.msra.mxu0 %v49
    %1524 = vmatprep.subr.mxu0 0.0
    %1525 = vmatpush1.msra.mxu0 %v50
    %1526 = vmatprep.subr.mxu0 0.0
    %1527 = vmatpush1.msra.mxu0 %v51
    %1528 = vmatprep.subr.mxu0 0.0
    %1529 = vmatpush1.msra.mxu0 0.0
    %1530 = vmatprep.subr.mxu0 0.0
    %1531 = vmatpush1.msra.mxu0 0.0
    %1532 = vmatprep.subr.mxu0 0.0
    %1533 = vmatpush1.msra.mxu0 0.0
    %1534 = vmatprep.subr.mxu0 0.0
    %1535 = vmatpush1.msra.mxu0 0.0
    %1536 = vmatprep.subr.mxu0 0.0
    %1537 = vmatpush1.msra.mxu0 0.0
    %1538 = vmatprep.subr.mxu0 0.0
    %1539 = vmatpush1.msra.mxu0 0.0
    %1540 = vmatprep.subr.mxu0 0.0
    %1541 = vmatpush1.msra.mxu0 0.0
    %1542 = vmatprep.subr.mxu0 0.0
    %1543 = vmatpush1.msra.mxu0 0.0
    %1544 = vmatprep.subr.mxu0 0.0
    %1545 = vmatpush1.msra.mxu0 0.0
    %1546 = vmatprep.subr.mxu0 0.0
    %1547 = vmatpush1.msra.mxu0 0.0
    %1548 = vmatprep.subr.mxu0 0.0
    %1549 = vmatpush1.msra.mxu0 0.0
    %1550 = vmatprep.subr.mxu0 0.0
    %1551 = vmatpush1.msra.mxu0 0.0
    %1552 = vmatprep.subr.mxu0 0.0
    %1553 = vmatpush1.msra.mxu0 0.0
    %1554 = vmatprep.subr.mxu0 0.0
    %1555 = vmatpush1.msra.mxu0 0.0
    %1556 = vmatprep.subr.mxu0 0.0
    %1557 = vmatpush1.msra.mxu0 0.0
    %1558 = vmatprep.subr.mxu0 0.0
    %1559 = vmatpush1.msra.mxu0 0.0
    %1560 = vmatprep.subr.mxu0 0.0
    %1561 = vmatpush1.msra.mxu0 0.0
    %1562 = vmatprep.subr.mxu0 0.0
    %1563 = vmatpush1.msra.mxu0 0.0
    %1564 = vmatprep.subr.mxu0 0.0
    %1565 = vmatpush1.msra.mxu0 0.0
    %1566 = vmatprep.subr.mxu0 0.0
    %1567 = vmatpush1.msra.mxu0 0.0
    %1568 = vmatprep.subr.mxu0 0.0
    %1569 = vmatpush1.msra.mxu0 0.0
    %1570 = vmatprep.subr.mxu0 0.0
    %1571 = vmatpush1.msra.mxu0 0.0
    %1572 = vmatprep.subr.mxu0 0.0
    %1573 = vmatpush1.msra.mxu0 0.0
    %1574 = vmatprep.subr.mxu0 0.0
    %1575 = vmatpush1.msra.mxu0 0.0
    %1576 = vmatprep.subr.mxu0 0.0
    %1577 = vmatpush1.msra.mxu0 0.0
    %1578 = vmatprep.subr.mxu0 0.0
    %1579 = vmatpush1.msra.mxu0 0.0
    %1580 = vmatprep.subr.mxu0 0.0
    %1581 = vmatpush1.msra.mxu0 0.0
    %1582 = vmatprep.subr.mxu0 0.0
    %1583 = vmatpush1.msra.mxu0 0.0
    %1584 = vmatprep.mubr.f32.mxu0 0.0
    %1585 = vmatmul.mubr.f32.gmra.mrb[0].mxu0 %v1518
    %v1586 = vpop.f32.mrb[0].mxu0
    %v1587 = vadd.f32 %v59, %v1586
    %v1588 = vpop.f32.mrb[0].mxu0
    %1589 = vdwg.mxu0
    %v1590 = vmax.f32 %v1587, 0.0
    %v1591 = vsel %vm495, %v1590, -inf
    %1592 = vmax.xlane.f32.xlu0 %v1591
    %v1593 = vpop.xlane.xlu0 %1592
    %vm1594 = vcmp.ge.f32.partialorder %v1590, %v1593
    %v1595 = vsel %vm1594, %v62, 128.0
    %v1596 = vsel %vm495, %v1595, inf
    %1597 = vmin.xlane.f32.xlu0 %v1596
    %v1598 = vpop.xlane.xlu0 %1597
    %v1599 = vsub.f32 %v1590, %v1593
    %v1600 = vmul.f32 %v1599, 1.442695
    %v1601 = vpow.pop %v1600
    %v1602 = vmul.f32 %v1601, %v61
    %v1603 = vsel %vm495, %v1602, 0.0
    %1604 = vadd.xlane.f32.xlu0 %v1603
    %v1605 = vpop.xlane.xlu0 %1604
    %v1606 = vlog2.pop %v1605
    %v1607 = vmul.f32 %v1606, 0.6931472
    %v1608 = vadd.f32 %v1593, %v1607
    %v1609 = vsub.f32 %v1590, %v1608
    %1610 = vst [vmem:[#allocation7 + $0x3] sm:$0x1] %v1609
    %v1611 = vmul.f32 %v1598, %v56
    %v1612 = vadd.f32 %v1611, %v57
    %1613 = vmatprep.subr.mxu0 0.0
    %1614 = vmatpush1.msra.mxu0 %v36
    %1615 = vmatprep.subr.mxu0 0.0
    %1616 = vmatpush1.msra.mxu0 %v37
    %1617 = vmatprep.subr.mxu0 0.0
    %1618 = vmatpush1.msra.mxu0 %v38
    %1619 = vmatprep.subr.mxu0 0.0
    %1620 = vmatpush1.msra.mxu0 %v39
    %1621 = vmatprep.subr.mxu0 0.0
    %1622 = vmatpush1.msra.mxu0 0.0
    %1623 = vmatprep.subr.mxu0 0.0
    %1624 = vmatpush1.msra.mxu0 0.0
    %1625 = vmatprep.subr.mxu0 0.0
    %1626 = vmatpush1.msra.mxu0 0.0
    %1627 = vmatprep.subr.mxu0 0.0
    %1628 = vmatpush1.msra.mxu0 0.0
    %1629 = vmatprep.subr.mxu0 0.0
    %1630 = vmatpush1.msra.mxu0 0.0
    %1631 = vmatprep.subr.mxu0 0.0
    %1632 = vmatpush1.msra.mxu0 0.0
    %1633 = vmatprep.subr.mxu0 0.0
    %1634 = vmatpush1.msra.mxu0 0.0
    %1635 = vmatprep.subr.mxu0 0.0
    %1636 = vmatpush1.msra.mxu0 0.0
    %1637 = vmatprep.subr.mxu0 0.0
    %1638 = vmatpush1.msra.mxu0 0.0
    %1639 = vmatprep.subr.mxu0 0.0
    %1640 = vmatpush1.msra.mxu0 0.0
    %1641 = vmatprep.subr.mxu0 0.0
    %1642 = vmatpush1.msra.mxu0 0.0
    %1643 = vmatprep.subr.mxu0 0.0
    %1644 = vmatpush1.msra.mxu0 0.0
    %1645 = vmatprep.subr.mxu0 0.0
    %1646 = vmatpush1.msra.mxu0 0.0
    %1647 = vmatprep.subr.mxu0 0.0
    %1648 = vmatpush1.msra.mxu0 0.0
    %1649 = vmatprep.subr.mxu0 0.0
    %1650 = vmatpush1.msra.mxu0 0.0
    %1651 = vmatprep.subr.mxu0 0.0
    %1652 = vmatpush1.msra.mxu0 0.0
    %1653 = vmatprep.subr.mxu0 0.0
    %1654 = vmatpush1.msra.mxu0 0.0
    %1655 = vmatprep.subr.mxu0 0.0
    %1656 = vmatpush1.msra.mxu0 0.0
    %1657 = vmatprep.subr.mxu0 0.0
    %1658 = vmatpush1.msra.mxu0 0.0
    %1659 = vmatprep.subr.mxu0 0.0
    %1660 = vmatpush1.msra.mxu0 0.0
    %1661 = vmatprep.subr.mxu0 0.0
    %1662 = vmatpush1.msra.mxu0 0.0
    %1663 = vmatprep.subr.mxu0 0.0
    %1664 = vmatpush1.msra.mxu0 0.0
    %1665 = vmatprep.subr.mxu0 0.0
    %1666 = vmatpush1.msra.mxu0 0.0
    %1667 = vmatprep.subr.mxu0 0.0
    %1668 = vmatpush1.msra.mxu0 0.0
    %1669 = vmatprep.subr.mxu0 0.0
    %1670 = vmatpush1.msra.mxu0 0.0
    %1671 = vmatprep.subr.mxu0 0.0
    %1672 = vmatpush1.msra.mxu0 0.0
    %1673 = vmatprep.subr.mxu0 0.0
    %1674 = vmatpush1.msra.mxu0 0.0
    %1675 = vmatprep.subr.mxu0 0.0
    %1676 = vmatpush1.msra.mxu0 0.0
    %1677 = vmatprep.mubr.f32.mxu0 0.0
    %1678 = vmatmul.mubr.f32.gmra.mrb[0].mxu0 %v1347
    %v1679 = vpop.f32.mrb[0].mxu0
    %v1680 = vadd.f32 0.0, %v1679
    %v1681 = vpop.f32.mrb[0].mxu0
    %1682 = vdwg.mxu0
    %v1683 = vadd.f32 %v1612, %v1680
    %v1684 = vxor.u32 %v1683, 2147483648
    %v1685 = vmul.f32 %v1684, 1.442695
    %v1686 = vpow.pop %v1685
    %v1687 = vadd.f32 %v1686, 1.0
    %v1688 = vrcp.pop %v1687
    %v1689 = vmul.f32 1.0, %v1688
    %v1690 = vmul.f32 %v1689, 2.0
    %v1691 = vsub.f32 %v1690, 1.0
    %v1692 = vmul.f32 %v1689, %v1337
    %1694 = vrot.lane.b32.xlu0 %v1691, 64
    %v1695 = vpop.permute.xlu0 %1694
    %v1697 = vmul.f32 %v1689, %v1695
    %1699 = vrot.lane.b32.xlu0 %v1697, 32
    %v1700 = vpop.permute.xlu0 %1699
    %v1702 = vadd.f32 %v1692, %v1700
    %v1703 = vtanh.pop %v1702
    %1705 = vrot.lane.b32.xlu0 %v1703, 64
    %v1706 = vpop.permute.xlu0 %1705
    %v1708 = vmul.f32 %v1689, %v1706
    %1710 = vrot.lane.b32.xlu0 %v1708, 32
    %v1711 = vpop.permute.xlu0 %1710
    %v1712 = vsel %vm66, %v1711, 0
    %1714 = vmatprep.subr.mxu0 0.0
    %1715 = vmatpush1.msra.mxu0 %v44
    %1716 = vmatprep.subr.mxu0 0.0
    %1717 = vmatpush1.msra.mxu0 %v45
    %1718 = vmatprep.subr.mxu0 0.0
    %1719 = vmatpush1.msra.mxu0 %v46
    %1720 = vmatprep.subr.mxu0 0.0
    %1721 = vmatpush1.msra.mxu0 %v47
    %1722 = vmatprep.subr.mxu0 0.0
    %1723 = vmatpush1.msra.mxu0 0.0
    %1724 = vmatprep.subr.mxu0 0.0
    %1725 = vmatpush1.msra.mxu0 0.0
    %1726 = vmatprep.subr.mxu0 0.0
    %1727 = vmatpush1.msra.mxu0 0.0
    %1728 = vmatprep.subr.mxu0 0.0
    %1729 = vmatpush1.msra.mxu0 0.0
    %1730 = vmatprep.subr.mxu0 0.0
    %1731 = vmatpush1.msra.mxu0 0.0
    %1732 = vmatprep.subr.mxu0 0.0
    %1733 = vmatpush1.msra.mxu0 0.0
    %1734 = vmatprep.subr.mxu0 0.0
    %1735 = vmatpush1.msra.mxu0 0.0
    %1736 = vmatprep.subr.mxu0 0.0
    %1737 = vmatpush1.msra.mxu0 0.0
    %1738 = vmatprep.subr.mxu0 0.0
    %1739 = vmatpush1.msra.mxu0 0.0
    %1740 = vmatprep.subr.mxu0 0.0
    %1741 = vmatpush1.msra.mxu0 0.0
    %1742 = vmatprep.subr.mxu0 0.0
    %1743 = vmatpush1.msra.mxu0 0.0
    %1744 = vmatprep.subr.mxu0 0.0
    %1745 = vmatpush1.msra.mxu0 0.0
    %1746 = vmatprep.subr.mxu0 0.0
    %1747 = vmatpush1.msra.mxu0 0.0
    %1748 = vmatprep.subr.mxu0 0.0
    %1749 = vmatpush1.msra.mxu0 0.0
    %1750 = vmatprep.subr.mxu0 0.0
    %1751 = vmatpush1.msra.mxu0 0.0
    %1752 = vmatprep.subr.mxu0 0.0
    %1753 = vmatpush1.msra.mxu0 0.0
    %1754 = vmatprep.subr.mxu0 0.0
    %1755 = vmatpush1.msra.mxu0 0.0
    %1756 = vmatprep.subr.mxu0 0.0
    %1757 = vmatpush1.msra.mxu0 0.0
    %1758 = vmatprep.subr.mxu0 0.0
    %1759 = vmatpush1.msra.mxu0 0.0
    %1760 = vmatprep.subr.mxu0 0.0
    %1761 = vmatpush1.msra.mxu0 0.0
    %1762 = vmatprep.subr.mxu0 0.0
    %1763 = vmatpush1.msra.mxu0 0.0
    %1764 = vmatprep.subr.mxu0 0.0
    %1765 = vmatpush1.msra.mxu0 0.0
    %1766 = vmatprep.subr.mxu0 0.0
    %1767 = vmatpush1.msra.mxu0 0.0
    %1768 = vmatprep.subr.mxu0 0.0
    %1769 = vmatpush1.msra.mxu0 0.0
    %1770 = vmatprep.subr.mxu0 0.0
    %1771 = vmatpush1.msra.mxu0 0.0
    %1772 = vmatprep.subr.mxu0 0.0
    %1773 = vmatpush1.msra.mxu0 0.0
    %1774 = vmatprep.subr.mxu0 0.0
    %1775 = vmatpush1.msra.mxu0 0.0
    %1776 = vmatprep.subr.mxu0 0.0
    %1777 = vmatpush1.msra.mxu0 0.0
    %1778 = vmatprep.mubr.f32.mxu0 0.0
    %1779 = vmatmul.mubr.f32.gmra.mrb[0].mxu0 %v1712
    %v1780 = vpop.f32.mrb[0].mxu0
    %v1781 = vadd.f32 0.0, %v1780
    %v1782 = vpop.f32.mrb[0].mxu0
    %1783 = vdwg.mxu0
    %1784 = vmatprep.subr.mxu0 0.0
    %1785 = vmatpush1.msra.mxu0 %v40
    %1786 = vmatprep.subr.mxu0 0.0
    %1787 = vmatpush1.msra.mxu0 %v41
    %1788 = vmatprep.subr.mxu0 0.0
    %1789 = vmatpush1.msra.mxu0 %v42
    %1790 = vmatprep.subr.mxu0 0.0
    %1791 = vmatpush1.msra.mxu0 %v43
    %1792 = vmatprep.subr.mxu0 0.0
    %1793 = vmatpush1.msra.mxu0 0.0
    %1794 = vmatprep.subr.mxu0 0.0
    %1795 = vmatpush1.msra.mxu0 0.0
    %1796 = vmatprep.subr.mxu0 0.0
    %1797 = vmatpush1.msra.mxu0 0.0
    %1798 = vmatprep.subr.mxu0 0.0
    %1799 = vmatpush1.msra.mxu0 0.0
    %1800 = vmatprep.subr.mxu0 0.0
    %1801 = vmatpush1.msra.mxu0 0.0
    %1802 = vmatprep.subr.mxu0 0.0
    %1803 = vmatpush1.msra.mxu0 0.0
    %1804 = vmatprep.subr.mxu0 0.0
    %1805 = vmatpush1.msra.mxu0 0.0
    %1806 = vmatprep.subr.mxu0 0.0
    %1807 = vmatpush1.msra.mxu0 0.0
    %1808 = vmatprep.subr.mxu0 0.0
    %1809 = vmatpush1.msra.mxu0 0.0
    %1810 = vmatprep.subr.mxu0 0.0
    %1811 = vmatpush1.msra.mxu0 0.0
    %1812 = vmatprep.subr.mxu0 0.0
    %1813 = vmatpush1.msra.mxu0 0.0
    %1814 = vmatprep.subr.mxu0 0.0
    %1815 = vmatpush1.msra.mxu0 0.0
    %1816 = vmatprep.subr.mxu0 0.0
    %1817 = vmatpush1.msra.mxu0 0.0
    %1818 = vmatprep.subr.mxu0 0.0
    %1819 = vmatpush1.msra.mxu0 0.0
    %1820 = vmatprep.subr.mxu0 0.0
    %1821 = vmatpush1.msra.mxu0 0.0
    %1822 = vmatprep.subr.mxu0 0.0
    %1823 = vmatpush1.msra.mxu0 0.0
    %1824 = vmatprep.subr.mxu0 0.0
    %1825 = vmatpush1.msra.mxu0 0.0
    %1826 = vmatprep.subr.mxu0 0.0
    %1827 = vmatpush1.msra.mxu0 0.0
    %1828 = vmatprep.subr.mxu0 0.0
    %1829 = vmatpush1.msra.mxu0 0.0
    %1830 = vmatprep.subr.mxu0 0.0
    %1831 = vmatpush1.msra.mxu0 0.0
    %1832 = vmatprep.subr.mxu0 0.0
    %1833 = vmatpush1.msra.mxu0 0.0
    %1834 = vmatprep.subr.mxu0 0.0
    %1835 = vmatpush1.msra.mxu0 0.0
    %1836 = vmatprep.subr.mxu0 0.0
    %1837 = vmatpush1.msra.mxu0 0.0
    %1838 = vmatprep.subr.mxu0 0.0
    %1839 = vmatpush1.msra.mxu0 0.0
    %1840 = vmatprep.subr.mxu0 0.0
    %1841 = vmatpush1.msra.mxu0 0.0
    %1842 = vmatprep.subr.mxu0 0.0
    %1843 = vmatpush1.msra.mxu0 0.0
    %1844 = vmatprep.subr.mxu0 0.0
    %1845 = vmatpush1.msra.mxu0 0.0
    %1846 = vmatprep.subr.mxu0 0.0
    %1847 = vmatpush1.msra.mxu0 0.0
    %1848 = vmatprep.mubr.f32.mxu0 0.0
    %1849 = vmatmul.mubr.f32.gmra.mrb[0].mxu0 %v1518
    %v1850 = vpop.f32.mrb[0].mxu0
    %v1851 = vadd.f32 %v1781, %v1850
    %v1852 = vpop.f32.mrb[0].mxu0
    %1853 = vdwg.mxu0
    %v1854 = vadd.f32 %v1851, %v58
    %v1855 = vxor.u32 %v1854, 2147483648
    %v1856 = vmul.f32 %v1855, 1.442695
    %v1857 = vpow.pop %v1856
    %v1858 = vadd.f32 %v1857, 1.0
    %v1859 = vrcp.pop %v1858
    %v1860 = vmul.f32 1.0, %v1859
    %v1861 = vmul.f32 %v1860, 2.0
    %v1862 = vsub.f32 %v1861, 1.0
    %v1863 = vmul.f32 %v1860, %v1508
    %1865 = vrot.lane.b32.xlu0 %v1862, 64
    %v1866 = vpop.permute.xlu0 %1865
    %v1868 = vmul.f32 %v1860, %v1866
    %1870 = vrot.lane.b32.xlu0 %v1868, 32
    %v1871 = vpop.permute.xlu0 %1870
    %v1873 = vadd.f32 %v1863, %v1871
    %v1874 = vtanh.pop %v1873
    %1876 = vrot.lane.b32.xlu0 %v1874, 64
    %v1877 = vpop.permute.xlu0 %1876
    %v1879 = vmul.f32 %v1860, %v1877
    %1881 = vrot.lane.b32.xlu0 %v1879, 32
    %v1882 = vpop.permute.xlu0 %1881
    %v1883 = vsel %vm66, %v1882, 0
    %1885 = vmatprep.subr.mxu0 0.0
    %1886 = vmatpush1.msra.mxu0 %v48
    %1887 = vmatprep.subr.mxu0 0.0
    %1888 = vmatpush1.msra.mxu0 %v49
    %1889 = vmatprep.subr.mxu0 0.0
    %1890 = vmatpush1.msra.mxu0 %v50
    %1891 = vmatprep.subr.mxu0 0.0
    %1892 = vmatpush1.msra.mxu0 %v51
    %1893 = vmatprep.subr.mxu0 0.0
    %1894 = vmatpush1.msra.mxu0 0.0
    %1895 = vmatprep.subr.mxu0 0.0
    %1896 = vmatpush1.msra.mxu0 0.0
    %1897 = vmatprep.subr.mxu0 0.0
    %1898 = vmatpush1.msra.mxu0 0.0
    %1899 = vmatprep.subr.mxu0 0.0
    %1900 = vmatpush1.msra.mxu0 0.0
    %1901 = vmatprep.subr.mxu0 0.0
    %1902 = vmatpush1.msra.mxu0 0.0
    %1903 = vmatprep.subr.mxu0 0.0
    %1904 = vmatpush1.msra.mxu0 0.0
    %1905 = vmatprep.subr.mxu0 0.0
    %1906 = vmatpush1.msra.mxu0 0.0
    %1907 = vmatprep.subr.mxu0 0.0
    %1908 = vmatpush1.msra.mxu0 0.0
    %1909 = vmatprep.subr.mxu0 0.0
    %1910 = vmatpush1.msra.mxu0 0.0
    %1911 = vmatprep.subr.mxu0 0.0
    %1912 = vmatpush1.msra.mxu0 0.0
    %1913 = vmatprep.subr.mxu0 0.0
    %1914 = vmatpush1.msra.mxu0 0.0
    %1915 = vmatprep.subr.mxu0 0.0
    %1916 = vmatpush1.msra.mxu0 0.0
    %1917 = vmatprep.subr.mxu0 0.0
    %1918 = vmatpush1.msra.mxu0 0.0
    %1919 = vmatprep.subr.mxu0 0.0
    %1920 = vmatpush1.msra.mxu0 0.0
    %1921 = vmatprep.subr.mxu0 0.0
    %1922 = vmatpush1.msra.mxu0 0.0
    %1923 = vmatprep.subr.mxu0 0.0
    %1924 = vmatpush1.msra.mxu0 0.0
    %1925 = vmatprep.subr.mxu0 0.0
    %1926 = vmatpush1.msra.mxu0 0.0
    %1927 = vmatprep.subr.mxu0 0.0
    %1928 = vmatpush1.msra.mxu0 0.0
    %1929 = vmatprep.subr.mxu0 0.0
    %1930 = vmatpush1.msra.mxu0 0.0
    %1931 = vmatprep.subr.mxu0 0.0
    %1932 = vmatpush1.msra.mxu0 0.0
    %1933 = vmatprep.subr.mxu0 0.0
    %1934 = vmatpush1.msra.mxu0 0.0
    %1935 = vmatprep.subr.mxu0 0.0
    %1936 = vmatpush1.msra.mxu0 0.0
    %1937 = vmatprep.subr.mxu0 0.0
    %1938 = vmatpush1.msra.mxu0 0.0
    %1939 = vmatprep.subr.mxu0 0.0
    %1940 = vmatpush1.msra.mxu0 0.0
    %1941 = vmatprep.subr.mxu0 0.0
    %1942 = vmatpush1.msra.mxu0 0.0
    %1943 = vmatprep.subr.mxu0 0.0
    %1944 = vmatpush1.msra.mxu0 0.0
    %1945 = vmatprep.subr.mxu0 0.0
    %1946 = vmatpush1.msra.mxu0 0.0
    %1947 = vmatprep.subr.mxu0 0.0
    %1948 = vmatpush1.msra.mxu0 0.0
    %1949 = vmatprep.mubr.f32.mxu0 0.0
    %1950 = vmatmul.mubr.f32.gmra.mrb[0].mxu0 %v1883
    %v1951 = vpop.f32.mrb[0].mxu0
    %v1952 = vadd.f32 %v59, %v1951
    %v1953 = vpop.f32.mrb[0].mxu0
    %1954 = vdwg.mxu0
    %v1955 = vmax.f32 %v1952, 0.0
    %v1956 = vsel %vm495, %v1955, -inf
    %1957 = vmax.xlane.f32.xlu0 %v1956
    %v1958 = vpop.xlane.xlu0 %1957
    %vm1959 = vcmp.ge.f32.partialorder %v1955, %v1958
    %v1960 = vsel %vm1959, %v62, 128.0
    %v1961 = vsel %vm495, %v1960, inf
    %1962 = vmin.xlane.f32.xlu0 %v1961
    %v1963 = vpop.xlane.xlu0 %1962
    %v1964 = vsub.f32 %v1955, %v1958
    %v1965 = vmul.f32 %v1964, 1.442695
    %v1966 = vpow.pop %v1965
    %v1967 = vmul.f32 %v1966, %v61
    %v1968 = vsel %vm495, %v1967, 0.0
    %1969 = vadd.xlane.f32.xlu0 %v1968
    %v1970 = vpop.xlane.xlu0 %1969
    %v1971 = vlog2.pop %v1970
    %v1972 = vmul.f32 %v1971, 0.6931472
    %v1973 = vadd.f32 %v1958, %v1972
    %v1974 = vsub.f32 %v1955, %v1973
    %1975 = vst [vmem:[#allocation7 + $0x4] sm:$0x1] %v1974
    %v1976 = vmul.f32 %v1963, %v56
    %v1977 = vadd.f32 %v1976, %v57
    %1978 = vmatprep.subr.mxu0 0.0
    %1979 = vmatpush1.msra.mxu0 %v36
    %1980 = vmatprep.subr.mxu0 0.0
    %1981 = vmatpush1.msra.mxu0 %v37
    %1982 = vmatprep.subr.mxu0 0.0
    %1983 = vmatpush1.msra.mxu0 %v38
    %1984 = vmatprep.subr.mxu0 0.0
    %1985 = vmatpush1.msra.mxu0 %v39
    %1986 = vmatprep.subr.mxu0 0.0
    %1987 = vmatpush1.msra.mxu0 0.0
    %1988 = vmatprep.subr.mxu0 0.0
    %1989 = vmatpush1.msra.mxu0 0.0
    %1990 = vmatprep.subr.mxu0 0.0
    %1991 = vmatpush1.msra.mxu0 0.0
    %1992 = vmatprep.subr.mxu0 0.0
    %1993 = vmatpush1.msra.mxu0 0.0
    %1994 = vmatprep.subr.mxu0 0.0
    %1995 = vmatpush1.msra.mxu0 0.0
    %1996 = vmatprep.subr.mxu0 0.0
    %1997 = vmatpush1.msra.mxu0 0.0
    %1998 = vmatprep.subr.mxu0 0.0
    %1999 = vmatpush1.msra.mxu0 0.0
    %2000 = vmatprep.subr.mxu0 0.0
    %2001 = vmatpush1.msra.mxu0 0.0
    %2002 = vmatprep.subr.mxu0 0.0
    %2003 = vmatpush1.msra.mxu0 0.0
    %2004 = vmatprep.subr.mxu0 0.0
    %2005 = vmatpush1.msra.mxu0 0.0
    %2006 = vmatprep.subr.mxu0 0.0
    %2007 = vmatpush1.msra.mxu0 0.0
    %2008 = vmatprep.subr.mxu0 0.0
    %2009 = vmatpush1.msra.mxu0 0.0
    %2010 = vmatprep.subr.mxu0 0.0
    %2011 = vmatpush1.msra.mxu0 0.0
    %2012 = vmatprep.subr.mxu0 0.0
    %2013 = vmatpush1.msra.mxu0 0.0
    %2014 = vmatprep.subr.mxu0 0.0
    %2015 = vmatpush1.msra.mxu0 0.0
    %2016 = vmatprep.subr.mxu0 0.0
    %2017 = vmatpush1.msra.mxu0 0.0
    %2018 = vmatprep.subr.mxu0 0.0
    %2019 = vmatpush1.msra.mxu0 0.0
    %2020 = vmatprep.subr.mxu0 0.0
    %2021 = vmatpush1.msra.mxu0 0.0
    %2022 = vmatprep.subr.mxu0 0.0
    %2023 = vmatpush1.msra.mxu0 0.0
    %2024 = vmatprep.subr.mxu0 0.0
    %2025 = vmatpush1.msra.mxu0 0.0
    %2026 = vmatprep.subr.mxu0 0.0
    %2027 = vmatpush1.msra.mxu0 0.0
    %2028 = vmatprep.subr.mxu0 0.0
    %2029 = vmatpush1.msra.mxu0 0.0
    %2030 = vmatprep.subr.mxu0 0.0
    %2031 = vmatpush1.msra.mxu0 0.0
    %2032 = vmatprep.subr.mxu0 0.0
    %2033 = vmatpush1.msra.mxu0 0.0
    %2034 = vmatprep.subr.mxu0 0.0
    %2035 = vmatpush1.msra.mxu0 0.0
    %2036 = vmatprep.subr.mxu0 0.0
    %2037 = vmatpush1.msra.mxu0 0.0
    %2038 = vmatprep.subr.mxu0 0.0
    %2039 = vmatpush1.msra.mxu0 0.0
    %2040 = vmatprep.subr.mxu0 0.0
    %2041 = vmatpush1.msra.mxu0 0.0
    %2042 = vmatprep.mubr.f32.mxu0 0.0
    %2043 = vmatmul.mubr.f32.gmra.mrb[0].mxu0 %v1712
    %v2044 = vpop.f32.mrb[0].mxu0
    %v2045 = vadd.f32 0.0, %v2044
    %v2046 = vpop.f32.mrb[0].mxu0
    %2047 = vdwg.mxu0
    %v2048 = vadd.f32 %v1977, %v2045
    %v2049 = vxor.u32 %v2048, 2147483648
    %v2050 = vmul.f32 %v2049, 1.442695
    %v2051 = vpow.pop %v2050
    %v2052 = vadd.f32 %v2051, 1.0
    %v2053 = vrcp.pop %v2052
    %v2054 = vmul.f32 1.0, %v2053
    %v2055 = vmul.f32 %v2054, 2.0
    %v2056 = vsub.f32 %v2055, 1.0
    %v2057 = vmul.f32 %v2054, %v1702
    %2059 = vrot.lane.b32.xlu0 %v2056, 64
    %v2060 = vpop.permute.xlu0 %2059
    %v2062 = vmul.f32 %v2054, %v2060
    %2064 = vrot.lane.b32.xlu0 %v2062, 32
    %v2065 = vpop.permute.xlu0 %2064
    %v2067 = vadd.f32 %v2057, %v2065
    %v2068 = vtanh.pop %v2067
    %2070 = vrot.lane.b32.xlu0 %v2068, 64
    %v2071 = vpop.permute.xlu0 %2070
    %v2073 = vmul.f32 %v2054, %v2071
    %2075 = vrot.lane.b32.xlu0 %v2073, 32
    %v2076 = vpop.permute.xlu0 %2075
    %v2077 = vsel %vm66, %v2076, 0
    %2079 = vmatprep.subr.mxu0 0.0
    %2080 = vmatpush1.msra.mxu0 %v44
    %2081 = vmatprep.subr.mxu0 0.0
    %2082 = vmatpush1.msra.mxu0 %v45
    %2083 = vmatprep.subr.mxu0 0.0
    %2084 = vmatpush1.msra.mxu0 %v46
    %2085 = vmatprep.subr.mxu0 0.0
    %2086 = vmatpush1.msra.mxu0 %v47
    %2087 = vmatprep.subr.mxu0 0.0
    %2088 = vmatpush1.msra.mxu0 0.0
    %2089 = vmatprep.subr.mxu0 0.0
    %2090 = vmatpush1.msra.mxu0 0.0
    %2091 = vmatprep.subr.mxu0 0.0
    %2092 = vmatpush1.msra.mxu0 0.0
    %2093 = vmatprep.subr.mxu0 0.0
    %2094 = vmatpush1.msra.mxu0 0.0
    %2095 = vmatprep.subr.mxu0 0.0
    %2096 = vmatpush1.msra.mxu0 0.0
    %2097 = vmatprep.subr.mxu0 0.0
    %2098 = vmatpush1.msra.mxu0 0.0
    %2099 = vmatprep.subr.mxu0 0.0
    %2100 = vmatpush1.msra.mxu0 0.0
    %2101 = vmatprep.subr.mxu0 0.0
    %2102 = vmatpush1.msra.mxu0 0.0
    %2103 = vmatprep.subr.mxu0 0.0
    %2104 = vmatpush1.msra.mxu0 0.0
    %2105 = vmatprep.subr.mxu0 0.0
    %2106 = vmatpush1.msra.mxu0 0.0
    %2107 = vmatprep.subr.mxu0 0.0
    %2108 = vmatpush1.msra.mxu0 0.0
    %2109 = vmatprep.subr.mxu0 0.0
    %2110 = vmatpush1.msra.mxu0 0.0
    %2111 = vmatprep.subr.mxu0 0.0
    %2112 = vmatpush1.msra.mxu0 0.0
    %2113 = vmatprep.subr.mxu0 0.0
    %2114 = vmatpush1.msra.mxu0 0.0
    %2115 = vmatprep.subr.mxu0 0.0
    %2116 = vmatpush1.msra.mxu0 0.0
    %2117 = vmatprep.subr.mxu0 0.0
    %2118 = vmatpush1.msra.mxu0 0.0
    %2119 = vmatprep.subr.mxu0 0.0
    %2120 = vmatpush1.msra.mxu0 0.0
    %2121 = vmatprep.subr.mxu0 0.0
    %2122 = vmatpush1.msra.mxu0 0.0
    %2123 = vmatprep.subr.mxu0 0.0
    %2124 = vmatpush1.msra.mxu0 0.0
    %2125 = vmatprep.subr.mxu0 0.0
    %2126 = vmatpush1.msra.mxu0 0.0
    %2127 = vmatprep.subr.mxu0 0.0
    %2128 = vmatpush1.msra.mxu0 0.0
    %2129 = vmatprep.subr.mxu0 0.0
    %2130 = vmatpush1.msra.mxu0 0.0
    %2131 = vmatprep.subr.mxu0 0.0
    %2132 = vmatpush1.msra.mxu0 0.0
    %2133 = vmatprep.subr.mxu0 0.0
    %2134 = vmatpush1.msra.mxu0 0.0
    %2135 = vmatprep.subr.mxu0 0.0
    %2136 = vmatpush1.msra.mxu0 0.0
    %2137 = vmatprep.subr.mxu0 0.0
    %2138 = vmatpush1.msra.mxu0 0.0
    %2139 = vmatprep.subr.mxu0 0.0
    %2140 = vmatpush1.msra.mxu0 0.0
    %2141 = vmatprep.subr.mxu0 0.0
    %2142 = vmatpush1.msra.mxu0 0.0
    %2143 = vmatprep.mubr.f32.mxu0 0.0
    %2144 = vmatmul.mubr.f32.gmra.mrb[0].mxu0 %v2077
    %v2145 = vpop.f32.mrb[0].mxu0
    %v2146 = vadd.f32 0.0, %v2145
    %v2147 = vpop.f32.mrb[0].mxu0
    %2148 = vdwg.mxu0
    %2149 = vmatprep.subr.mxu0 0.0
    %2150 = vmatpush1.msra.mxu0 %v40
    %2151 = vmatprep.subr.mxu0 0.0
    %2152 = vmatpush1.msra.mxu0 %v41
    %2153 = vmatprep.subr.mxu0 0.0
    %2154 = vmatpush1.msra.mxu0 %v42
    %2155 = vmatprep.subr.mxu0 0.0
    %2156 = vmatpush1.msra.mxu0 %v43
    %2157 = vmatprep.subr.mxu0 0.0
    %2158 = vmatpush1.msra.mxu0 0.0
    %2159 = vmatprep.subr.mxu0 0.0
    %2160 = vmatpush1.msra.mxu0 0.0
    %2161 = vmatprep.subr.mxu0 0.0
    %2162 = vmatpush1.msra.mxu0 0.0
    %2163 = vmatprep.subr.mxu0 0.0
    %2164 = vmatpush1.msra.mxu0 0.0
    %2165 = vmatprep.subr.mxu0 0.0
    %2166 = vmatpush1.msra.mxu0 0.0
    %2167 = vmatprep.subr.mxu0 0.0
    %2168 = vmatpush1.msra.mxu0 0.0
    %2169 = vmatprep.subr.mxu0 0.0
    %2170 = vmatpush1.msra.mxu0 0.0
    %2171 = vmatprep.subr.mxu0 0.0
    %2172 = vmatpush1.msra.mxu0 0.0
    %2173 = vmatprep.subr.mxu0 0.0
    %2174 = vmatpush1.msra.mxu0 0.0
    %2175 = vmatprep.subr.mxu0 0.0
    %2176 = vmatpush1.msra.mxu0 0.0
    %2177 = vmatprep.subr.mxu0 0.0
    %2178 = vmatpush1.msra.mxu0 0.0
    %2179 = vmatprep.subr.mxu0 0.0
    %2180 = vmatpush1.msra.mxu0 0.0
    %2181 = vmatprep.subr.mxu0 0.0
    %2182 = vmatpush1.msra.mxu0 0.0
    %2183 = vmatprep.subr.mxu0 0.0
    %2184 = vmatpush1.msra.mxu0 0.0
    %2185 = vmatprep.subr.mxu0 0.0
    %2186 = vmatpush1.msra.mxu0 0.0
    %2187 = vmatprep.subr.mxu0 0.0
    %2188 = vmatpush1.msra.mxu0 0.0
    %2189 = vmatprep.subr.mxu0 0.0
    %2190 = vmatpush1.msra.mxu0 0.0
    %2191 = vmatprep.subr.mxu0 0.0
    %2192 = vmatpush1.msra.mxu0 0.0
    %2193 = vmatprep.subr.mxu0 0.0
    %2194 = vmatpush1.msra.mxu0 0.0
    %2195 = vmatprep.subr.mxu0 0.0
    %2196 = vmatpush1.msra.mxu0 0.0
    %2197 = vmatprep.subr.mxu0 0.0
    %2198 = vmatpush1.msra.mxu0 0.0
    %2199 = vmatprep.subr.mxu0 0.0
    %2200 = vmatpush1.msra.mxu0 0.0
    %2201 = vmatprep.subr.mxu0 0.0
    %2202 = vmatpush1.msra.mxu0 0.0
    %2203 = vmatprep.subr.mxu0 0.0
    %2204 = vmatpush1.msra.mxu0 0.0
    %2205 = vmatprep.subr.mxu0 0.0
    %2206 = vmatpush1.msra.mxu0 0.0
    %2207 = vmatprep.subr.mxu0 0.0
    %2208 = vmatpush1.msra.mxu0 0.0
    %2209 = vmatprep.subr.mxu0 0.0
    %2210 = vmatpush1.msra.mxu0 0.0
    %2211 = vmatprep.subr.mxu0 0.0
    %2212 = vmatpush1.msra.mxu0 0.0
    %2213 = vmatprep.mubr.f32.mxu0 0.0
    %2214 = vmatmul.mubr.f32.gmra.mrb[0].mxu0 %v1883
    %v2215 = vpop.f32.mrb[0].mxu0
    %v2216 = vadd.f32 %v2146, %v2215
    %v2217 = vpop.f32.mrb[0].mxu0
    %2218 = vdwg.mxu0
    %v2219 = vadd.f32 %v2216, %v58
    %v2220 = vxor.u32 %v2219, 2147483648
    %v2221 = vmul.f32 %v2220, 1.442695
    %v2222 = vpow.pop %v2221
    %v2223 = vadd.f32 %v2222, 1.0
    %v2224 = vrcp.pop %v2223
    %v2225 = vmul.f32 1.0, %v2224
    %v2226 = vmul.f32 %v2225, 2.0
    %v2227 = vsub.f32 %v2226, 1.0
    %v2228 = vmul.f32 %v2225, %v1873
    %2230 = vrot.lane.b32.xlu0 %v2227, 64
    %v2231 = vpop.permute.xlu0 %2230
    %v2233 = vmul.f32 %v2225, %v2231
    %2235 = vrot.lane.b32.xlu0 %v2233, 32
    %v2236 = vpop.permute.xlu0 %2235
    %v2238 = vadd.f32 %v2228, %v2236
    %v2239 = vtanh.pop %v2238
    %2241 = vrot.lane.b32.xlu0 %v2239, 64
    %v2242 = vpop.permute.xlu0 %2241
    %v2244 = vmul.f32 %v2225, %v2242
    %2246 = vrot.lane.b32.xlu0 %v2244, 32
    %v2247 = vpop.permute.xlu0 %2246
    %v2248 = vsel %vm66, %v2247, 0
    %2250 = vmatprep.subr.mxu0 0.0
    %2251 = vmatpush1.msra.mxu0 %v48
    %2252 = vmatprep.subr.mxu0 0.0
    %2253 = vmatpush1.msra.mxu0 %v49
    %2254 = vmatprep.subr.mxu0 0.0
    %2255 = vmatpush1.msra.mxu0 %v50
    %2256 = vmatprep.subr.mxu0 0.0
    %2257 = vmatpush1.msra.mxu0 %v51
    %2258 = vmatprep.subr.mxu0 0.0
    %2259 = vmatpush1.msra.mxu0 0.0
    %2260 = vmatprep.subr.mxu0 0.0
    %2261 = vmatpush1.msra.mxu0 0.0
    %2262 = vmatprep.subr.mxu0 0.0
    %2263 = vmatpush1.msra.mxu0 0.0
    %2264 = vmatprep.subr.mxu0 0.0
    %2265 = vmatpush1.msra.mxu0 0.0
    %2266 = vmatprep.subr.mxu0 0.0
    %2267 = vmatpush1.msra.mxu0 0.0
    %2268 = vmatprep.subr.mxu0 0.0
    %2269 = vmatpush1.msra.mxu0 0.0
    %2270 = vmatprep.subr.mxu0 0.0
    %2271 = vmatpush1.msra.mxu0 0.0
    %2272 = vmatprep.subr.mxu0 0.0
    %2273 = vmatpush1.msra.mxu0 0.0
    %2274 = vmatprep.subr.mxu0 0.0
    %2275 = vmatpush1.msra.mxu0 0.0
    %2276 = vmatprep.subr.mxu0 0.0
    %2277 = vmatpush1.msra.mxu0 0.0
    %2278 = vmatprep.subr.mxu0 0.0
    %2279 = vmatpush1.msra.mxu0 0.0
    %2280 = vmatprep.subr.mxu0 0.0
    %2281 = vmatpush1.msra.mxu0 0.0
    %2282 = vmatprep.subr.mxu0 0.0
    %2283 = vmatpush1.msra.mxu0 0.0
    %2284 = vmatprep.subr.mxu0 0.0
    %2285 = vmatpush1.msra.mxu0 0.0
    %2286 = vmatprep.subr.mxu0 0.0
    %2287 = vmatpush1.msra.mxu0 0.0
    %2288 = vmatprep.subr.mxu0 0.0
    %2289 = vmatpush1.msra.mxu0 0.0
    %2290 = vmatprep.subr.mxu0 0.0
    %2291 = vmatpush1.msra.mxu0 0.0
    %2292 = vmatprep.subr.mxu0 0.0
    %2293 = vmatpush1.msra.mxu0 0.0
    %2294 = vmatprep.subr.mxu0 0.0
    %2295 = vmatpush1.msra.mxu0 0.0
    %2296 = vmatprep.subr.mxu0 0.0
    %2297 = vmatpush1.msra.mxu0 0.0
    %2298 = vmatprep.subr.mxu0 0.0
    %2299 = vmatpush1.msra.mxu0 0.0
    %2300 = vmatprep.subr.mxu0 0.0
    %2301 = vmatpush1.msra.mxu0 0.0
    %2302 = vmatprep.subr.mxu0 0.0
    %2303 = vmatpush1.msra.mxu0 0.0
    %2304 = vmatprep.subr.mxu0 0.0
    %2305 = vmatpush1.msra.mxu0 0.0
    %2306 = vmatprep.subr.mxu0 0.0
    %2307 = vmatpush1.msra.mxu0 0.0
    %2308 = vmatprep.subr.mxu0 0.0
    %2309 = vmatpush1.msra.mxu0 0.0
    %2310 = vmatprep.subr.mxu0 0.0
    %2311 = vmatpush1.msra.mxu0 0.0
    %2312 = vmatprep.subr.mxu0 0.0
    %2313 = vmatpush1.msra.mxu0 0.0
    %2314 = vmatprep.mubr.f32.mxu0 0.0
    %2315 = vmatmul.mubr.f32.gmra.mrb[0].mxu0 %v2248
    %v2316 = vpop.f32.mrb[0].mxu0
    %v2317 = vadd.f32 %v59, %v2316
    %v2318 = vpop.f32.mrb[0].mxu0
    %2319 = vdwg.mxu0
    %v2320 = vmax.f32 %v2317, 0.0
    %v2321 = vsel %vm495, %v2320, -inf
    %2322 = vmax.xlane.f32.xlu0 %v2321
    %v2323 = vpop.xlane.xlu0 %2322
    %vm2324 = vcmp.ge.f32.partialorder %v2320, %v2323
    %v2325 = vsel %vm2324, %v62, 128.0
    %v2326 = vsel %vm495, %v2325, inf
    %2327 = vmin.xlane.f32.xlu0 %v2326
    %v2328 = vpop.xlane.xlu0 %2327
    %v2329 = vsub.f32 %v2320, %v2323
    %v2330 = vmul.f32 %v2329, 1.442695
    %v2331 = vpow.pop %v2330
    %v2332 = vmul.f32 %v2331, %v61
    %v2333 = vsel %vm495, %v2332, 0.0
    %2334 = vadd.xlane.f32.xlu0 %v2333
    %v2335 = vpop.xlane.xlu0 %2334
    %v2336 = vlog2.pop %v2335
    %v2337 = vmul.f32 %v2336, 0.6931472
    %v2338 = vadd.f32 %v2323, %v2337
    %v2339 = vsub.f32 %v2320, %v2338
    %2340 = vst [vmem:[#allocation7 + $0x5] sm:$0x1] %v2339
    %v2341 = vmul.f32 %v2328, %v56
    %v2342 = vadd.f32 %v2341, %v57
    %2343 = vmatprep.subr.mxu0 0.0
    %2344 = vmatpush1.msra.mxu0 %v36
    %2345 = vmatprep.subr.mxu0 0.0
    %2346 = vmatpush1.msra.mxu0 %v37
    %2347 = vmatprep.subr.mxu0 0.0
    %2348 = vmatpush1.msra.mxu0 %v38
    %2349 = vmatprep.subr.mxu0 0.0
    %2350 = vmatpush1.msra.mxu0 %v39
    %2351 = vmatprep.subr.mxu0 0.0
    %2352 = vmatpush1.msra.mxu0 0.0
    %2353 = vmatprep.subr.mxu0 0.0
    %2354 = vmatpush1.msra.mxu0 0.0
    %2355 = vmatprep.subr.mxu0 0.0
    %2356 = vmatpush1.msra.mxu0 0.0
    %2357 = vmatprep.subr.mxu0 0.0
    %2358 = vmatpush1.msra.mxu0 0.0
    %2359 = vmatprep.subr.mxu0 0.0
    %2360 = vmatpush1.msra.mxu0 0.0
    %2361 = vmatprep.subr.mxu0 0.0
    %2362 = vmatpush1.msra.mxu0 0.0
    %2363 = vmatprep.subr.mxu0 0.0
    %2364 = vmatpush1.msra.mxu0 0.0
    %2365 = vmatprep.subr.mxu0 0.0
    %2366 = vmatpush1.msra.mxu0 0.0
    %2367 = vmatprep.subr.mxu0 0.0
    %2368 = vmatpush1.msra.mxu0 0.0
    %2369 = vmatprep.subr.mxu0 0.0
    %2370 = vmatpush1.msra.mxu0 0.0
    %2371 = vmatprep.subr.mxu0 0.0
    %2372 = vmatpush1.msra.mxu0 0.0
    %2373 = vmatprep.subr.mxu0 0.0
    %2374 = vmatpush1.msra.mxu0 0.0
    %2375 = vmatprep.subr.mxu0 0.0
    %2376 = vmatpush1.msra.mxu0 0.0
    %2377 = vmatprep.subr.mxu0 0.0
    %2378 = vmatpush1.msra.mxu0 0.0
    %2379 = vmatprep.subr.mxu0 0.0
    %2380 = vmatpush1.msra.mxu0 0.0
    %2381 = vmatprep.subr.mxu0 0.0
    %2382 = vmatpush1.msra.mxu0 0.0
    %2383 = vmatprep.subr.mxu0 0.0
    %2384 = vmatpush1.msra.mxu0 0.0
    %2385 = vmatprep.subr.mxu0 0.0
    %2386 = vmatpush1.msra.mxu0 0.0
    %2387 = vmatprep.subr.mxu0 0.0
    %2388 = vmatpush1.msra.mxu0 0.0
    %2389 = vmatprep.subr.mxu0 0.0
    %2390 = vmatpush1.msra.mxu0 0.0
    %2391 = vmatprep.subr.mxu0 0.0
    %2392 = vmatpush1.msra.mxu0 0.0
    %2393 = vmatprep.subr.mxu0 0.0
    %2394 = vmatpush1.msra.mxu0 0.0
    %2395 = vmatprep.subr.mxu0 0.0
    %2396 = vmatpush1.msra.mxu0 0.0
    %2397 = vmatprep.subr.mxu0 0.0
    %2398 = vmatpush1.msra.mxu0 0.0
    %2399 = vmatprep.subr.mxu0 0.0
    %2400 = vmatpush1.msra.mxu0 0.0
    %2401 = vmatprep.subr.mxu0 0.0
    %2402 = vmatpush1.msra.mxu0 0.0
    %2403 = vmatprep.subr.mxu0 0.0
    %2404 = vmatpush1.msra.mxu0 0.0
    %2405 = vmatprep.subr.mxu0 0.0
    %2406 = vmatpush1.msra.mxu0 0.0
    %2407 = vmatprep.mubr.f32.mxu0 0.0
    %2408 = vmatmul.mubr.f32.gmra.mrb[0].mxu0 %v2077
    %v2409 = vpop.f32.mrb[0].mxu0
    %v2410 = vadd.f32 0.0, %v2409
    %v2411 = vpop.f32.mrb[0].mxu0
    %2412 = vdwg.mxu0
    %v2413 = vadd.f32 %v2342, %v2410
    %v2414 = vxor.u32 %v2413, 2147483648
    %v2415 = vmul.f32 %v2414, 1.442695
    %v2416 = vpow.pop %v2415
    %v2417 = vadd.f32 %v2416, 1.0
    %v2418 = vrcp.pop %v2417
    %v2419 = vmul.f32 1.0, %v2418
    %v2420 = vmul.f32 %v2419, 2.0
    %v2421 = vsub.f32 %v2420, 1.0
    %v2422 = vmul.f32 %v2419, %v2067
    %2424 = vrot.lane.b32.xlu0 %v2421, 64
    %v2425 = vpop.permute.xlu0 %2424
    %v2427 = vmul.f32 %v2419, %v2425
    %2429 = vrot.lane.b32.xlu0 %v2427, 32
    %v2430 = vpop.permute.xlu0 %2429
    %v2432 = vadd.f32 %v2422, %v2430
    %v2433 = vtanh.pop %v2432
    %2435 = vrot.lane.b32.xlu0 %v2433, 64
    %v2436 = vpop.permute.xlu0 %2435
    %v2438 = vmul.f32 %v2419, %v2436
    %2440 = vrot.lane.b32.xlu0 %v2438, 32
    %v2441 = vpop.permute.xlu0 %2440
    %v2442 = vsel %vm66, %v2441, 0
    %2444 = vmatprep.subr.mxu0 0.0
    %2445 = vmatpush1.msra.mxu0 %v44
    %2446 = vmatprep.subr.mxu0 0.0
    %2447 = vmatpush1.msra.mxu0 %v45
    %2448 = vmatprep.subr.mxu0 0.0
    %2449 = vmatpush1.msra.mxu0 %v46
    %2450 = vmatprep.subr.mxu0 0.0
    %2451 = vmatpush1.msra.mxu0 %v47
    %2452 = vmatprep.subr.mxu0 0.0
    %2453 = vmatpush1.msra.mxu0 0.0
    %2454 = vmatprep.subr.mxu0 0.0
    %2455 = vmatpush1.msra.mxu0 0.0
    %2456 = vmatprep.subr.mxu0 0.0
    %2457 = vmatpush1.msra.mxu0 0.0
    %2458 = vmatprep.subr.mxu0 0.0
    %2459 = vmatpush1.msra.mxu0 0.0
    %2460 = vmatprep.subr.mxu0 0.0
    %2461 = vmatpush1.msra.mxu0 0.0
    %2462 = vmatprep.subr.mxu0 0.0
    %2463 = vmatpush1.msra.mxu0 0.0
    %2464 = vmatprep.subr.mxu0 0.0
    %2465 = vmatpush1.msra.mxu0 0.0
    %2466 = vmatprep.subr.mxu0 0.0
    %2467 = vmatpush1.msra.mxu0 0.0
    %2468 = vmatprep.subr.mxu0 0.0
    %2469 = vmatpush1.msra.mxu0 0.0
    %2470 = vmatprep.subr.mxu0 0.0
    %2471 = vmatpush1.msra.mxu0 0.0
    %2472 = vmatprep.subr.mxu0 0.0
    %2473 = vmatpush1.msra.mxu0 0.0
    %2474 = vmatprep.subr.mxu0 0.0
    %2475 = vmatpush1.msra.mxu0 0.0
    %2476 = vmatprep.subr.mxu0 0.0
    %2477 = vmatpush1.msra.mxu0 0.0
    %2478 = vmatprep.subr.mxu0 0.0
    %2479 = vmatpush1.msra.mxu0 0.0
    %2480 = vmatprep.subr.mxu0 0.0
    %2481 = vmatpush1.msra.mxu0 0.0
    %2482 = vmatprep.subr.mxu0 0.0
    %2483 = vmatpush1.msra.mxu0 0.0
    %2484 = vmatprep.subr.mxu0 0.0
    %2485 = vmatpush1.msra.mxu0 0.0
    %2486 = vmatprep.subr.mxu0 0.0
    %2487 = vmatpush1.msra.mxu0 0.0
    %2488 = vmatprep.subr.mxu0 0.0
    %2489 = vmatpush1.msra.mxu0 0.0
    %2490 = vmatprep.subr.mxu0 0.0
    %2491 = vmatpush1.msra.mxu0 0.0
    %2492 = vmatprep.subr.mxu0 0.0
    %2493 = vmatpush1.msra.mxu0 0.0
    %2494 = vmatprep.subr.mxu0 0.0
    %2495 = vmatpush1.msra.mxu0 0.0
    %2496 = vmatprep.subr.mxu0 0.0
    %2497 = vmatpush1.msra.mxu0 0.0
    %2498 = vmatprep.subr.mxu0 0.0
    %2499 = vmatpush1.msra.mxu0 0.0
    %2500 = vmatprep.subr.mxu0 0.0
    %2501 = vmatpush1.msra.mxu0 0.0
    %2502 = vmatprep.subr.mxu0 0.0
    %2503 = vmatpush1.msra.mxu0 0.0
    %2504 = vmatprep.subr.mxu0 0.0
    %2505 = vmatpush1.msra.mxu0 0.0
    %2506 = vmatprep.subr.mxu0 0.0
    %2507 = vmatpush1.msra.mxu0 0.0
    %2508 = vmatprep.mubr.f32.mxu0 0.0
    %2509 = vmatmul.mubr.f32.gmra.mrb[0].mxu0 %v2442
    %v2510 = vpop.f32.mrb[0].mxu0
    %v2511 = vadd.f32 0.0, %v2510
    %v2512 = vpop.f32.mrb[0].mxu0
    %2513 = vdwg.mxu0
    %2514 = vmatprep.subr.mxu0 0.0
    %2515 = vmatpush1.msra.mxu0 %v40
    %2516 = vmatprep.subr.mxu0 0.0
    %2517 = vmatpush1.msra.mxu0 %v41
    %2518 = vmatprep.subr.mxu0 0.0
    %2519 = vmatpush1.msra.mxu0 %v42
    %2520 = vmatprep.subr.mxu0 0.0
    %2521 = vmatpush1.msra.mxu0 %v43
    %2522 = vmatprep.subr.mxu0 0.0
    %2523 = vmatpush1.msra.mxu0 0.0
    %2524 = vmatprep.subr.mxu0 0.0
    %2525 = vmatpush1.msra.mxu0 0.0
    %2526 = vmatprep.subr.mxu0 0.0
    %2527 = vmatpush1.msra.mxu0 0.0
    %2528 = vmatprep.subr.mxu0 0.0
    %2529 = vmatpush1.msra.mxu0 0.0
    %2530 = vmatprep.subr.mxu0 0.0
    %2531 = vmatpush1.msra.mxu0 0.0
    %2532 = vmatprep.subr.mxu0 0.0
    %2533 = vmatpush1.msra.mxu0 0.0
    %2534 = vmatprep.subr.mxu0 0.0
    %2535 = vmatpush1.msra.mxu0 0.0
    %2536 = vmatprep.subr.mxu0 0.0
    %2537 = vmatpush1.msra.mxu0 0.0
    %2538 = vmatprep.subr.mxu0 0.0
    %2539 = vmatpush1.msra.mxu0 0.0
    %2540 = vmatprep.subr.mxu0 0.0
    %2541 = vmatpush1.msra.mxu0 0.0
    %2542 = vmatprep.subr.mxu0 0.0
    %2543 = vmatpush1.msra.mxu0 0.0
    %2544 = vmatprep.subr.mxu0 0.0
    %2545 = vmatpush1.msra.mxu0 0.0
    %2546 = vmatprep.subr.mxu0 0.0
    %2547 = vmatpush1.msra.mxu0 0.0
    %2548 = vmatprep.subr.mxu0 0.0
    %2549 = vmatpush1.msra.mxu0 0.0
    %2550 = vmatprep.subr.mxu0 0.0
    %2551 = vmatpush1.msra.mxu0 0.0
    %2552 = vmatprep.subr.mxu0 0.0
    %2553 = vmatpush1.msra.mxu0 0.0
    %2554 = vmatprep.subr.mxu0 0.0
    %2555 = vmatpush1.msra.mxu0 0.0
    %2556 = vmatprep.subr.mxu0 0.0
    %2557 = vmatpush1.msra.mxu0 0.0
    %2558 = vmatprep.subr.mxu0 0.0
    %2559 = vmatpush1.msra.mxu0 0.0
    %2560 = vmatprep.subr.mxu0 0.0
    %2561 = vmatpush1.msra.mxu0 0.0
    %2562 = vmatprep.subr.mxu0 0.0
    %2563 = vmatpush1.msra.mxu0 0.0
    %2564 = vmatprep.subr.mxu0 0.0
    %2565 = vmatpush1.msra.mxu0 0.0
    %2566 = vmatprep.subr.mxu0 0.0
    %2567 = vmatpush1.msra.mxu0 0.0
    %2568 = vmatprep.subr.mxu0 0.0
    %2569 = vmatpush1.msra.mxu0 0.0
    %2570 = vmatprep.subr.mxu0 0.0
    %2571 = vmatpush1.msra.mxu0 0.0
    %2572 = vmatprep.subr.mxu0 0.0
    %2573 = vmatpush1.msra.mxu0 0.0
    %2574 = vmatprep.subr.mxu0 0.0
    %2575 = vmatpush1.msra.mxu0 0.0
    %2576 = vmatprep.subr.mxu0 0.0
    %2577 = vmatpush1.msra.mxu0 0.0
    %2578 = vmatprep.mubr.f32.mxu0 0.0
    %2579 = vmatmul.mubr.f32.gmra.mrb[0].mxu0 %v2248
    %v2580 = vpop.f32.mrb[0].mxu0
    %v2581 = vadd.f32 %v2511, %v2580
    %v2582 = vpop.f32.mrb[0].mxu0
    %2583 = vdwg.mxu0
    %v2584 = vadd.f32 %v2581, %v58
    %v2585 = vxor.u32 %v2584, 2147483648
    %v2586 = vmul.f32 %v2585, 1.442695
    %v2587 = vpow.pop %v2586
    %v2588 = vadd.f32 %v2587, 1.0
    %v2589 = vrcp.pop %v2588
    %v2590 = vmul.f32 1.0, %v2589
    %v2591 = vmul.f32 %v2590, 2.0
    %v2592 = vsub.f32 %v2591, 1.0
    %v2593 = vmul.f32 %v2590, %v2238
    %2595 = vrot.lane.b32.xlu0 %v2592, 64
    %v2596 = vpop.permute.xlu0 %2595
    %v2598 = vmul.f32 %v2590, %v2596
    %2600 = vrot.lane.b32.xlu0 %v2598, 32
    %v2601 = vpop.permute.xlu0 %2600
    %v2603 = vadd.f32 %v2593, %v2601
    %v2604 = vtanh.pop %v2603
    %2606 = vrot.lane.b32.xlu0 %v2604, 64
    %v2607 = vpop.permute.xlu0 %2606
    %v2609 = vmul.f32 %v2590, %v2607
    %2611 = vrot.lane.b32.xlu0 %v2609, 32
    %v2612 = vpop.permute.xlu0 %2611
    %v2613 = vsel %vm66, %v2612, 0
    %2615 = vmatprep.subr.mxu0 0.0
    %2616 = vmatpush1.msra.mxu0 %v48
    %2617 = vmatprep.subr.mxu0 0.0
    %2618 = vmatpush1.msra.mxu0 %v49
    %2619 = vmatprep.subr.mxu0 0.0
    %2620 = vmatpush1.msra.mxu0 %v50
    %2621 = vmatprep.subr.mxu0 0.0
    %2622 = vmatpush1.msra.mxu0 %v51
    %2623 = vmatprep.subr.mxu0 0.0
    %2624 = vmatpush1.msra.mxu0 0.0
    %2625 = vmatprep.subr.mxu0 0.0
    %2626 = vmatpush1.msra.mxu0 0.0
    %2627 = vmatprep.subr.mxu0 0.0
    %2628 = vmatpush1.msra.mxu0 0.0
    %2629 = vmatprep.subr.mxu0 0.0
    %2630 = vmatpush1.msra.mxu0 0.0
    %2631 = vmatprep.subr.mxu0 0.0
    %2632 = vmatpush1.msra.mxu0 0.0
    %2633 = vmatprep.subr.mxu0 0.0
    %2634 = vmatpush1.msra.mxu0 0.0
    %2635 = vmatprep.subr.mxu0 0.0
    %2636 = vmatpush1.msra.mxu0 0.0
    %2637 = vmatprep.subr.mxu0 0.0
    %2638 = vmatpush1.msra.mxu0 0.0
    %2639 = vmatprep.subr.mxu0 0.0
    %2640 = vmatpush1.msra.mxu0 0.0
    %2641 = vmatprep.subr.mxu0 0.0
    %2642 = vmatpush1.msra.mxu0 0.0
    %2643 = vmatprep.subr.mxu0 0.0
    %2644 = vmatpush1.msra.mxu0 0.0
    %2645 = vmatprep.subr.mxu0 0.0
    %2646 = vmatpush1.msra.mxu0 0.0
    %2647 = vmatprep.subr.mxu0 0.0
    %2648 = vmatpush1.msra.mxu0 0.0
    %2649 = vmatprep.subr.mxu0 0.0
    %2650 = vmatpush1.msra.mxu0 0.0
    %2651 = vmatprep.subr.mxu0 0.0
    %2652 = vmatpush1.msra.mxu0 0.0
    %2653 = vmatprep.subr.mxu0 0.0
    %2654 = vmatpush1.msra.mxu0 0.0
    %2655 = vmatprep.subr.mxu0 0.0
    %2656 = vmatpush1.msra.mxu0 0.0
    %2657 = vmatprep.subr.mxu0 0.0
    %2658 = vmatpush1.msra.mxu0 0.0
    %2659 = vmatprep.subr.mxu0 0.0
    %2660 = vmatpush1.msra.mxu0 0.0
    %2661 = vmatprep.subr.mxu0 0.0
    %2662 = vmatpush1.msra.mxu0 0.0
    %2663 = vmatprep.subr.mxu0 0.0
    %2664 = vmatpush1.msra.mxu0 0.0
    %2665 = vmatprep.subr.mxu0 0.0
    %2666 = vmatpush1.msra.mxu0 0.0
    %2667 = vmatprep.subr.mxu0 0.0
    %2668 = vmatpush1.msra.mxu0 0.0
    %2669 = vmatprep.subr.mxu0 0.0
    %2670 = vmatpush1.msra.mxu0 0.0
    %2671 = vmatprep.subr.mxu0 0.0
    %2672 = vmatpush1.msra.mxu0 0.0
    %2673 = vmatprep.subr.mxu0 0.0
    %2674 = vmatpush1.msra.mxu0 0.0
    %2675 = vmatprep.subr.mxu0 0.0
    %2676 = vmatpush1.msra.mxu0 0.0
    %2677 = vmatprep.subr.mxu0 0.0
    %2678 = vmatpush1.msra.mxu0 0.0
    %2679 = vmatprep.mubr.f32.mxu0 0.0
    %2680 = vmatmul.mubr.f32.gmra.mrb[0].mxu0 %v2613
    %v2681 = vpop.f32.mrb[0].mxu0
    %v2682 = vadd.f32 %v59, %v2681
    %v2683 = vpop.f32.mrb[0].mxu0
    %2684 = vdwg.mxu0
    %v2685 = vmax.f32 %v2682, 0.0
    %v2686 = vsel %vm495, %v2685, -inf
    %2687 = vmax.xlane.f32.xlu0 %v2686
    %v2688 = vpop.xlane.xlu0 %2687
    %v2689 = vsub.f32 %v2685, %v2688
    %v2690 = vmul.f32 %v2689, 1.442695
    %v2691 = vpow.pop %v2690
    %v2692 = vmul.f32 %v2691, %v61
    %v2693 = vsel %vm495, %v2692, 0.0
    %2694 = vadd.xlane.f32.xlu0 %v2693
    %v2695 = vpop.xlane.xlu0 %2694
    %v2696 = vlog2.pop %v2695
    %v2697 = vmul.f32 %v2696, 0.6931472
    %v2698 = vadd.f32 %v2688, %v2697
    %v2699 = vsub.f32 %v2685, %v2698
    %2700 = vst [vmem:[#allocation7 + $0x6] sm:$0x1] %v2699
    // Predicated region
    $region18: #{decoder_forward_pallas.1} parent=1 // pred_check
      _
    $region19: #{decoder_forward_pallas.1} parent=1 // pred_check_branch
      %2702 = sbr.rel (0) target = $region21
    $region20: #{decoder_forward_pallas.1} parent=1 // pred_region
      %s2704 = ssub.s32 128, 128
      %2705 = vsyncadd [#allocation6], %s2704
      %s2707 = sshll.u32 [#allocation7], 4
      %s2708 = int_to_ptr.vmem [resolvable:$true] %s2707
      %2710 = dma.vmem_to_hbm [thread:$0]  %s2708, 128, %s4, [#allocation6]
    $region21: #{decoder_forward_pallas.1} parent=1 // pred_fallthru
      _
    // Predicated region
    $region22: #{decoder_forward_pallas.1} parent=1 // pred_check
      _
    $region23: #{decoder_forward_pallas.1} parent=1 // pred_check_branch
      %2712 = sbr.rel (0) target = $region25
    $region24: #{decoder_forward_pallas.1} parent=1 // pred_region
      %2713 = dma.done [#allocation6], 128
    $region25: #{decoder_forward_pallas.1} parent=1 // pred_fallthru
      _
    %2714 = vsyncpa [#allocation5], 1
    %2715 = vsyncpa [#allocation6], 1

</llo_original>
